<compile_context>
chip_gen: v7x
topology: tpu7x:2x2x1
jax: 0.10.0
libtpu: 0.0.40
codegen_flags: <defaults>
</compile_context>

<pallas_src>
import functools

import numpy as np
import jax
import jax.numpy as jnp
from jax.experimental import pallas as pl
from jax.experimental.pallas import tpu as pltpu


# ---------------------------------------------------------------------------
# Kernel 1: modulation + compression + hoisted LSTM input projection.
# ---------------------------------------------------------------------------
def _goal_kernel(task_ref, wg_ref, bg_ref, expand_ref, obs_ref, wc_ref, bc_ref,
                 wx_ref, bx_ref, goal_ref, gx_ref, *, nheads):
    # Modulation weights at the unexpanded width nheads*C: HW x fewer sigmoids
    # than folding the pixel repeat into the weight generator.
    w_sig = jax.nn.sigmoid(
        jnp.dot(task_ref[...], wg_ref[...], preferred_element_type=jnp.float32)
        + bg_ref[...])                                     # (tb, nheads*C) f32

    obs = obs_ref[...].astype(jnp.float32)                 # (tb, C*HW)
    cdt = wc_ref.dtype

    # Per head: expand channel weights to per-pixel columns via a 0/1 MXU
    # matmul (exact selection), modulate, compress.  The compression weight of
    # head h occupies lanes [h*G, (h+1)*G) of a (C*HW, nheads*G) matrix, so the
    # per-head results sum directly into the lane-dense fused goal: no obs
    # replication, no lane concat, no masked sub-lane stores.
    acc = None
    for h in range(nheads):
        w_exp = jnp.dot(w_sig, expand_ref[h],
                        preferred_element_type=jnp.float32)   # (tb, C*HW)
        mod_h = (obs * w_exp).astype(cdt)
        part = jnp.dot(mod_h, wc_ref[h],
                       preferred_element_type=jnp.float32)    # (tb, nheads*G)
        acc = part if acc is None else acc + part
    goal = acc + bc_ref[...]
    goal_ref[...] = goal                                       # one unmasked store (f32)

    # Hoisted time-parallel LSTM input projection (block-diagonal over heads,
    # gate-major columns) -> removed from the recurrent critical path.  Written
    # in the compute dtype (bf16 by default) to halve the gx HBM round trip.
    gx = (jnp.dot(goal.astype(wx_ref.dtype), wx_ref[...],
                  preferred_element_type=jnp.float32) + bx_ref[...])
    gx_ref[...] = gx.astype(gx_ref.dtype)


# ---------------------------------------------------------------------------
# Kernel 2: goal-tracker LSTM recurrence (heads fused, T-chunked grid).
# ---------------------------------------------------------------------------
def _lstm_kernel(gx_ref, wh_ref, out_ref, hfin_ref, cfin_ref,
                 *, t_chunk, nhh, unroll):
    chunk = pl.program_id(0)

    @pl.when(chunk == 0)
    def _():
        # init_goal_state=None -> zero initial hidden/cell state.
        hfin_ref[...] = jnp.zeros_like(hfin_ref)
        cfin_ref[...] = jnp.zeros_like(cfin_ref)

    wh = wh_ref[...]                                       # (nhh, 4*nhh), bf16/f32

    def step(tt, carry):
        h, c = carry                                       # f32 state
        gates = (gx_ref[tt].astype(jnp.float32)
                 + jnp.dot(h.astype(wh.dtype), wh,
                           preferred_element_type=jnp.float32))
        i = jax.nn.sigmoid(gates[:, 0 * nhh:1 * nhh])
        f = jax.nn.sigmoid(gates[:, 1 * nhh:2 * nhh])
        g = jnp.tanh(gates[:, 2 * nhh:3 * nhh])
        o = jax.nn.sigmoid(gates[:, 3 * nhh:4 * nhh])
        c_new = f * c + i * g
        h_new = o * jnp.tanh(c_new)
        out_ref[tt] = h_new.astype(out_ref.dtype)
        return h_new, c_new

    h_last, c_last = jax.lax.fori_loop(
        0, t_chunk, step, (hfin_ref[...], cfin_ref[...]), unroll=unroll)
    # Final (h, c) are carried across chunks in the constant-index output
    # blocks themselves (accumulator pattern); DMA'd to HBM once at grid end.
    hfin_ref[...] = h_last
    cfin_ref[...] = c_last


# ---------------------------------------------------------------------------
# One-time parameter re-layout (hoist/cache: depends only on params).
# ---------------------------------------------------------------------------
def prepare_params(params, *, nheads, goal_dim, hist_per_head, channels, hw,
                   compute_dtype=jnp.bfloat16):
    C, HW, G, Hh = channels, hw, goal_dim, hist_per_head
    nhh = nheads * Hh
    eye_h = jnp.eye(nheads, dtype=jnp.float32)

    # Weight generator at its natural width (sigmoid applied unexpanded).
    wg = params['Wg'].astype(jnp.float32).T                         # (D, nheads*C)
    bg = params['bg'].astype(jnp.float32)[None, :]                  # (1, nheads*C)

    # Per-head channel->pixel selector: expand_all[h, m*C+c, c*HW+p] = (m == h).
    rep = jnp.repeat(jnp.eye(C, dtype=jnp.float32), HW, axis=1)     # (C, C*HW)
    expand_all = jnp.einsum('hm,ck->hmck', eye_h, rep).reshape(
        nheads, nheads * C, C * HW)

    # Shared compression weight embedded per head in its goal lane slab:
    # wc_heads[h, k, h*G+g] = Wc[g, k].
    wc_t = params['Wc'].astype(jnp.float32).T                       # (C*HW, G)
    wc_heads = jnp.einsum('kg,hm->hkmg', wc_t, eye_h).reshape(
        nheads, C * HW, nheads * G)
    bc_all = jnp.tile(params['bc'].astype(jnp.float32), nheads)[None, :]

    # LSTM input / recurrent weights as block-diagonal matrices; column layout
    # col = gate*(nheads*Hh) + head*Hh + j, gate order (i, f, g, o).
    wx = params['wx'].astype(jnp.float32).reshape(nheads, G, 4, Hh)
    wx_all = jnp.einsum('hgij,hm->hgimj', wx, eye_h).reshape(nheads * G, 4 * nhh)
    wh = params['wh'].astype(jnp.float32).reshape(nheads, Hh, 4, Hh)
    wh_all = jnp.einsum('hkij,hm->hkimj', wh, eye_h).reshape(nhh, 4 * nhh)
    b = params['b_lstm'].astype(jnp.float32).reshape(nheads, 4, Hh)
    bx_all = jnp.transpose(b, (1, 0, 2)).reshape(1, 4 * nhh)

    return dict(
        wg=wg.astype(compute_dtype), bg=bg,
        expand_all=expand_all,                 # f32: exact 0/1 selection
        wc_heads=wc_heads.astype(compute_dtype), bc_all=bc_all,
        wx_all=wx_all.astype(compute_dtype), bx_all=bx_all,
        wh_all=wh_all.astype(compute_dtype))


# ---------------------------------------------------------------------------
# Tiling helpers.
# ---------------------------------------------------------------------------
def _round_up(x, m):
    return -(-x // m) * m


def _choose_tb_tile(TB, per_row_bytes, budget_bytes, max_tile=2048):
    tile = max(8, min(max_tile, budget_bytes // max(per_row_bytes, 1)))
    tile = max(8, (tile // 8) * 8)
    tile = min(tile, _round_up(TB, 8))
    # Keep >= 2 grid steps when possible so the "parallel" TB axis can feed
    # both v7x TensorCores.
    if tile >= 16 and -(-TB // tile) < 2:
        tile = max(8, ((tile // 2) // 8) * 8)
    return tile


def _largest_divisor(n, cap):
    cap = max(1, min(n, cap))
    for d in range(cap, 0, -1):
        if n % d == 0:
            return d
    return 1


# ---------------------------------------------------------------------------
# Forward wrapper.
# ---------------------------------------------------------------------------
def visual_goal_generator_forward(prep, obs_emb, task_emb, *, nheads, goal_dim,
                                  hist_per_head, tb_tile=None, t_chunk=None):
    T, B, C, H, W = obs_emb.shape
    TB, HW = T * B, H * W
    D = task_emb.shape[-1]
    Hh = hist_per_head
    nhh = nheads * Hh
    G = goal_dim
    cdt = prep['wc_heads'].dtype
    bpe = jnp.dtype(cdt).itemsize

    task_flat = task_emb.reshape(TB, D).astype(cdt)
    obs_flat = obs_emb.reshape(TB, C * HW).astype(cdt)

    # --- TB tile: VMEM-budgeted, multiple of 8, padded tail (never tile=TB).
    if tb_tile is None:
        io_row = 2 * (D * bpe + C * HW * bpe + nheads * G * 4 + 4 * nhh * bpe)
        tmp_row = 4 * (nheads * C + 3 * C * HW + nheads * G + 2 * 4 * nhh)
        tb_tile = _choose_tb_tile(TB, io_row + tmp_row, budget_bytes=24 << 20)
    tb_tile = max(8, _round_up(tb_tile, 8))
    TB_pad = _round_up(TB, tb_tile)
    if TB_pad != TB:
        pad = TB_pad - TB
        task_flat = jnp.pad(task_flat, ((0, pad), (0, 0)))
        obs_flat = jnp.pad(obs_flat, ((0, pad), (0, 0)))

    goal_flat, gx_flat = pl.pallas_call(
        functools.partial(_goal_kernel, nheads=nheads),
        grid=(TB_pad // tb_tile,),
        in_specs=[
            pl.BlockSpec((tb_tile, D), lambda i: (i, 0)),
            pl.BlockSpec((D, nheads * C), lambda i: (0, 0)),
            pl.BlockSpec((1, nheads * C), lambda i: (0, 0)),
            pl.BlockSpec((nheads, nheads * C, C * HW), lambda i: (0, 0, 0)),
            pl.BlockSpec((tb_tile, C * HW), lambda i: (i, 0)),
            pl.BlockSpec((nheads, C * HW, nheads * G), lambda i: (0, 0, 0)),
            pl.BlockSpec((1, nheads * G), lambda i: (0, 0)),
            pl.BlockSpec((nheads * G, 4 * nhh), lambda i: (0, 0)),
            pl.BlockSpec((1, 4 * nhh), lambda i: (0, 0)),
        ],
        out_specs=[
            pl.BlockSpec((tb_tile, nheads * G), lambda i: (i, 0)),
            pl.BlockSpec((tb_tile, 4 * nhh), lambda i: (i, 0)),
        ],
        out_shape=[
            jax.ShapeDtypeStruct((TB_pad, nheads * G), jnp.float32),
            jax.ShapeDtypeStruct((TB_pad, 4 * nhh), cdt),
        ],
        compiler_params=pltpu.CompilerParams(
            dimension_semantics=("parallel",),
            vmem_limit_bytes=48 * 1024 * 1024),
    )(task_flat, prep['wg'], prep['bg'], prep['expand_all'], obs_flat,
      prep['wc_heads'], prep['bc_all'], prep['wx_all'], prep['bx_all'])

    goal = goal_flat[:TB].reshape(T, B, nheads, G)
    gx = gx_flat[:TB].reshape(T, B, 4 * nhh)

    # --- LSTM recurrence: T-chunks (must divide T so final (h, c) are exact),
    # chunk size capped by a VMEM budget, bounded unroll inside each chunk.
    vmem_rows = max(1, (8 << 20) // max(1, B * (4 * nhh * bpe + nhh * 4) * 2))
    cap = min(128, vmem_rows)
    if t_chunk is None:
        t_chunk = _largest_divisor(T, cap)
    else:
        t_chunk = _largest_divisor(T, min(int(t_chunk), cap))
    unroll = max(1, min(t_chunk, 8))

    # TODO(synk): on v7x a leading "parallel" grid axis splitting B across the
    # two TensorCores would help for large B; omitted here because the demo B
    # is too small for (8,128)-legal half-batch blocks.
    out_flat, h_fin, c_fin = pl.pallas_call(
        functools.partial(_lstm_kernel, t_chunk=t_chunk, nhh=nhh, unroll=unroll),
        grid=(T // t_chunk,),
        in_specs=[
            pl.BlockSpec((t_chunk, B, 4 * nhh), lambda c: (c, 0, 0)),
            pl.BlockSpec((nhh, 4 * nhh), lambda c: (0, 0)),
        ],
        out_specs=[
            pl.BlockSpec((t_chunk, B, nhh), lambda c: (c, 0, 0)),
            pl.BlockSpec((B, nhh), lambda c: (0, 0)),
            pl.BlockSpec((B, nhh), lambda c: (0, 0)),
        ],
        out_shape=[
            jax.ShapeDtypeStruct((T, B, nhh), jnp.float32),
            jax.ShapeDtypeStruct((B, nhh), jnp.float32),
            jax.ShapeDtypeStruct((B, nhh), jnp.float32),
        ],
        compiler_params=pltpu.CompilerParams(
            dimension_semantics=("arbitrary",)),
    )(gx, prep['wh_all'])

    out = out_flat.reshape(T, B, nheads, Hh)
    h = h_fin.reshape(B, nheads, Hh)
    c = c_fin.reshape(B, nheads, Hh)
    return goal, out, (h, c)


# ---------------------------------------------------------------------------
# Pure-JAX reference (mirrors the torch forward semantics) for verification.
# ---------------------------------------------------------------------------
def reference_forward(params, obs_emb, task_emb, *, nheads, goal_dim, hist_per_head):
    T, B, C, H, W = obs_emb.shape
    Hh = hist_per_head
    w = jax.nn.sigmoid(jnp.einsum('tbd,nd->tbn', task_emb, params['Wg']) + params['bg'])
    w = w.reshape(T, B, nheads, C)
    modulated = obs_emb[:, :, None] * w[..., None, None]            # (T,B,NH,C,H,W)
    modf = modulated.reshape(T, B, nheads, C * H * W)
    goal = jnp.einsum('tbnk,gk->tbng', modf, params['Wc']) + params['bc']

    h = jnp.zeros((nheads, B, Hh), jnp.float32)
    c = jnp.zeros((nheads, B, Hh), jnp.float32)
    outs = []
    for t in range(T):
        new_h, new_c = [], []
        for hd in range(nheads):
            x = goal[t, :, hd, :]
            gates = x @ params['wx'][hd] + h[hd] @ params['wh'][hd] + params['b_lstm'][hd, 0]
            i = jax.nn.sigmoid(gates[:, :Hh])
            f = jax.nn.sigmoid(gates[:, Hh:2 * Hh])
            g = jnp.tanh(gates[:, 2 * Hh:3 * Hh])
            o = jax.nn.sigmoid(gates[:, 3 * Hh:])
            cn = f * c[hd] + i * g
            hn = o * jnp.tanh(cn)
            new_h.append(hn)
            new_c.append(cn)
        h = jnp.stack(new_h)
        c = jnp.stack(new_c)
        outs.append(jnp.transpose(h, (1, 0, 2)))
    out = jnp.stack(outs)
    return goal, out, (jnp.transpose(h, (1, 0, 2)), jnp.transpose(c, (1, 0, 2)))


if __name__ == "__main__":
    key = jax.random.PRNGKey(0)

    # small shapes consistent with the module defaults
    T, B = 8, 4
    task_dim = 16
    C, H, W = 8, 4, 4           # conv_feature_dims  (C*H*W = 128)
    nheads = 4
    goal_dim = 32               # nheads*goal_dim = 128 (lane-dense goal)
    history_dim = 32
    Hh = history_dim // nheads  # hist_dim property

    keys = jax.random.split(key, 10)

    def uinit(k, shape, fan_in):
        bound = 1.0 / np.sqrt(fan_in)
        return jax.random.uniform(k, shape, jnp.float32, -bound, bound)

    params = {
        # ModulationGenerator.weight_generator: Linear(task_dim -> nheads*C)
        'Wg': uinit(keys[0], (nheads * C, task_dim), task_dim),
        'bg': uinit(keys[1], (nheads * C,), task_dim),
        # compression: Linear(C*H*W -> goal_dim)
        'Wc': uinit(keys[2], (goal_dim, C * H * W), C * H * W),
        'bc': uinit(keys[3], (goal_dim,), C * H * W),
        # goal_tracker: nheads independent LSTMs (input goal_dim, hidden Hh)
        'wx': uinit(keys[4], (nheads, goal_dim, 4 * Hh), goal_dim),
        'wh': uinit(keys[5], (nheads, Hh, 4 * Hh), Hh),
        'b_lstm': uinit(keys[6], (nheads, 1, 4 * Hh), Hh),
    }

    obs_emb = jax.random.normal(keys[7], (T, B, C, H, W), jnp.float32)
    task_emb = jax.random.normal(keys[8], (T, B, task_dim), jnp.float32)

    g_exp, o_exp, (h_exp, c_exp) = reference_forward(
        params, obs_emb, task_emb, nheads=nheads, goal_dim=goal_dim,
        hist_per_head=Hh)

    # --- f32 path: auto tile selection (multi-block TB grid), tight tolerance.
    prep32 = prepare_params(params, nheads=nheads, goal_dim=goal_dim,
                            hist_per_head=Hh, channels=C, hw=H * W,
                            compute_dtype=jnp.float32)
    fwd32 = jax.jit(functools.partial(
        visual_goal_generator_forward, nheads=nheads, goal_dim=goal_dim,
        hist_per_head=Hh))
    goal, out, (h, c) = fwd32(prep32, obs_emb, task_emb)
    jax.block_until_ready((goal, out, h, c))
    np.testing.assert_allclose(np.asarray(goal), np.asarray(g_exp), rtol=5e-3, atol=5e-3)
    np.testing.assert_allclose(np.asarray(out), np.asarray(o_exp), rtol=5e-3, atol=5e-3)
    np.testing.assert_allclose(np.asarray(h), np.asarray(h_exp), rtol=5e-3, atol=5e-3)
    np.testing.assert_allclose(np.asarray(c), np.asarray(c_exp), rtol=5e-3, atol=5e-3)

    # --- bf16 path (optimized default): explicit tb_tile=24 exercises the
    # padded TB tail, t_chunk=4 exercises the cross-chunk (h, c) carry.
    prep16 = prepare_params(params, nheads=nheads, goal_dim=goal_dim,
                            hist_per_head=Hh, channels=C, hw=H * W,
                            compute_dtype=jnp.bfloat16)
    fwd16 = jax.jit(functools.partial(
        visual_goal_generator_forward, nheads=nheads, goal_dim=goal_dim,
        hist_per_head=Hh, tb_tile=24, t_chunk=4))
    goal16, out16, (h16, c16) = fwd16(prep16, obs_emb, task_emb)
    jax.block_until_ready((goal16, out16, h16, c16))
    np.testing.assert_allclose(np.asarray(goal16), np.asarray(g_exp), rtol=5e-2, atol=5e-2)
    np.testing.assert_allclose(np.asarray(out16), np.asarray(o_exp), rtol=5e-2, atol=5e-2)
    np.testing.assert_allclose(np.asarray(h16), np.asarray(h_exp), rtol=5e-2, atol=5e-2)
    np.testing.assert_allclose(np.asarray(c16), np.asarray(c_exp), rtol=5e-2, atol=5e-2)

    print("KERNEL_OK")
</pallas_src>

<mosaic_0001>
module attributes {stable_mosaic.version = 11 : i64} {
  func.func @_lstm_kernel(%arg0: i32, %arg1: memref<8x4x128xf32, #tpu.memory_space<vmem>>, %arg2: memref<32x128xf32, #tpu.memory_space<vmem>>, %arg3: memref<8x4x32xf32, #tpu.memory_space<vmem>>, %arg4: memref<4x32xf32, #tpu.memory_space<vmem>>, %arg5: memref<4x32xf32, #tpu.memory_space<vmem>>) attributes {dimension_semantics = [#tpu.dimension_semantics<arbitrary>], iteration_bounds = array<i64: 1>, scalar_prefetch = 0 : i64, scratch_operands = 0 : i64, tpu.core_type = #tpu.core_type<tc>, window_params = [{transform_indices = @transform_0, window_bounds = array<i64: 8, 4, 128>}, {pipeline_mode = #tpu.pipeline_mode<synchronous>, transform_indices = @transform_1, window_bounds = array<i64: 32, 128>}, {transform_indices = @transform_2, window_bounds = array<i64: 8, 4, 32>}, {pipeline_mode = #tpu.pipeline_mode<synchronous>, transform_indices = @transform_3, window_bounds = array<i64: 4, 32>}, {pipeline_mode = #tpu.pipeline_mode<synchronous>, transform_indices = @transform_4, window_bounds = array<i64: 4, 32>}]} {
    %c0_i32 = arith.constant 0 : i32
    %0 = arith.cmpi eq, %arg0, %c0_i32 : i32
    %1 = arith.extui %0 : i1 to i32
    %c0_i32_0 = arith.constant 0 : i32
    %2 = arith.cmpi ne, %1, %c0_i32_0 : i32
    scf.if %2 {
      %cst_74 = arith.constant 0.000000e+00 : f32
      %280 = vector.broadcast %cst_74 : f32 to vector<4x32xf32>
      %c0_75 = arith.constant 0 : index
      %c0_76 = arith.constant 0 : index
      %281 = vector.load %arg4[%c0_75, %c0_76] : memref<4x32xf32, #tpu.memory_space<vmem>>, vector<4x32xf32>
      tpu.vector_store %arg4[%c0_75, %c0_76], %280 {strides = array<i32>} : memref<4x32xf32, #tpu.memory_space<vmem>>, vector<4x32xf32>,
      %cst_77 = arith.constant 0.000000e+00 : f32
      %282 = vector.broadcast %cst_77 : f32 to vector<4x32xf32>
      %c0_78 = arith.constant 0 : index
      %c0_79 = arith.constant 0 : index
      %283 = vector.load %arg5[%c0_78, %c0_79] : memref<4x32xf32, #tpu.memory_space<vmem>>, vector<4x32xf32>
      tpu.vector_store %arg5[%c0_78, %c0_79], %282 {strides = array<i32>} : memref<4x32xf32, #tpu.memory_space<vmem>>, vector<4x32xf32>,
    } else {
    }
    %c0 = arith.constant 0 : index
    %c0_1 = arith.constant 0 : index
    %3 = vector.load %arg2[%c0, %c0_1] : memref<32x128xf32, #tpu.memory_space<vmem>>, vector<32x128xf32>
    %c0_2 = arith.constant 0 : index
    %c0_3 = arith.constant 0 : index
    %4 = vector.load %arg4[%c0_2, %c0_3] : memref<4x32xf32, #tpu.memory_space<vmem>>, vector<4x32xf32>
    %c0_4 = arith.constant 0 : index
    %c0_5 = arith.constant 0 : index
    %5 = vector.load %arg5[%c0_4, %c0_5] : memref<4x32xf32, #tpu.memory_space<vmem>>, vector<4x32xf32>
    %c0_i32_6 = arith.constant 0 : i32
    %6 = arith.index_cast %c0_i32_6 : i32 to index
    %c0_7 = arith.constant 0 : index
    %c0_8 = arith.constant 0 : index
    %7 = vector.load %arg1[%6, %c0_7, %c0_8] : memref<8x4x128xf32, #tpu.memory_space<vmem>>, vector<1x4x128xf32>
    %8 = vector.shape_cast %7 : vector<1x4x128xf32> to vector<4x128xf32>
    %cst = arith.constant dense<0.000000e+00> : vector<4x128xf32>
    %9 = tpu.matmul %4, %3, %cst {dimension_numbers = #tpu.dot_dimension_numbers<[1], [0], [0], [1], [0, 0, 1, 1], [], []>} : vector<4x32xf32>, vector<32x128xf32>, vector<4x128xf32> -> vector<4x128xf32>
    %10 = arith.addf %8, %9 : vector<4x128xf32>
    %11 = vector.extract_strided_slice %10 {offsets = [0, 0], sizes = [4, 32], strides = [1, 1]} : vector<4x128xf32> to vector<4x32xf32>
    %12 = arith.negf %11 : vector<4x32xf32>
    %13 = math.exp %12 : vector<4x32xf32>
    %cst_9 = arith.constant 1.000000e+00 : f32
    %14 = vector.broadcast %cst_9 : f32 to vector<4x32xf32>
    %15 = arith.addf %14, %13 : vector<4x32xf32>
    %16 = arith.divf %14, %15 : vector<4x32xf32>
    %17 = vector.extract_strided_slice %10 {offsets = [0, 32], sizes = [4, 32], strides = [1, 1]} : vector<4x128xf32> to vector<4x32xf32>
    %18 = arith.negf %17 : vector<4x32xf32>
    %19 = math.exp %18 : vector<4x32xf32>
    %cst_10 = arith.constant 1.000000e+00 : f32
    %20 = vector.broadcast %cst_10 : f32 to vector<4x32xf32>
    %21 = arith.addf %20, %19 : vector<4x32xf32>
    %22 = arith.divf %20, %21 : vector<4x32xf32>
    %23 = vector.extract_strided_slice %10 {offsets = [0, 64], sizes = [4, 32], strides = [1, 1]} : vector<4x128xf32> to vector<4x32xf32>
    %24 = math.tanh %23 : vector<4x32xf32>
    %25 = vector.extract_strided_slice %10 {offsets = [0, 96], sizes = [4, 32], strides = [1, 1]} : vector<4x128xf32> to vector<4x32xf32>
    %26 = arith.negf %25 : vector<4x32xf32>
    %27 = math.exp %26 : vector<4x32xf32>
    %cst_11 = arith.constant 1.000000e+00 : f32
    %28 = vector.broadcast %cst_11 : f32 to vector<4x32xf32>
    %29 = arith.addf %28, %27 : vector<4x32xf32>
    %30 = arith.divf %28, %29 : vector<4x32xf32>
    %31 = arith.mulf %22, %5 : vector<4x32xf32>
    %32 = arith.mulf %16, %24 : vector<4x32xf32>
    %33 = arith.addf %31, %32 : vector<4x32xf32>
    %34 = math.tanh %33 : vector<4x32xf32>
    %35 = arith.mulf %30, %34 : vector<4x32xf32>
    %36 = arith.index_cast %c0_i32_6 : i32 to index
    %c0_12 = arith.constant 0 : index
    %c0_13 = arith.constant 0 : index
    %37 = vector.load %arg3[%36, %c0_12, %c0_13] : memref<8x4x32xf32, #tpu.memory_space<vmem>>, vector<1x4x32xf32>
    %38 = vector.shape_cast %37 : vector<1x4x32xf32> to vector<4x32xf32>
    %39 = vector.shape_cast %35 : vector<4x32xf32> to vector<1x4x32xf32>
    tpu.vector_store %arg3[%36, %c0_12, %c0_13], %39 {strides = array<i32>} : memref<8x4x32xf32, #tpu.memory_space<vmem>>, vector<1x4x32xf32>,
    %c1_i32 = arith.constant 1 : i32
    %40 = arith.index_cast %c1_i32 : i32 to index
    %c0_14 = arith.constant 0 : index
    %c0_15 = arith.constant 0 : index
    %41 = vector.load %arg1[%40, %c0_14, %c0_15] : memref<8x4x128xf32, #tpu.memory_space<vmem>>, vector<1x4x128xf32>
    %42 = vector.shape_cast %41 : vector<1x4x128xf32> to vector<4x128xf32>
    %cst_16 = arith.constant dense<0.000000e+00> : vector<4x128xf32>
    %43 = tpu.matmul %35, %3, %cst_16 {dimension_numbers = #tpu.dot_dimension_numbers<[1], [0], [0], [1], [0, 0, 1, 1], [], []>} : vector<4x32xf32>, vector<32x128xf32>, vector<4x128xf32> -> vector<4x128xf32>
    %44 = arith.addf %42, %43 : vector<4x128xf32>
    %45 = vector.extract_strided_slice %44 {offsets = [0, 0], sizes = [4, 32], strides = [1, 1]} : vector<4x128xf32> to vector<4x32xf32>
    %46 = arith.negf %45 : vector<4x32xf32>
    %47 = math.exp %46 : vector<4x32xf32>
    %cst_17 = arith.constant 1.000000e+00 : f32
    %48 = vector.broadcast %cst_17 : f32 to vector<4x32xf32>
    %49 = arith.addf %48, %47 : vector<4x32xf32>
    %50 = arith.divf %48, %49 : vector<4x32xf32>
    %51 = vector.extract_strided_slice %44 {offsets = [0, 32], sizes = [4, 32], strides = [1, 1]} : vector<4x128xf32> to vector<4x32xf32>
    %52 = arith.negf %51 : vector<4x32xf32>
    %53 = math.exp %52 : vector<4x32xf32>
    %cst_18 = arith.constant 1.000000e+00 : f32
    %54 = vector.broadcast %cst_18 : f32 to vector<4x32xf32>
    %55 = arith.addf %54, %53 : vector<4x32xf32>
    %56 = arith.divf %54, %55 : vector<4x32xf32>
    %57 = vector.extract_strided_slice %44 {offsets = [0, 64], sizes = [4, 32], strides = [1, 1]} : vector<4x128xf32> to vector<4x32xf32>
    %58 = math.tanh %57 : vector<4x32xf32>
    %59 = vector.extract_strided_slice %44 {offsets = [0, 96], sizes = [4, 32], strides = [1, 1]} : vector<4x128xf32> to vector<4x32xf32>
    %60 = arith.negf %59 : vector<4x32xf32>
    %61 = math.exp %60 : vector<4x32xf32>
    %cst_19 = arith.constant 1.000000e+00 : f32
    %62 = vector.broadcast %cst_19 : f32 to vector<4x32xf32>
    %63 = arith.addf %62, %61 : vector<4x32xf32>
    %64 = arith.divf %62, %63 : vector<4x32xf32>
    %65 = arith.mulf %56, %33 : vector<4x32xf32>
    %66 = arith.mulf %50, %58 : vector<4x32xf32>
    %67 = arith.addf %65, %66 : vector<4x32xf32>
    %68 = math.tanh %67 : vector<4x32xf32>
    %69 = arith.mulf %64, %68 : vector<4x32xf32>
    %70 = arith.index_cast %c1_i32 : i32 to index
    %c0_20 = arith.constant 0 : index
    %c0_21 = arith.constant 0 : index
    %71 = vector.load %arg3[%70, %c0_20, %c0_21] : memref<8x4x32xf32, #tpu.memory_space<vmem>>, vector<1x4x32xf32>
    %72 = vector.shape_cast %71 : vector<1x4x32xf32> to vector<4x32xf32>
    %73 = vector.shape_cast %69 : vector<4x32xf32> to vector<1x4x32xf32>
    tpu.vector_store %arg3[%70, %c0_20, %c0_21], %73 {strides = array<i32>} : memref<8x4x32xf32, #tpu.memory_space<vmem>>, vector<1x4x32xf32>,
    %c2_i32 = arith.constant 2 : i32
    %74 = arith.index_cast %c2_i32 : i32 to index
    %c0_22 = arith.constant 0 : index
    %c0_23 = arith.constant 0 : index
    %75 = vector.load %arg1[%74, %c0_22, %c0_23] : memref<8x4x128xf32, #tpu.memory_space<vmem>>, vector<1x4x128xf32>
    %76 = vector.shape_cast %75 : vector<1x4x128xf32> to vector<4x128xf32>
    %cst_24 = arith.constant dense<0.000000e+00> : vector<4x128xf32>
    %77 = tpu.matmul %69, %3, %cst_24 {dimension_numbers = #tpu.dot_dimension_numbers<[1], [0], [0], [1], [0, 0, 1, 1], [], []>} : vector<4x32xf32>, vector<32x128xf32>, vector<4x128xf32> -> vector<4x128xf32>
    %78 = arith.addf %76, %77 : vector<4x128xf32>
    %79 = vector.extract_strided_slice %78 {offsets = [0, 0], sizes = [4, 32], strides = [1, 1]} : vector<4x128xf32> to vector<4x32xf32>
    %80 = arith.negf %79 : vector<4x32xf32>
    %81 = math.exp %80 : vector<4x32xf32>
    %cst_25 = arith.constant 1.000000e+00 : f32
    %82 = vector.broadcast %cst_25 : f32 to vector<4x32xf32>
    %83 = arith.addf %82, %81 : vector<4x32xf32>
    %84 = arith.divf %82, %83 : vector<4x32xf32>
    %85 = vector.extract_strided_slice %78 {offsets = [0, 32], sizes = [4, 32], strides = [1, 1]} : vector<4x128xf32> to vector<4x32xf32>
    %86 = arith.negf %85 : vector<4x32xf32>
    %87 = math.exp %86 : vector<4x32xf32>
    %cst_26 = arith.constant 1.000000e+00 : f32
    %88 = vector.broadcast %cst_26 : f32 to vector<4x32xf32>
    %89 = arith.addf %88, %87 : vector<4x32xf32>
    %90 = arith.divf %88, %89 : vector<4x32xf32>
    %91 = vector.extract_strided_slice %78 {offsets = [0, 64], sizes = [4, 32], strides = [1, 1]} : vector<4x128xf32> to vector<4x32xf32>
    %92 = math.tanh %91 : vector<4x32xf32>
    %93 = vector.extract_strided_slice %78 {offsets = [0, 96], sizes = [4, 32], strides = [1, 1]} : vector<4x128xf32> to vector<4x32xf32>
    %94 = arith.negf %93 : vector<4x32xf32>
    %95 = math.exp %94 : vector<4x32xf32>
    %cst_27 = arith.constant 1.000000e+00 : f32
    %96 = vector.broadcast %cst_27 : f32 to vector<4x32xf32>
    %97 = arith.addf %96, %95 : vector<4x32xf32>
    %98 = arith.divf %96, %97 : vector<4x32xf32>
    %99 = arith.mulf %90, %67 : vector<4x32xf32>
    %100 = arith.mulf %84, %92 : vector<4x32xf32>
    %101 = arith.addf %99, %100 : vector<4x32xf32>
    %102 = math.tanh %101 : vector<4x32xf32>
    %103 = arith.mulf %98, %102 : vector<4x32xf32>
    %104 = arith.index_cast %c2_i32 : i32 to index
    %c0_28 = arith.constant 0 : index
    %c0_29 = arith.constant 0 : index
    %105 = vector.load %arg3[%104, %c0_28, %c0_29] : memref<8x4x32xf32, #tpu.memory_space<vmem>>, vector<1x4x32xf32>
    %106 = vector.shape_cast %105 : vector<1x4x32xf32> to vector<4x32xf32>
    %107 = vector.shape_cast %103 : vector<4x32xf32> to vector<1x4x32xf32>
    tpu.vector_store %arg3[%104, %c0_28, %c0_29], %107 {strides = array<i32>} : memref<8x4x32xf32, #tpu.memory_space<vmem>>, vector<1x4x32xf32>,
    %c3_i32 = arith.constant 3 : i32
    %108 = arith.index_cast %c3_i32 : i32 to index
    %c0_30 = arith.constant 0 : index
    %c0_31 = arith.constant 0 : index
    %109 = vector.load %arg1[%108, %c0_30, %c0_31] : memref<8x4x128xf32, #tpu.memory_space<vmem>>, vector<1x4x128xf32>
    %110 = vector.shape_cast %109 : vector<1x4x128xf32> to vector<4x128xf32>
    %cst_32 = arith.constant dense<0.000000e+00> : vector<4x128xf32>
    %111 = tpu.matmul %103, %3, %cst_32 {dimension_numbers = #tpu.dot_dimension_numbers<[1], [0], [0], [1], [0, 0, 1, 1], [], []>} : vector<4x32xf32>, vector<32x128xf32>, vector<4x128xf32> -> vector<4x128xf32>
    %112 = arith.addf %110, %111 : vector<4x128xf32>
    %113 = vector.extract_strided_slice %112 {offsets = [0, 0], sizes = [4, 32], strides = [1, 1]} : vector<4x128xf32> to vector<4x32xf32>
    %114 = arith.negf %113 : vector<4x32xf32>
    %115 = math.exp %114 : vector<4x32xf32>
    %cst_33 = arith.constant 1.000000e+00 : f32
    %116 = vector.broadcast %cst_33 : f32 to vector<4x32xf32>
    %117 = arith.addf %116, %115 : vector<4x32xf32>
    %118 = arith.divf %116, %117 : vector<4x32xf32>
    %119 = vector.extract_strided_slice %112 {offsets = [0, 32], sizes = [4, 32], strides = [1, 1]} : vector<4x128xf32> to vector<4x32xf32>
    %120 = arith.negf %119 : vector<4x32xf32>
    %121 = math.exp %120 : vector<4x32xf32>
    %cst_34 = arith.constant 1.000000e+00 : f32
    %122 = vector.broadcast %cst_34 : f32 to vector<4x32xf32>
    %123 = arith.addf %122, %121 : vector<4x32xf32>
    %124 = arith.divf %122, %123 : vector<4x32xf32>
    %125 = vector.extract_strided_slice %112 {offsets = [0, 64], sizes = [4, 32], strides = [1, 1]} : vector<4x128xf32> to vector<4x32xf32>
    %126 = math.tanh %125 : vector<4x32xf32>
    %127 = vector.extract_strided_slice %112 {offsets = [0, 96], sizes = [4, 32], strides = [1, 1]} : vector<4x128xf32> to vector<4x32xf32>
    %128 = arith.negf %127 : vector<4x32xf32>
    %129 = math.exp %128 : vector<4x32xf32>
    %cst_35 = arith.constant 1.000000e+00 : f32
    %130 = vector.broadcast %cst_35 : f32 to vector<4x32xf32>
    %131 = arith.addf %130, %129 : vector<4x32xf32>
    %132 = arith.divf %130, %131 : vector<4x32xf32>
    %133 = arith.mulf %124, %101 : vector<4x32xf32>
    %134 = arith.mulf %118, %126 : vector<4x32xf32>
    %135 = arith.addf %133, %134 : vector<4x32xf32>
    %136 = math.tanh %135 : vector<4x32xf32>
    %137 = arith.mulf %132, %136 : vector<4x32xf32>
    %138 = arith.index_cast %c3_i32 : i32 to index
    %c0_36 = arith.constant 0 : index
    %c0_37 = arith.constant 0 : index
    %139 = vector.load %arg3[%138, %c0_36, %c0_37] : memref<8x4x32xf32, #tpu.memory_space<vmem>>, vector<1x4x32xf32>
    %140 = vector.shape_cast %139 : vector<1x4x32xf32> to vector<4x32xf32>
    %141 = vector.shape_cast %137 : vector<4x32xf32> to vector<1x4x32xf32>
    tpu.vector_store %arg3[%138, %c0_36, %c0_37], %141 {strides = array<i32>} : memref<8x4x32xf32, #tpu.memory_space<vmem>>, vector<1x4x32xf32>,
    %c4_i32 = arith.constant 4 : i32
    %142 = arith.index_cast %c4_i32 : i32 to index
    %c0_38 = arith.constant 0 : index
    %c0_39 = arith.constant 0 : index
    %143 = vector.load %arg1[%142, %c0_38, %c0_39] : memref<8x4x128xf32, #tpu.memory_space<vmem>>, vector<1x4x128xf32>
    %144 = vector.shape_cast %143 : vector<1x4x128xf32> to vector<4x128xf32>
    %cst_40 = arith.constant dense<0.000000e+00> : vector<4x128xf32>
    %145 = tpu.matmul %137, %3, %cst_40 {dimension_numbers = #tpu.dot_dimension_numbers<[1], [0], [0], [1], [0, 0, 1, 1], [], []>} : vector<4x32xf32>, vector<32x128xf32>, vector<4x128xf32> -> vector<4x128xf32>
    %146 = arith.addf %144, %145 : vector<4x128xf32>
    %147 = vector.extract_strided_slice %146 {offsets = [0, 0], sizes = [4, 32], strides = [1, 1]} : vector<4x128xf32> to vector<4x32xf32>
    %148 = arith.negf %147 : vector<4x32xf32>
    %149 = math.exp %148 : vector<4x32xf32>
    %cst_41 = arith.constant 1.000000e+00 : f32
    %150 = vector.broadcast %cst_41 : f32 to vector<4x32xf32>
    %151 = arith.addf %150, %149 : vector<4x32xf32>
    %152 = arith.divf %150, %151 : vector<4x32xf32>
    %153 = vector.extract_strided_slice %146 {offsets = [0, 32], sizes = [4, 32], strides = [1, 1]} : vector<4x128xf32> to vector<4x32xf32>
    %154 = arith.negf %153 : vector<4x32xf32>
    %155 = math.exp %154 : vector<4x32xf32>
    %cst_42 = arith.constant 1.000000e+00 : f32
    %156 = vector.broadcast %cst_42 : f32 to vector<4x32xf32>
    %157 = arith.addf %156, %155 : vector<4x32xf32>
    %158 = arith.divf %156, %157 : vector<4x32xf32>
    %159 = vector.extract_strided_slice %146 {offsets = [0, 64], sizes = [4, 32], strides = [1, 1]} : vector<4x128xf32> to vector<4x32xf32>
    %160 = math.tanh %159 : vector<4x32xf32>
    %161 = vector.extract_strided_slice %146 {offsets = [0, 96], sizes = [4, 32], strides = [1, 1]} : vector<4x128xf32> to vector<4x32xf32>
    %162 = arith.negf %161 : vector<4x32xf32>
    %163 = math.exp %162 : vector<4x32xf32>
    %cst_43 = arith.constant 1.000000e+00 : f32
    %164 = vector.broadcast %cst_43 : f32 to vector<4x32xf32>
    %165 = arith.addf %164, %163 : vector<4x32xf32>
    %166 = arith.divf %164, %165 : vector<4x32xf32>
    %167 = arith.mulf %158, %135 : vector<4x32xf32>
    %168 = arith.mulf %152, %160 : vector<4x32xf32>
    %169 = arith.addf %167, %168 : vector<4x32xf32>
    %170 = math.tanh %169 : vector<4x32xf32>
    %171 = arith.mulf %166, %170 : vector<4x32xf32>
    %172 = arith.index_cast %c4_i32 : i32 to index
    %c0_44 = arith.constant 0 : index
    %c0_45 = arith.constant 0 : index
    %173 = vector.load %arg3[%172, %c0_44, %c0_45] : memref<8x4x32xf32, #tpu.memory_space<vmem>>, vector<1x4x32xf32>
    %174 = vector.shape_cast %173 : vector<1x4x32xf32> to vector<4x32xf32>
    %175 = vector.shape_cast %171 : vector<4x32xf32> to vector<1x4x32xf32>
    tpu.vector_store %arg3[%172, %c0_44, %c0_45], %175 {strides = array<i32>} : memref<8x4x32xf32, #tpu.memory_space<vmem>>, vector<1x4x32xf32>,
    %c5_i32 = arith.constant 5 : i32
    %176 = arith.index_cast %c5_i32 : i32 to index
    %c0_46 = arith.constant 0 : index
    %c0_47 = arith.constant 0 : index
    %177 = vector.load %arg1[%176, %c0_46, %c0_47] : memref<8x4x128xf32, #tpu.memory_space<vmem>>, vector<1x4x128xf32>
    %178 = vector.shape_cast %177 : vector<1x4x128xf32> to vector<4x128xf32>
    %cst_48 = arith.constant dense<0.000000e+00> : vector<4x128xf32>
    %179 = tpu.matmul %171, %3, %cst_48 {dimension_numbers = #tpu.dot_dimension_numbers<[1], [0], [0], [1], [0, 0, 1, 1], [], []>} : vector<4x32xf32>, vector<32x128xf32>, vector<4x128xf32> -> vector<4x128xf32>
    %180 = arith.addf %178, %179 : vector<4x128xf32>
    %181 = vector.extract_strided_slice %180 {offsets = [0, 0], sizes = [4, 32], strides = [1, 1]} : vector<4x128xf32> to vector<4x32xf32>
    %182 = arith.negf %181 : vector<4x32xf32>
    %183 = math.exp %182 : vector<4x32xf32>
    %cst_49 = arith.constant 1.000000e+00 : f32
    %184 = vector.broadcast %cst_49 : f32 to vector<4x32xf32>
    %185 = arith.addf %184, %183 : vector<4x32xf32>
    %186 = arith.divf %184, %185 : vector<4x32xf32>
    %187 = vector.extract_strided_slice %180 {offsets = [0, 32], sizes = [4, 32], strides = [1, 1]} : vector<4x128xf32> to vector<4x32xf32>
    %188 = arith.negf %187 : vector<4x32xf32>
    %189 = math.exp %188 : vector<4x32xf32>
    %cst_50 = arith.constant 1.000000e+00 : f32
    %190 = vector.broadcast %cst_50 : f32 to vector<4x32xf32>
    %191 = arith.addf %190, %189 : vector<4x32xf32>
    %192 = arith.divf %190, %191 : vector<4x32xf32>
    %193 = vector.extract_strided_slice %180 {offsets = [0, 64], sizes = [4, 32], strides = [1, 1]} : vector<4x128xf32> to vector<4x32xf32>
    %194 = math.tanh %193 : vector<4x32xf32>
    %195 = vector.extract_strided_slice %180 {offsets = [0, 96], sizes = [4, 32], strides = [1, 1]} : vector<4x128xf32> to vector<4x32xf32>
    %196 = arith.negf %195 : vector<4x32xf32>
    %197 = math.exp %196 : vector<4x32xf32>
    %cst_51 = arith.constant 1.000000e+00 : f32
    %198 = vector.broadcast %cst_51 : f32 to vector<4x32xf32>
    %199 = arith.addf %198, %197 : vector<4x32xf32>
    %200 = arith.divf %198, %199 : vector<4x32xf32>
    %201 = arith.mulf %192, %169 : vector<4x32xf32>
    %202 = arith.mulf %186, %194 : vector<4x32xf32>
    %203 = arith.addf %201, %202 : vector<4x32xf32>
    %204 = math.tanh %203 : vector<4x32xf32>
    %205 = arith.mulf %200, %204 : vector<4x32xf32>
    %206 = arith.index_cast %c5_i32 : i32 to index
    %c0_52 = arith.constant 0 : index
    %c0_53 = arith.constant 0 : index
    %207 = vector.load %arg3[%206, %c0_52, %c0_53] : memref<8x4x32xf32, #tpu.memory_space<vmem>>, vector<1x4x32xf32>
    %208 = vector.shape_cast %207 : vector<1x4x32xf32> to vector<4x32xf32>
    %209 = vector.shape_cast %205 : vector<4x32xf32> to vector<1x4x32xf32>
    tpu.vector_store %arg3[%206, %c0_52, %c0_53], %209 {strides = array<i32>} : memref<8x4x32xf32, #tpu.memory_space<vmem>>, vector<1x4x32xf32>,
    %c6_i32 = arith.constant 6 : i32
    %210 = arith.index_cast %c6_i32 : i32 to index
    %c0_54 = arith.constant 0 : index
    %c0_55 = arith.constant 0 : index
    %211 = vector.load %arg1[%210, %c0_54, %c0_55] : memref<8x4x128xf32, #tpu.memory_space<vmem>>, vector<1x4x128xf32>
    %212 = vector.shape_cast %211 : vector<1x4x128xf32> to vector<4x128xf32>
    %cst_56 = arith.constant dense<0.000000e+00> : vector<4x128xf32>
    %213 = tpu.matmul %205, %3, %cst_56 {dimension_numbers = #tpu.dot_dimension_numbers<[1], [0], [0], [1], [0, 0, 1, 1], [], []>} : vector<4x32xf32>, vector<32x128xf32>, vector<4x128xf32> -> vector<4x128xf32>
    %214 = arith.addf %212, %213 : vector<4x128xf32>
    %215 = vector.extract_strided_slice %214 {offsets = [0, 0], sizes = [4, 32], strides = [1, 1]} : vector<4x128xf32> to vector<4x32xf32>
    %216 = arith.negf %215 : vector<4x32xf32>
    %217 = math.exp %216 : vector<4x32xf32>
    %cst_57 = arith.constant 1.000000e+00 : f32
    %218 = vector.broadcast %cst_57 : f32 to vector<4x32xf32>
    %219 = arith.addf %218, %217 : vector<4x32xf32>
    %220 = arith.divf %218, %219 : vector<4x32xf32>
    %221 = vector.extract_strided_slice %214 {offsets = [0, 32], sizes = [4, 32], strides = [1, 1]} : vector<4x128xf32> to vector<4x32xf32>
    %222 = arith.negf %221 : vector<4x32xf32>
    %223 = math.exp %222 : vector<4x32xf32>
    %cst_58 = arith.constant 1.000000e+00 : f32
    %224 = vector.broadcast %cst_58 : f32 to vector<4x32xf32>
    %225 = arith.addf %224, %223 : vector<4x32xf32>
    %226 = arith.divf %224, %225 : vector<4x32xf32>
    %227 = vector.extract_strided_slice %214 {offsets = [0, 64], sizes = [4, 32], strides = [1, 1]} : vector<4x128xf32> to vector<4x32xf32>
    %228 = math.tanh %227 : vector<4x32xf32>
    %229 = vector.extract_strided_slice %214 {offsets = [0, 96], sizes = [4, 32], strides = [1, 1]} : vector<4x128xf32> to vector<4x32xf32>
    %230 = arith.negf %229 : vector<4x32xf32>
    %231 = math.exp %230 : vector<4x32xf32>
    %cst_59 = arith.constant 1.000000e+00 : f32
    %232 = vector.broadcast %cst_59 : f32 to vector<4x32xf32>
    %233 = arith.addf %232, %231 : vector<4x32xf32>
    %234 = arith.divf %232, %233 : vector<4x32xf32>
    %235 = arith.mulf %226, %203 : vector<4x32xf32>
    %236 = arith.mulf %220, %228 : vector<4x32xf32>
    %237 = arith.addf %235, %236 : vector<4x32xf32>
    %238 = math.tanh %237 : vector<4x32xf32>
    %239 = arith.mulf %234, %238 : vector<4x32xf32>
    %240 = arith.index_cast %c6_i32 : i32 to index
    %c0_60 = arith.constant 0 : index
    %c0_61 = arith.constant 0 : index
    %241 = vector.load %arg3[%240, %c0_60, %c0_61] : memref<8x4x32xf32, #tpu.memory_space<vmem>>, vector<1x4x32xf32>
    %242 = vector.shape_cast %241 : vector<1x4x32xf32> to vector<4x32xf32>
    %243 = vector.shape_cast %239 : vector<4x32xf32> to vector<1x4x32xf32>
    tpu.vector_store %arg3[%240, %c0_60, %c0_61], %243 {strides = array<i32>} : memref<8x4x32xf32, #tpu.memory_space<vmem>>, vector<1x4x32xf32>,
    %c7_i32 = arith.constant 7 : i32
    %244 = arith.index_cast %c7_i32 : i32 to index
    %c0_62 = arith.constant 0 : index
    %c0_63 = arith.constant 0 : index
    %245 = vector.load %arg1[%244, %c0_62, %c0_63] : memref<8x4x128xf32, #tpu.memory_space<vmem>>, vector<1x4x128xf32>
    %246 = vector.shape_cast %245 : vector<1x4x128xf32> to vector<4x128xf32>
    %cst_64 = arith.constant dense<0.000000e+00> : vector<4x128xf32>
    %247 = tpu.matmul %239, %3, %cst_64 {dimension_numbers = #tpu.dot_dimension_numbers<[1], [0], [0], [1], [0, 0, 1, 1], [], []>} : vector<4x32xf32>, vector<32x128xf32>, vector<4x128xf32> -> vector<4x128xf32>
    %248 = arith.addf %246, %247 : vector<4x128xf32>
    %249 = vector.extract_strided_slice %248 {offsets = [0, 0], sizes = [4, 32], strides = [1, 1]} : vector<4x128xf32> to vector<4x32xf32>
    %250 = arith.negf %249 : vector<4x32xf32>
    %251 = math.exp %250 : vector<4x32xf32>
    %cst_65 = arith.constant 1.000000e+00 : f32
    %252 = vector.broadcast %cst_65 : f32 to vector<4x32xf32>
    %253 = arith.addf %252, %251 : vector<4x32xf32>
    %254 = arith.divf %252, %253 : vector<4x32xf32>
    %255 = vector.extract_strided_slice %248 {offsets = [0, 32], sizes = [4, 32], strides = [1, 1]} : vector<4x128xf32> to vector<4x32xf32>
    %256 = arith.negf %255 : vector<4x32xf32>
    %257 = math.exp %256 : vector<4x32xf32>
    %cst_66 = arith.constant 1.000000e+00 : f32
    %258 = vector.broadcast %cst_66 : f32 to vector<4x32xf32>
    %259 = arith.addf %258, %257 : vector<4x32xf32>
    %260 = arith.divf %258, %259 : vector<4x32xf32>
    %261 = vector.extract_strided_slice %248 {offsets = [0, 64], sizes = [4, 32], strides = [1, 1]} : vector<4x128xf32> to vector<4x32xf32>
    %262 = math.tanh %261 : vector<4x32xf32>
    %263 = vector.extract_strided_slice %248 {offsets = [0, 96], sizes = [4, 32], strides = [1, 1]} : vector<4x128xf32> to vector<4x32xf32>
    %264 = arith.negf %263 : vector<4x32xf32>
    %265 = math.exp %264 : vector<4x32xf32>
    %cst_67 = arith.constant 1.000000e+00 : f32
    %266 = vector.broadcast %cst_67 : f32 to vector<4x32xf32>
    %267 = arith.addf %266, %265 : vector<4x32xf32>
    %268 = arith.divf %266, %267 : vector<4x32xf32>
    %269 = arith.mulf %260, %237 : vector<4x32xf32>
    %270 = arith.mulf %254, %262 : vector<4x32xf32>
    %271 = arith.addf %269, %270 : vector<4x32xf32>
    %272 = math.tanh %271 : vector<4x32xf32>
    %273 = arith.mulf %268, %272 : vector<4x32xf32>
    %274 = arith.index_cast %c7_i32 : i32 to index
    %c0_68 = arith.constant 0 : index
    %c0_69 = arith.constant 0 : index
    %275 = vector.load %arg3[%274, %c0_68, %c0_69] : memref<8x4x32xf32, #tpu.memory_space<vmem>>, vector<1x4x32xf32>
    %276 = vector.shape_cast %275 : vector<1x4x32xf32> to vector<4x32xf32>
    %277 = vector.shape_cast %273 : vector<4x32xf32> to vector<1x4x32xf32>
    tpu.vector_store %arg3[%274, %c0_68, %c0_69], %277 {strides = array<i32>} : memref<8x4x32xf32, #tpu.memory_space<vmem>>, vector<1x4x32xf32>,
    %c8_i32 = arith.constant 8 : i32
    %c0_70 = arith.constant 0 : index
    %c0_71 = arith.constant 0 : index
    %278 = vector.load %arg4[%c0_70, %c0_71] : memref<4x32xf32, #tpu.memory_space<vmem>>, vector<4x32xf32>
    tpu.vector_store %arg4[%c0_70, %c0_71], %273 {strides = array<i32>} : memref<4x32xf32, #tpu.memory_space<vmem>>, vector<4x32xf32>,
    %c0_72 = arith.constant 0 : index
    %c0_73 = arith.constant 0 : index
    %279 = vector.load %arg5[%c0_72, %c0_73] : memref<4x32xf32, #tpu.memory_space<vmem>>, vector<4x32xf32>
    tpu.vector_store %arg5[%c0_72, %c0_73], %271 {strides = array<i32>} : memref<4x32xf32, #tpu.memory_space<vmem>>, vector<4x32xf32>,
    return
  }
  func.func @transform_0(%arg0: i32) -> (i32, i32, i32) {
    %c0_i32 = arith.constant 0 : i32
    %c0_i32_0 = arith.constant 0 : i32
    %c0_i32_1 = arith.constant 0 : i32
    return %arg0, %c0_i32, %c0_i32_0 : i32, i32, i32
  }
  func.func @transform_1(%arg0: i32) -> (i32, i32) {
    %c0_i32 = arith.constant 0 : i32
    %c0_i32_0 = arith.constant 0 : i32
    %c0_i32_1 = arith.constant 0 : i32
    return %c0_i32, %c0_i32_0 : i32, i32
  }
  func.func @transform_2(%arg0: i32) -> (i32, i32, i32) {
    %c0_i32 = arith.constant 0 : i32
    %c0_i32_0 = arith.constant 0 : i32
    %c0_i32_1 = arith.constant 0 : i32
    return %arg0, %c0_i32, %c0_i32_0 : i32, i32, i32
  }
  func.func @transform_3(%arg0: i32) -> (i32, i32) {
    %c0_i32 = arith.constant 0 : i32
    %c0_i32_0 = arith.constant 0 : i32
    %c0_i32_1 = arith.constant 0 : i32
    return %c0_i32, %c0_i32_0 : i32, i32
  }
  func.func @transform_4(%arg0: i32) -> (i32, i32) {
    %c0_i32 = arith.constant 0 : i32
    %c0_i32_0 = arith.constant 0 : i32
    %c0_i32_1 = arith.constant 0 : i32
    return %c0_i32, %c0_i32_0 : i32, i32
  }
}

module attributes {stable_mosaic.version = 11 : i64} {
  func.func @_goal_kernel(%arg0: i32, %arg1: memref<16x16xf32, #tpu.memory_space<vmem>>, %arg2: memref<16x32xf32, #tpu.memory_space<vmem>>, %arg3: memref<1x32xf32, #tpu.memory_space<vmem>>, %arg4: memref<4x32x128xf32, #tpu.memory_space<vmem>>, %arg5: memref<16x128xf32, #tpu.memory_space<vmem>>, %arg6: memref<4x128x128xf32, #tpu.memory_space<vmem>>, %arg7: memref<1x128xf32, #tpu.memory_space<vmem>>, %arg8: memref<128x128xf32, #tpu.memory_space<vmem>>, %arg9: memref<1x128xf32, #tpu.memory_space<vmem>>, %arg10: memref<16x128xf32, #tpu.memory_space<vmem>>, %arg11: memref<16x128xf32, #tpu.memory_space<vmem>>) attributes {dimension_semantics = [#tpu.dimension_semantics<parallel>], iteration_bounds = array<i64: 2>, scalar_prefetch = 0 : i64, scratch_operands = 0 : i64, tpu.core_type = #tpu.core_type<tc>, window_params = [{transform_indices = @transform_0, window_bounds = array<i64: 16, 16>}, {pipeline_mode = #tpu.pipeline_mode<synchronous>, transform_indices = @transform_1, window_bounds = array<i64: 16, 32>}, {pipeline_mode = #tpu.pipeline_mode<synchronous>, transform_indices = @transform_2, window_bounds = array<i64: 1, 32>}, {pipeline_mode = #tpu.pipeline_mode<synchronous>, transform_indices = @transform_3, window_bounds = array<i64: 4, 32, 128>}, {transform_indices = @transform_4, window_bounds = array<i64: 16, 128>}, {pipeline_mode = #tpu.pipeline_mode<synchronous>, transform_indices = @transform_5, window_bounds = array<i64: 4, 128, 128>}, {pipeline_mode = #tpu.pipeline_mode<synchronous>, transform_indices = @transform_6, window_bounds = array<i64: 1, 128>}, {pipeline_mode = #tpu.pipeline_mode<synchronous>, transform_indices = @transform_7, window_bounds = array<i64: 128, 128>}, {pipeline_mode = #tpu.pipeline_mode<synchronous>, transform_indices = @transform_8, window_bounds = array<i64: 1, 128>}, {transform_indices = @transform_9, window_bounds = array<i64: 16, 128>}, {transform_indices = @transform_10, window_bounds = array<i64: 16, 128>}]} {
    %c0 = arith.constant 0 : index
    %c0_0 = arith.constant 0 : index
    %0 = vector.load %arg1[%c0, %c0_0] : memref<16x16xf32, #tpu.memory_space<vmem>>, vector<16x16xf32>
    %c0_1 = arith.constant 0 : index
    %c0_2 = arith.constant 0 : index
    %1 = vector.load %arg2[%c0_1, %c0_2] : memref<16x32xf32, #tpu.memory_space<vmem>>, vector<16x32xf32>
    %cst = arith.constant dense<0.000000e+00> : vector<16x32xf32>
    %2 = tpu.matmul %0, %1, %cst {dimension_numbers = #tpu.dot_dimension_numbers<[1], [0], [0], [1], [0, 0, 1, 1], [], []>} : vector<16x16xf32>, vector<16x32xf32>, vector<16x32xf32> -> vector<16x32xf32>
    %c0_3 = arith.constant 0 : index
    %c0_4 = arith.constant 0 : index
    %3 = vector.load %arg3[%c0_3, %c0_4] : memref<1x32xf32, #tpu.memory_space<vmem>>, vector<1x32xf32>
    %4 = vector.broadcast %3 : vector<1x32xf32> to vector<16x32xf32>
    %5 = arith.addf %2, %4 : vector<16x32xf32>
    %6 = arith.negf %5 : vector<16x32xf32>
    %7 = math.exp %6 : vector<16x32xf32>
    %cst_5 = arith.constant 1.000000e+00 : f32
    %8 = vector.broadcast %cst_5 : f32 to vector<16x32xf32>
    %9 = arith.addf %8, %7 : vector<16x32xf32>
    %10 = arith.divf %8, %9 : vector<16x32xf32>
    %c0_6 = arith.constant 0 : index
    %c0_7 = arith.constant 0 : index
    %11 = vector.load %arg5[%c0_6, %c0_7] : memref<16x128xf32, #tpu.memory_space<vmem>>, vector<16x128xf32>
    %c0_8 = arith.constant 0 : index
    %c0_9 = arith.constant 0 : index
    %c0_10 = arith.constant 0 : index
    %12 = vector.load %arg4[%c0_8, %c0_9, %c0_10] : memref<4x32x128xf32, #tpu.memory_space<vmem>>, vector<1x32x128xf32>
    %13 = vector.shape_cast %12 : vector<1x32x128xf32> to vector<32x128xf32>
    %cst_11 = arith.constant dense<0.000000e+00> : vector<16x128xf32>
    %14 = tpu.matmul %10, %13, %cst_11 {dimension_numbers = #tpu.dot_dimension_numbers<[1], [0], [0], [1], [0, 0, 1, 1], [], []>} : vector<16x32xf32>, vector<32x128xf32>, vector<16x128xf32> -> vector<16x128xf32>
    %15 = arith.mulf %11, %14 : vector<16x128xf32>
    %c0_12 = arith.constant 0 : index
    %c0_13 = arith.constant 0 : index
    %c0_14 = arith.constant 0 : index
    %16 = vector.load %arg6[%c0_12, %c0_13, %c0_14] : memref<4x128x128xf32, #tpu.memory_space<vmem>>, vector<1x128x128xf32>
    %17 = vector.shape_cast %16 : vector<1x128x128xf32> to vector<128x128xf32>
    %cst_15 = arith.constant dense<0.000000e+00> : vector<16x128xf32>
    %18 = tpu.matmul %15, %17, %cst_15 {dimension_numbers = #tpu.dot_dimension_numbers<[1], [0], [0], [1], [0, 0, 1, 1], [], []>} : vector<16x128xf32>, vector<128x128xf32>, vector<16x128xf32> -> vector<16x128xf32>
    %c1 = arith.constant 1 : index
    %c0_16 = arith.constant 0 : index
    %c0_17 = arith.constant 0 : index
    %19 = vector.load %arg4[%c1, %c0_16, %c0_17] : memref<4x32x128xf32, #tpu.memory_space<vmem>>, vector<1x32x128xf32>
    %20 = vector.shape_cast %19 : vector<1x32x128xf32> to vector<32x128xf32>
    %cst_18 = arith.constant dense<0.000000e+00> : vector<16x128xf32>
    %21 = tpu.matmul %10, %20, %cst_18 {dimension_numbers = #tpu.dot_dimension_numbers<[1], [0], [0], [1], [0, 0, 1, 1], [], []>} : vector<16x32xf32>, vector<32x128xf32>, vector<16x128xf32> -> vector<16x128xf32>
    %22 = arith.mulf %11, %21 : vector<16x128xf32>
    %c1_19 = arith.constant 1 : index
    %c0_20 = arith.constant 0 : index
    %c0_21 = arith.constant 0 : index
    %23 = vector.load %arg6[%c1_19, %c0_20, %c0_21] : memref<4x128x128xf32, #tpu.memory_space<vmem>>, vector<1x128x128xf32>
    %24 = vector.shape_cast %23 : vector<1x128x128xf32> to vector<128x128xf32>
    %cst_22 = arith.constant dense<0.000000e+00> : vector<16x128xf32>
    %25 = tpu.matmul %22, %24, %cst_22 {dimension_numbers = #tpu.dot_dimension_numbers<[1], [0], [0], [1], [0, 0, 1, 1], [], []>} : vector<16x128xf32>, vector<128x128xf32>, vector<16x128xf32> -> vector<16x128xf32>
    %26 = arith.addf %18, %25 : vector<16x128xf32>
    %c2 = arith.constant 2 : index
    %c0_23 = arith.constant 0 : index
    %c0_24 = arith.constant 0 : index
    %27 = vector.load %arg4[%c2, %c0_23, %c0_24] : memref<4x32x128xf32, #tpu.memory_space<vmem>>, vector<1x32x128xf32>
    %28 = vector.shape_cast %27 : vector<1x32x128xf32> to vector<32x128xf32>
    %cst_25 = arith.constant dense<0.000000e+00> : vector<16x128xf32>
    %29 = tpu.matmul %10, %28, %cst_25 {dimension_numbers = #tpu.dot_dimension_numbers<[1], [0], [0], [1], [0, 0, 1, 1], [], []>} : vector<16x32xf32>, vector<32x128xf32>, vector<16x128xf32> -> vector<16x128xf32>
    %30 = arith.mulf %11, %29 : vector<16x128xf32>
    %c2_26 = arith.constant 2 : index
    %c0_27 = arith.constant 0 : index
    %c0_28 = arith.constant 0 : index
    %31 = vector.load %arg6[%c2_26, %c0_27, %c0_28] : memref<4x128x128xf32, #tpu.memory_space<vmem>>, vector<1x128x128xf32>
    %32 = vector.shape_cast %31 : vector<1x128x128xf32> to vector<128x128xf32>
    %cst_29 = arith.constant dense<0.000000e+00> : vector<16x128xf32>
    %33 = tpu.matmul %30, %32, %cst_29 {dimension_numbers = #tpu.dot_dimension_numbers<[1], [0], [0], [1], [0, 0, 1, 1], [], []>} : vector<16x128xf32>, vector<128x128xf32>, vector<16x128xf32> -> vector<16x128xf32>
    %34 = arith.addf %26, %33 : vector<16x128xf32>
    %c3 = arith.constant 3 : index
    %c0_30 = arith.constant 0 : index
    %c0_31 = arith.constant 0 : index
    %35 = vector.load %arg4[%c3, %c0_30, %c0_31] : memref<4x32x128xf32, #tpu.memory_space<vmem>>, vector<1x32x128xf32>
    %36 = vector.shape_cast %35 : vector<1x32x128xf32> to vector<32x128xf32>
    %cst_32 = arith.constant dense<0.000000e+00> : vector<16x128xf32>
    %37 = tpu.matmul %10, %36, %cst_32 {dimension_numbers = #tpu.dot_dimension_numbers<[1], [0], [0], [1], [0, 0, 1, 1], [], []>} : vector<16x32xf32>, vector<32x128xf32>, vector<16x128xf32> -> vector<16x128xf32>
    %38 = arith.mulf %11, %37 : vector<16x128xf32>
    %c3_33 = arith.constant 3 : index
    %c0_34 = arith.constant 0 : index
    %c0_35 = arith.constant 0 : index
    %39 = vector.load %arg6[%c3_33, %c0_34, %c0_35] : memref<4x128x128xf32, #tpu.memory_space<vmem>>, vector<1x128x128xf32>
    %40 = vector.shape_cast %39 : vector<1x128x128xf32> to vector<128x128xf32>
    %cst_36 = arith.constant dense<0.000000e+00> : vector<16x128xf32>
    %41 = tpu.matmul %38, %40, %cst_36 {dimension_numbers = #tpu.dot_dimension_numbers<[1], [0], [0], [1], [0, 0, 1, 1], [], []>} : vector<16x128xf32>, vector<128x128xf32>, vector<16x128xf32> -> vector<16x128xf32>
    %42 = arith.addf %34, %41 : vector<16x128xf32>
    %c0_37 = arith.constant 0 : index
    %c0_38 = arith.constant 0 : index
    %43 = vector.load %arg7[%c0_37, %c0_38] : memref<1x128xf32, #tpu.memory_space<vmem>>, vector<1x128xf32>
    %44 = vector.broadcast %43 : vector<1x128xf32> to vector<16x128xf32>
    %45 = arith.addf %42, %44 : vector<16x128xf32>
    %c0_39 = arith.constant 0 : index
    %c0_40 = arith.constant 0 : index
    %46 = vector.load %arg10[%c0_39, %c0_40] : memref<16x128xf32, #tpu.memory_space<vmem>>, vector<16x128xf32>
    tpu.vector_store %arg10[%c0_39, %c0_40], %45 {strides = array<i32>} : memref<16x128xf32, #tpu.memory_space<vmem>>, vector<16x128xf32>,
    %c0_41 = arith.constant 0 : index
    %c0_42 = arith.constant 0 : index
    %47 = vector.load %arg8[%c0_41, %c0_42] : memref<128x128xf32, #tpu.memory_space<vmem>>, vector<128x128xf32>
    %cst_43 = arith.constant dense<0.000000e+00> : vector<16x128xf32>
    %48 = tpu.matmul %45, %47, %cst_43 {dimension_numbers = #tpu.dot_dimension_numbers<[1], [0], [0], [1], [0, 0, 1, 1], [], []>} : vector<16x128xf32>, vector<128x128xf32>, vector<16x128xf32> -> vector<16x128xf32>
    %c0_44 = arith.constant 0 : index
    %c0_45 = arith.constant 0 : index
    %49 = vector.load %arg9[%c0_44, %c0_45] : memref<1x128xf32, #tpu.memory_space<vmem>>, vector<1x128xf32>
    %50 = vector.broadcast %49 : vector<1x128xf32> to vector<16x128xf32>
    %51 = arith.addf %48, %50 : vector<16x128xf32>
    %c0_46 = arith.constant 0 : index
    %c0_47 = arith.constant 0 : index
    %52 = vector.load %arg11[%c0_46, %c0_47] : memref<16x128xf32, #tpu.memory_space<vmem>>, vector<16x128xf32>
    tpu.vector_store %arg11[%c0_46, %c0_47], %51 {strides = array<i32>} : memref<16x128xf32, #tpu.memory_space<vmem>>, vector<16x128xf32>,
    return
  }
  func.func @transform_0(%arg0: i32) -> (i32, i32) {
    %c0_i32 = arith.constant 0 : i32
    %c0_i32_0 = arith.constant 0 : i32
    return %arg0, %c0_i32 : i32, i32
  }
  func.func @transform_1(%arg0: i32) -> (i32, i32) {
    %c0_i32 = arith.constant 0 : i32
    %c0_i32_0 = arith.constant 0 : i32
    %c0_i32_1 = arith.constant 0 : i32
    return %c0_i32, %c0_i32_0 : i32, i32
  }
  func.func @transform_2(%arg0: i32) -> (i32, i32) {
    %c0_i32 = arith.constant 0 : i32
    %c0_i32_0 = arith.constant 0 : i32
    %c0_i32_1 = arith.constant 0 : i32
    return %c0_i32, %c0_i32_0 : i32, i32
  }
  func.func @transform_3(%arg0: i32) -> (i32, i32, i32) {
    %c0_i32 = arith.constant 0 : i32
    %c0_i32_0 = arith.constant 0 : i32
    %c0_i32_1 = arith.constant 0 : i32
    %c0_i32_2 = arith.constant 0 : i32
    return %c0_i32, %c0_i32_0, %c0_i32_1 : i32, i32, i32
  }
  func.func @transform_4(%arg0: i32) -> (i32, i32) {
    %c0_i32 = arith.constant 0 : i32
    %c0_i32_0 = arith.constant 0 : i32
    return %arg0, %c0_i32 : i32, i32
  }
  func.func @transform_5(%arg0: i32) -> (i32, i32, i32) {
    %c0_i32 = arith.constant 0 : i32
    %c0_i32_0 = arith.constant 0 : i32
    %c0_i32_1 = arith.constant 0 : i32
    %c0_i32_2 = arith.constant 0 : i32
    return %c0_i32, %c0_i32_0, %c0_i32_1 : i32, i32, i32
  }
  func.func @transform_6(%arg0: i32) -> (i32, i32) {
    %c0_i32 = arith.constant 0 : i32
    %c0_i32_0 = arith.constant 0 : i32
    %c0_i32_1 = arith.constant 0 : i32
    return %c0_i32, %c0_i32_0 : i32, i32
  }
  func.func @transform_7(%arg0: i32) -> (i32, i32) {
    %c0_i32 = arith.constant 0 : i32
    %c0_i32_0 = arith.constant 0 : i32
    %c0_i32_1 = arith.constant 0 : i32
    return %c0_i32, %c0_i32_0 : i32, i32
  }
  func.func @transform_8(%arg0: i32) -> (i32, i32) {
    %c0_i32 = arith.constant 0 : i32
    %c0_i32_0 = arith.constant 0 : i32
    %c0_i32_1 = arith.constant 0 : i32
    return %c0_i32, %c0_i32_0 : i32, i32
  }
  func.func @transform_9(%arg0: i32) -> (i32, i32) {
    %c0_i32 = arith.constant 0 : i32
    %c0_i32_0 = arith.constant 0 : i32
    return %arg0, %c0_i32 : i32, i32
  }
  func.func @transform_10(%arg0: i32) -> (i32, i32) {
    %c0_i32 = arith.constant 0 : i32
    %c0_i32_0 = arith.constant 0 : i32
    return %arg0, %c0_i32 : i32, i32
  }
}

</mosaic_0001>

<llo_original>
// kernel: visual_goal_generator_forward.3
$region0: #{visual_goal_generator_forward.3}
  #allocation0 [shape = 'u32[]', space=smem, size = 0x4, offset = 0x4, fixed_abs, tag = 'smem constant byte address 0x4 - core index']
  #allocation1 [shape = 'u32[144,128]{1,0:T(1,128)}', space=vmem, size = 0x12000, scoped, tag = 'internal scratch']
  %s0 = inlined_call_operand.vmem [shape: f32[8,4,128], index: 0, kind: input, shape index: {}]
  %s1 = inlined_call_operand.vmem [shape: f32[32,128], index: 1, kind: input, shape index: {}]
  %s2 = inlined_call_operand.vmem [shape: f32[8,4,32], index: 2, kind: output, shape index: {0}]
  %s3 = inlined_call_operand.vmem [shape: f32[4,32], index: 3, kind: output, shape index: {1}]
  %s4 = inlined_call_operand.vmem [shape: f32[4,32], index: 4, kind: output, shape index: {2}]
  %5 = xla_tuple %s2, %s3, %s4
  %s6 = sld [smem:[#allocation0]]
  $region38: #{visual_goal_generator_forward.3} parent=0
    _
  %s8 = ssub.s32 1, %s6
  %s9 = scalar_select 0, %s8, %s6
  // Predicated region
  $region2: #{visual_goal_generator_forward.3} parent=0 // pred_check
    _
  $region3: #{visual_goal_generator_forward.3} parent=0 // pred_check_branch
    %11 = sbr.rel (0) target = $region5
  $region4: #{visual_goal_generator_forward.3} parent=0 // pred_region
    _
  $region5: #{visual_goal_generator_forward.3} parent=0 // pred_fallthru
    _
  // Predicated region
  $region6: #{visual_goal_generator_forward.3} parent=0 // pred_check
    _
  $region7: #{visual_goal_generator_forward.3} parent=0 // pred_check_branch
    %13 = sbr.rel (0) target = $region9
  $region8: #{visual_goal_generator_forward.3} parent=0 // pred_region
    _
  $region9: #{visual_goal_generator_forward.3} parent=0 // pred_fallthru
    _
  %p14 = scmp.eq.s32.totalorder 0, 0
  // Predicated region
  $region10: #{visual_goal_generator_forward.3} parent=0 // pred_check
    %p15 = pneg %p14
  $region11: #{visual_goal_generator_forward.3} parent=0 // pred_check_branch
    %17 = sbr.rel (%p15) target = $region13
  $region12: #{visual_goal_generator_forward.3} parent=0 // pred_region
    %vm18 = vcmask 257024
    %19 = vst.msk [vmem:[%s3] sm:$0xf] %vm18, 0.0
    %20 = vst.msk [vmem:[%s4] sm:$0xf] %vm18, 0.0
  $region13: #{visual_goal_generator_forward.3} parent=0 // pred_fallthru
    _
  %v21 = vld [vmem:[%s1] sm:$0xff]
  %v22 = vld [vmem:[%s1 + $0x8] sm:$0xff]
  %v23 = vld [vmem:[%s1 + $0x10] sm:$0xff]
  %v24 = vld [vmem:[%s1 + $0x18] sm:$0xff]
  %v25 = vld [vmem:[%s3] sm:$0xf]
  %v26 = vld [vmem:[%s4] sm:$0xf]
  %v27 = vld [vmem:[%s0] sm:$0xf]
  %vm28 = vcmask 261120
  %v30 = vsel %vm28, %v25, 0
  %32 = vmatprep.subr.mxu0 0.0
  %33 = vmatpush1.msra.mxu0 %v21
  %34 = vmatprep.subr.mxu0 0.0
  %35 = vmatpush1.msra.mxu0 %v22
  %36 = vmatprep.subr.mxu0 0.0
  %37 = vmatpush1.msra.mxu0 %v23
  %38 = vmatprep.subr.mxu0 0.0
  %39 = vmatpush1.msra.mxu0 %v24
  %40 = vmatprep.subr.mxu0 0.0
  %41 = vmatpush1.msra.mxu0 0.0
  %42 = vmatprep.subr.mxu0 0.0
  %43 = vmatpush1.msra.mxu0 0.0
  %44 = vmatprep.subr.mxu0 0.0
  %45 = vmatpush1.msra.mxu0 0.0
  %46 = vmatprep.subr.mxu0 0.0
  %47 = vmatpush1.msra.mxu0 0.0
  %48 = vmatprep.subr.mxu0 0.0
  %49 = vmatpush1.msra.mxu0 0.0
  %50 = vmatprep.subr.mxu0 0.0
  %51 = vmatpush1.msra.mxu0 0.0
  %52 = vmatprep.subr.mxu0 0.0
  %53 = vmatpush1.msra.mxu0 0.0
  %54 = vmatprep.subr.mxu0 0.0
  %55 = vmatpush1.msra.mxu0 0.0
  %56 = vmatprep.subr.mxu0 0.0
  %57 = vmatpush1.msra.mxu0 0.0
  %58 = vmatprep.subr.mxu0 0.0
  %59 = vmatpush1.msra.mxu0 0.0
  %60 = vmatprep.subr.mxu0 0.0
  %61 = vmatpush1.msra.mxu0 0.0
  %62 = vmatprep.subr.mxu0 0.0
  %63 = vmatpush1.msra.mxu0 0.0
  %64 = vmatprep.subr.mxu0 0.0
  %65 = vmatpush1.msra.mxu0 0.0
  %66 = vmatprep.subr.mxu0 0.0
  %67 = vmatpush1.msra.mxu0 0.0
  %68 = vmatprep.subr.mxu0 0.0
  %69 = vmatpush1.msra.mxu0 0.0
  %70 = vmatprep.subr.mxu0 0.0
  %71 = vmatpush1.msra.mxu0 0.0
  %72 = vmatprep.subr.mxu0 0.0
  %73 = vmatpush1.msra.mxu0 0.0
  %74 = vmatprep.subr.mxu0 0.0
  %75 = vmatpush1.msra.mxu0 0.0
  %76 = vmatprep.subr.mxu0 0.0
  %77 = vmatpush1.msra.mxu0 0.0
  %78 = vmatprep.subr.mxu0 0.0
  %79 = vmatpush1.msra.mxu0 0.0
  %80 = vmatprep.subr.mxu0 0.0
  %81 = vmatpush1.msra.mxu0 0.0
  %82 = vmatprep.subr.mxu0 0.0
  %83 = vmatpush1.msra.mxu0 0.0
  %84 = vmatprep.subr.mxu0 0.0
  %85 = vmatpush1.msra.mxu0 0.0
  %86 = vmatprep.subr.mxu0 0.0
  %87 = vmatpush1.msra.mxu0 0.0
  %88 = vmatprep.subr.mxu0 0.0
  %89 = vmatpush1.msra.mxu0 0.0
  %90 = vmatprep.subr.mxu0 0.0
  %91 = vmatpush1.msra.mxu0 0.0
  %92 = vmatprep.subr.mxu0 0.0
  %93 = vmatpush1.msra.mxu0 0.0
  %94 = vmatprep.subr.mxu0 0.0
  %95 = vmatpush1.msra.mxu0 0.0
  %96 = vmatprep.mubr.f32.mxu0 0.0
  %97 = vmatmul.mubr.f32.gmra.mrb[0].mxu0 %v30
  %v98 = vpop.f32.mrb[0].mxu0
  %v99 = vadd.f32 0.0, %v98
  %v100 = vpop.f32.mrb[0].mxu0
  %101 = vdwg.mxu0
  %v102 = vadd.f32 %v27, %v99
  %v103 = vxor.u32 %v102, 2147483648
  %v104 = vmul.f32 %v103, 1.442695
  %v105 = vpow.pop %v104
  %v106 = vadd.f32 %v105, 1.0
  %v107 = vrcp.pop %v106
  %v108 = vmul.f32 1.0, %v107
  %v109 = vtanh.pop %v102
  %111 = vrot.lane.b32.xlu0 %v26, 32
  %v112 = vpop.permute.xlu0 %111
  %v114 = vmul.f32 %v108, %v112
  %116 = vrot.lane.b32.xlu0 %v109, 64
  %v117 = vpop.permute.xlu0 %116
  %v119 = vmul.f32 %v108, %v117
  %121 = vrot.lane.b32.xlu0 %v119, 32
  %v122 = vpop.permute.xlu0 %121
  %v124 = vadd.f32 %v114, %v122
  %v125 = vtanh.pop %v124
  %127 = vrot.lane.b32.xlu0 %v125, 64
  %v128 = vpop.permute.xlu0 %127
  %v130 = vmul.f32 %v108, %v128
  %132 = vrot.lane.b32.xlu0 %v130, 32
  %v133 = vpop.permute.xlu0 %132
  %vm135 = vcmask 257024
  %136 = vst.msk [vmem:[%s2] sm:$0xf] %vm135, %v133
  %s137 = scalar_lea.vmem %s0, 4
  %v138 = vld [vmem:[%s137] sm:$0xf]
  %v139 = vsel %vm28, %v133, 0
  %141 = vmatprep.subr.mxu0 0.0
  %142 = vmatpush1.msra.mxu0 %v21
  %143 = vmatprep.subr.mxu0 0.0
  %144 = vmatpush1.msra.mxu0 %v22
  %145 = vmatprep.subr.mxu0 0.0
  %146 = vmatpush1.msra.mxu0 %v23
  %147 = vmatprep.subr.mxu0 0.0
  %148 = vmatpush1.msra.mxu0 %v24
  %149 = vmatprep.subr.mxu0 0.0
  %150 = vmatpush1.msra.mxu0 0.0
  %151 = vmatprep.subr.mxu0 0.0
  %152 = vmatpush1.msra.mxu0 0.0
  %153 = vmatprep.subr.mxu0 0.0
  %154 = vmatpush1.msra.mxu0 0.0
  %155 = vmatprep.subr.mxu0 0.0
  %156 = vmatpush1.msra.mxu0 0.0
  %157 = vmatprep.subr.mxu0 0.0
  %158 = vmatpush1.msra.mxu0 0.0
  %159 = vmatprep.subr.mxu0 0.0
  %160 = vmatpush1.msra.mxu0 0.0
  %161 = vmatprep.subr.mxu0 0.0
  %162 = vmatpush1.msra.mxu0 0.0
  %163 = vmatprep.subr.mxu0 0.0
  %164 = vmatpush1.msra.mxu0 0.0
  %165 = vmatprep.subr.mxu0 0.0
  %166 = vmatpush1.msra.mxu0 0.0
  %167 = vmatprep.subr.mxu0 0.0
  %168 = vmatpush1.msra.mxu0 0.0
  %169 = vmatprep.subr.mxu0 0.0
  %170 = vmatpush1.msra.mxu0 0.0
  %171 = vmatprep.subr.mxu0 0.0
  %172 = vmatpush1.msra.mxu0 0.0
  %173 = vmatprep.subr.mxu0 0.0
  %174 = vmatpush1.msra.mxu0 0.0
  %175 = vmatprep.subr.mxu0 0.0
  %176 = vmatpush1.msra.mxu0 0.0
  %177 = vmatprep.subr.mxu0 0.0
  %178 = vmatpush1.msra.mxu0 0.0
  %179 = vmatprep.subr.mxu0 0.0
  %180 = vmatpush1.msra.mxu0 0.0
  %181 = vmatprep.subr.mxu0 0.0
  %182 = vmatpush1.msra.mxu0 0.0
  %183 = vmatprep.subr.mxu0 0.0
  %184 = vmatpush1.msra.mxu0 0.0
  %185 = vmatprep.subr.mxu0 0.0
  %186 = vmatpush1.msra.mxu0 0.0
  %187 = vmatprep.subr.mxu0 0.0
  %188 = vmatpush1.msra.mxu0 0.0
  %189 = vmatprep.subr.mxu0 0.0
  %190 = vmatpush1.msra.mxu0 0.0
  %191 = vmatprep.subr.mxu0 0.0
  %192 = vmatpush1.msra.mxu0 0.0
  %193 = vmatprep.subr.mxu0 0.0
  %194 = vmatpush1.msra.mxu0 0.0
  %195 = vmatprep.subr.mxu0 0.0
  %196 = vmatpush1.msra.mxu0 0.0
  %197 = vmatprep.subr.mxu0 0.0
  %198 = vmatpush1.msra.mxu0 0.0
  %199 = vmatprep.subr.mxu0 0.0
  %200 = vmatpush1.msra.mxu0 0.0
  %201 = vmatprep.subr.mxu0 0.0
  %202 = vmatpush1.msra.mxu0 0.0
  %203 = vmatprep.subr.mxu0 0.0
  %204 = vmatpush1.msra.mxu0 0.0
  %205 = vmatprep.mubr.f32.mxu0 0.0
  %206 = vmatmul.mubr.f32.gmra.mrb[0].mxu0 %v139
  %v207 = vpop.f32.mrb[0].mxu0
  %v208 = vadd.f32 0.0, %v207
  %v209 = vpop.f32.mrb[0].mxu0
  %210 = vdwg.mxu0
  %v211 = vadd.f32 %v138, %v208
  %v212 = vxor.u32 %v211, 2147483648
  %v213 = vmul.f32 %v212, 1.442695
  %v214 = vpow.pop %v213
  %v215 = vadd.f32 %v214, 1.0
  %v216 = vrcp.pop %v215
  %v217 = vmul.f32 1.0, %v216
  %v218 = vtanh.pop %v211
  %v219 = vmul.f32 %v217, %v124
  %221 = vrot.lane.b32.xlu0 %v218, 64
  %v222 = vpop.permute.xlu0 %221
  %v224 = vmul.f32 %v217, %v222
  %226 = vrot.lane.b32.xlu0 %v224, 32
  %v227 = vpop.permute.xlu0 %226
  %v229 = vadd.f32 %v219, %v227
  %v230 = vtanh.pop %v229
  %232 = vrot.lane.b32.xlu0 %v230, 64
  %v233 = vpop.permute.xlu0 %232
  %v235 = vmul.f32 %v217, %v233
  %237 = vrot.lane.b32.xlu0 %v235, 32
  %v238 = vpop.permute.xlu0 %237
  %s240 = scalar_lea.vmem %s2, 4
  %241 = vst.msk [vmem:[%s240] sm:$0xf] %vm135, %v238
  %s242 = scalar_lea.vmem %s0, 8
  %v243 = vld [vmem:[%s242] sm:$0xf]
  %v244 = vsel %vm28, %v238, 0
  %246 = vmatprep.subr.mxu0 0.0
  %247 = vmatpush1.msra.mxu0 %v21
  %248 = vmatprep.subr.mxu0 0.0
  %249 = vmatpush1.msra.mxu0 %v22
  %250 = vmatprep.subr.mxu0 0.0
  %251 = vmatpush1.msra.mxu0 %v23
  %252 = vmatprep.subr.mxu0 0.0
  %253 = vmatpush1.msra.mxu0 %v24
  %254 = vmatprep.subr.mxu0 0.0
  %255 = vmatpush1.msra.mxu0 0.0
  %256 = vmatprep.subr.mxu0 0.0
  %257 = vmatpush1.msra.mxu0 0.0
  %258 = vmatprep.subr.mxu0 0.0
  %259 = vmatpush1.msra.mxu0 0.0
  %260 = vmatprep.subr.mxu0 0.0
  %261 = vmatpush1.msra.mxu0 0.0
  %262 = vmatprep.subr.mxu0 0.0
  %263 = vmatpush1.msra.mxu0 0.0
  %264 = vmatprep.subr.mxu0 0.0
  %265 = vmatpush1.msra.mxu0 0.0
  %266 = vmatprep.subr.mxu0 0.0
  %267 = vmatpush1.msra.mxu0 0.0
  %268 = vmatprep.subr.mxu0 0.0
  %269 = vmatpush1.msra.mxu0 0.0
  %270 = vmatprep.subr.mxu0 0.0
  %271 = vmatpush1.msra.mxu0 0.0
  %272 = vmatprep.subr.mxu0 0.0
  %273 = vmatpush1.msra.mxu0 0.0
  %274 = vmatprep.subr.mxu0 0.0
  %275 = vmatpush1.msra.mxu0 0.0
  %276 = vmatprep.subr.mxu0 0.0
  %277 = vmatpush1.msra.mxu0 0.0
  %278 = vmatprep.subr.mxu0 0.0
  %279 = vmatpush1.msra.mxu0 0.0
  %280 = vmatprep.subr.mxu0 0.0
  %281 = vmatpush1.msra.mxu0 0.0
  %282 = vmatprep.subr.mxu0 0.0
  %283 = vmatpush1.msra.mxu0 0.0
  %284 = vmatprep.subr.mxu0 0.0
  %285 = vmatpush1.msra.mxu0 0.0
  %286 = vmatprep.subr.mxu0 0.0
  %287 = vmatpush1.msra.mxu0 0.0
  %288 = vmatprep.subr.mxu0 0.0
  %289 = vmatpush1.msra.mxu0 0.0
  %290 = vmatprep.subr.mxu0 0.0
  %291 = vmatpush1.msra.mxu0 0.0
  %292 = vmatprep.subr.mxu0 0.0
  %293 = vmatpush1.msra.mxu0 0.0
  %294 = vmatprep.subr.mxu0 0.0
  %295 = vmatpush1.msra.mxu0 0.0
  %296 = vmatprep.subr.mxu0 0.0
  %297 = vmatpush1.msra.mxu0 0.0
  %298 = vmatprep.subr.mxu0 0.0
  %299 = vmatpush1.msra.mxu0 0.0
  %300 = vmatprep.subr.mxu0 0.0
  %301 = vmatpush1.msra.mxu0 0.0
  %302 = vmatprep.subr.mxu0 0.0
  %303 = vmatpush1.msra.mxu0 0.0
  %304 = vmatprep.subr.mxu0 0.0
  %305 = vmatpush1.msra.mxu0 0.0
  %306 = vmatprep.subr.mxu0 0.0
  %307 = vmatpush1.msra.mxu0 0.0
  %308 = vmatprep.subr.mxu0 0.0
  %309 = vmatpush1.msra.mxu0 0.0
  %310 = vmatprep.mubr.f32.mxu0 0.0
  %311 = vmatmul.mubr.f32.gmra.mrb[0].mxu0 %v244
  %v312 = vpop.f32.mrb[0].mxu0
  %v313 = vadd.f32 0.0, %v312
  %v314 = vpop.f32.mrb[0].mxu0
  %315 = vdwg.mxu0
  %v316 = vadd.f32 %v243, %v313
  %v317 = vxor.u32 %v316, 2147483648
  %v318 = vmul.f32 %v317, 1.442695
  %v319 = vpow.pop %v318
  %v320 = vadd.f32 %v319, 1.0
  %v321 = vrcp.pop %v320
  %v322 = vmul.f32 1.0, %v321
  %v323 = vtanh.pop %v316
  %v324 = vmul.f32 %v322, %v229
  %326 = vrot.lane.b32.xlu0 %v323, 64
  %v327 = vpop.permute.xlu0 %326
  %v329 = vmul.f32 %v322, %v327
  %331 = vrot.lane.b32.xlu0 %v329, 32
  %v332 = vpop.permute.xlu0 %331
  %v334 = vadd.f32 %v324, %v332
  %v335 = vtanh.pop %v334
  %337 = vrot.lane.b32.xlu0 %v335, 64
  %v338 = vpop.permute.xlu0 %337
  %v340 = vmul.f32 %v322, %v338
  %342 = vrot.lane.b32.xlu0 %v340, 32
  %v343 = vpop.permute.xlu0 %342
  %s345 = scalar_lea.vmem %s2, 8
  %346 = vst.msk [vmem:[%s345] sm:$0xf] %vm135, %v343
  %s347 = scalar_lea.vmem %s0, 12
  %v348 = vld [vmem:[%s347] sm:$0xf]
  %v349 = vsel %vm28, %v343, 0
  %351 = vmatprep.subr.mxu0 0.0
  %352 = vmatpush1.msra.mxu0 %v21
  %353 = vmatprep.subr.mxu0 0.0
  %354 = vmatpush1.msra.mxu0 %v22
  %355 = vmatprep.subr.mxu0 0.0
  %356 = vmatpush1.msra.mxu0 %v23
  %357 = vmatprep.subr.mxu0 0.0
  %358 = vmatpush1.msra.mxu0 %v24
  %359 = vmatprep.subr.mxu0 0.0
  %360 = vmatpush1.msra.mxu0 0.0
  %361 = vmatprep.subr.mxu0 0.0
  %362 = vmatpush1.msra.mxu0 0.0
  %363 = vmatprep.subr.mxu0 0.0
  %364 = vmatpush1.msra.mxu0 0.0
  %365 = vmatprep.subr.mxu0 0.0
  %366 = vmatpush1.msra.mxu0 0.0
  %367 = vmatprep.subr.mxu0 0.0
  %368 = vmatpush1.msra.mxu0 0.0
  %369 = vmatprep.subr.mxu0 0.0
  %370 = vmatpush1.msra.mxu0 0.0
  %371 = vmatprep.subr.mxu0 0.0
  %372 = vmatpush1.msra.mxu0 0.0
  %373 = vmatprep.subr.mxu0 0.0
  %374 = vmatpush1.msra.mxu0 0.0
  %375 = vmatprep.subr.mxu0 0.0
  %376 = vmatpush1.msra.mxu0 0.0
  %377 = vmatprep.subr.mxu0 0.0
  %378 = vmatpush1.msra.mxu0 0.0
  %379 = vmatprep.subr.mxu0 0.0
  %380 = vmatpush1.msra.mxu0 0.0
  %381 = vmatprep.subr.mxu0 0.0
  %382 = vmatpush1.msra.mxu0 0.0
  %383 = vmatprep.subr.mxu0 0.0
  %384 = vmatpush1.msra.mxu0 0.0
  %385 = vmatprep.subr.mxu0 0.0
  %386 = vmatpush1.msra.mxu0 0.0
  %387 = vmatprep.subr.mxu0 0.0
  %388 = vmatpush1.msra.mxu0 0.0
  %389 = vmatprep.subr.mxu0 0.0
  %390 = vmatpush1.msra.mxu0 0.0
  %391 = vmatprep.subr.mxu0 0.0
  %392 = vmatpush1.msra.mxu0 0.0
  %393 = vmatprep.subr.mxu0 0.0
  %394 = vmatpush1.msra.mxu0 0.0
  %395 = vmatprep.subr.mxu0 0.0
  %396 = vmatpush1.msra.mxu0 0.0
  %397 = vmatprep.subr.mxu0 0.0
  %398 = vmatpush1.msra.mxu0 0.0
  %399 = vmatprep.subr.mxu0 0.0
  %400 = vmatpush1.msra.mxu0 0.0
  %401 = vmatprep.subr.mxu0 0.0
  %402 = vmatpush1.msra.mxu0 0.0
  %403 = vmatprep.subr.mxu0 0.0
  %404 = vmatpush1.msra.mxu0 0.0
  %405 = vmatprep.subr.mxu0 0.0
  %406 = vmatpush1.msra.mxu0 0.0
  %407 = vmatprep.subr.mxu0 0.0
  %408 = vmatpush1.msra.mxu0 0.0
  %409 = vmatprep.subr.mxu0 0.0
  %410 = vmatpush1.msra.mxu0 0.0
  %411 = vmatprep.subr.mxu0 0.0
  %412 = vmatpush1.msra.mxu0 0.0
  %413 = vmatprep.subr.mxu0 0.0
  %414 = vmatpush1.msra.mxu0 0.0
  %415 = vmatprep.mubr.f32.mxu0 0.0
  %416 = vmatmul.mubr.f32.gmra.mrb[0].mxu0 %v349
  %v417 = vpop.f32.mrb[0].mxu0
  %v418 = vadd.f32 0.0, %v417
  %v419 = vpop.f32.mrb[0].mxu0
  %420 = vdwg.mxu0
  %v421 = vadd.f32 %v348, %v418
  %v422 = vxor.u32 %v421, 2147483648
  %v423 = vmul.f32 %v422, 1.442695
  %v424 = vpow.pop %v423
  %v425 = vadd.f32 %v424, 1.0
  %v426 = vrcp.pop %v425
  %v427 = vmul.f32 1.0, %v426
  %v428 = vtanh.pop %v421
  %v429 = vmul.f32 %v427, %v334
  %431 = vrot.lane.b32.xlu0 %v428, 64
  %v432 = vpop.permute.xlu0 %431
  %v434 = vmul.f32 %v427, %v432
  %436 = vrot.lane.b32.xlu0 %v434, 32
  %v437 = vpop.permute.xlu0 %436
  %v439 = vadd.f32 %v429, %v437
  %v440 = vtanh.pop %v439
  %442 = vrot.lane.b32.xlu0 %v440, 64
  %v443 = vpop.permute.xlu0 %442
  %v445 = vmul.f32 %v427, %v443
  %447 = vrot.lane.b32.xlu0 %v445, 32
  %v448 = vpop.permute.xlu0 %447
  %s450 = scalar_lea.vmem %s2, 12
  %451 = vst.msk [vmem:[%s450] sm:$0xf] %vm135, %v448
  %s452 = scalar_lea.vmem %s0, 16
  %v453 = vld [vmem:[%s452] sm:$0xf]
  %v454 = vsel %vm28, %v448, 0
  %456 = vmatprep.subr.mxu0 0.0
  %457 = vmatpush1.msra.mxu0 %v21
  %458 = vmatprep.subr.mxu0 0.0
  %459 = vmatpush1.msra.mxu0 %v22
  %460 = vmatprep.subr.mxu0 0.0
  %461 = vmatpush1.msra.mxu0 %v23
  %462 = vmatprep.subr.mxu0 0.0
  %463 = vmatpush1.msra.mxu0 %v24
  %464 = vmatprep.subr.mxu0 0.0
  %465 = vmatpush1.msra.mxu0 0.0
  %466 = vmatprep.subr.mxu0 0.0
  %467 = vmatpush1.msra.mxu0 0.0
  %468 = vmatprep.subr.mxu0 0.0
  %469 = vmatpush1.msra.mxu0 0.0
  %470 = vmatprep.subr.mxu0 0.0
  %471 = vmatpush1.msra.mxu0 0.0
  %472 = vmatprep.subr.mxu0 0.0
  %473 = vmatpush1.msra.mxu0 0.0
  %474 = vmatprep.subr.mxu0 0.0
  %475 = vmatpush1.msra.mxu0 0.0
  %476 = vmatprep.subr.mxu0 0.0
  %477 = vmatpush1.msra.mxu0 0.0
  %478 = vmatprep.subr.mxu0 0.0
  %479 = vmatpush1.msra.mxu0 0.0
  %480 = vmatprep.subr.mxu0 0.0
  %481 = vmatpush1.msra.mxu0 0.0
  %482 = vmatprep.subr.mxu0 0.0
  %483 = vmatpush1.msra.mxu0 0.0
  %484 = vmatprep.subr.mxu0 0.0
  %485 = vmatpush1.msra.mxu0 0.0
  %486 = vmatprep.subr.mxu0 0.0
  %487 = vmatpush1.msra.mxu0 0.0
  %488 = vmatprep.subr.mxu0 0.0
  %489 = vmatpush1.msra.mxu0 0.0
  %490 = vmatprep.subr.mxu0 0.0
  %491 = vmatpush1.msra.mxu0 0.0
  %492 = vmatprep.subr.mxu0 0.0
  %493 = vmatpush1.msra.mxu0 0.0
  %494 = vmatprep.subr.mxu0 0.0
  %495 = vmatpush1.msra.mxu0 0.0
  %496 = vmatprep.subr.mxu0 0.0
  %497 = vmatpush1.msra.mxu0 0.0
  %498 = vmatprep.subr.mxu0 0.0
  %499 = vmatpush1.msra.mxu0 0.0
  %500 = vmatprep.subr.mxu0 0.0
  %501 = vmatpush1.msra.mxu0 0.0
  %502 = vmatprep.subr.mxu0 0.0
  %503 = vmatpush1.msra.mxu0 0.0
  %504 = vmatprep.subr.mxu0 0.0
  %505 = vmatpush1.msra.mxu0 0.0
  %506 = vmatprep.subr.mxu0 0.0
  %507 = vmatpush1.msra.mxu0 0.0
  %508 = vmatprep.subr.mxu0 0.0
  %509 = vmatpush1.msra.mxu0 0.0
  %510 = vmatprep.subr.mxu0 0.0
  %511 = vmatpush1.msra.mxu0 0.0
  %512 = vmatprep.subr.mxu0 0.0
  %513 = vmatpush1.msra.mxu0 0.0
  %514 = vmatprep.subr.mxu0 0.0
  %515 = vmatpush1.msra.mxu0 0.0
  %516 = vmatprep.subr.mxu0 0.0
  %517 = vmatpush1.msra.mxu0 0.0
  %518 = vmatprep.subr.mxu0 0.0
  %519 = vmatpush1.msra.mxu0 0.0
  %520 = vmatprep.mubr.f32.mxu0 0.0
  %521 = vmatmul.mubr.f32.gmra.mrb[0].mxu0 %v454
  %v522 = vpop.f32.mrb[0].mxu0
  %v523 = vadd.f32 0.0, %v522
  %v524 = vpop.f32.mrb[0].mxu0
  %525 = vdwg.mxu0
  %v526 = vadd.f32 %v453, %v523
  %v527 = vxor.u32 %v526, 2147483648
  %v528 = vmul.f32 %v527, 1.442695
  %v529 = vpow.pop %v528
  %v530 = vadd.f32 %v529, 1.0
  %v531 = vrcp.pop %v530
  %v532 = vmul.f32 1.0, %v531
  %v533 = vtanh.pop %v526
  %v534 = vmul.f32 %v532, %v439
  %536 = vrot.lane.b32.xlu0 %v533, 64
  %v537 = vpop.permute.xlu0 %536
  %v539 = vmul.f32 %v532, %v537
  %541 = vrot.lane.b32.xlu0 %v539, 32
  %v542 = vpop.permute.xlu0 %541
  %v544 = vadd.f32 %v534, %v542
  %v545 = vtanh.pop %v544
  %547 = vrot.lane.b32.xlu0 %v545, 64
  %v548 = vpop.permute.xlu0 %547
  %v550 = vmul.f32 %v532, %v548
  %552 = vrot.lane.b32.xlu0 %v550, 32
  %v553 = vpop.permute.xlu0 %552
  %s555 = scalar_lea.vmem %s2, 16
  %556 = vst.msk [vmem:[%s555] sm:$0xf] %vm135, %v553
  %s557 = scalar_lea.vmem %s0, 20
  %v558 = vld [vmem:[%s557] sm:$0xf]
  %v559 = vsel %vm28, %v553, 0
  %561 = vmatprep.subr.mxu0 0.0
  %562 = vmatpush1.msra.mxu0 %v21
  %563 = vmatprep.subr.mxu0 0.0
  %564 = vmatpush1.msra.mxu0 %v22
  %565 = vmatprep.subr.mxu0 0.0
  %566 = vmatpush1.msra.mxu0 %v23
  %567 = vmatprep.subr.mxu0 0.0
  %568 = vmatpush1.msra.mxu0 %v24
  %569 = vmatprep.subr.mxu0 0.0
  %570 = vmatpush1.msra.mxu0 0.0
  %571 = vmatprep.subr.mxu0 0.0
  %572 = vmatpush1.msra.mxu0 0.0
  %573 = vmatprep.subr.mxu0 0.0
  %574 = vmatpush1.msra.mxu0 0.0
  %575 = vmatprep.subr.mxu0 0.0
  %576 = vmatpush1.msra.mxu0 0.0
  %577 = vmatprep.subr.mxu0 0.0
  %578 = vmatpush1.msra.mxu0 0.0
  %579 = vmatprep.subr.mxu0 0.0
  %580 = vmatpush1.msra.mxu0 0.0
  %581 = vmatprep.subr.mxu0 0.0
  %582 = vmatpush1.msra.mxu0 0.0
  %583 = vmatprep.subr.mxu0 0.0
  %584 = vmatpush1.msra.mxu0 0.0
  %585 = vmatprep.subr.mxu0 0.0
  %586 = vmatpush1.msra.mxu0 0.0
  %587 = vmatprep.subr.mxu0 0.0
  %588 = vmatpush1.msra.mxu0 0.0
  %589 = vmatprep.subr.mxu0 0.0
  %590 = vmatpush1.msra.mxu0 0.0
  %591 = vmatprep.subr.mxu0 0.0
  %592 = vmatpush1.msra.mxu0 0.0
  %593 = vmatprep.subr.mxu0 0.0
  %594 = vmatpush1.msra.mxu0 0.0
  %595 = vmatprep.subr.mxu0 0.0
  %596 = vmatpush1.msra.mxu0 0.0
  %597 = vmatprep.subr.mxu0 0.0
  %598 = vmatpush1.msra.mxu0 0.0
  %599 = vmatprep.subr.mxu0 0.0
  %600 = vmatpush1.msra.mxu0 0.0
  %601 = vmatprep.subr.mxu0 0.0
  %602 = vmatpush1.msra.mxu0 0.0
  %603 = vmatprep.subr.mxu0 0.0
  %604 = vmatpush1.msra.mxu0 0.0
  %605 = vmatprep.subr.mxu0 0.0
  %606 = vmatpush1.msra.mxu0 0.0
  %607 = vmatprep.subr.mxu0 0.0
  %608 = vmatpush1.msra.mxu0 0.0
  %609 = vmatprep.subr.mxu0 0.0
  %610 = vmatpush1.msra.mxu0 0.0
  %611 = vmatprep.subr.mxu0 0.0
  %612 = vmatpush1.msra.mxu0 0.0
  %613 = vmatprep.subr.mxu0 0.0
  %614 = vmatpush1.msra.mxu0 0.0
  %615 = vmatprep.subr.mxu0 0.0
  %616 = vmatpush1.msra.mxu0 0.0
  %617 = vmatprep.subr.mxu0 0.0
  %618 = vmatpush1.msra.mxu0 0.0
  %619 = vmatprep.subr.mxu0 0.0
  %620 = vmatpush1.msra.mxu0 0.0
  %621 = vmatprep.subr.mxu0 0.0
  %622 = vmatpush1.msra.mxu0 0.0
  %623 = vmatprep.subr.mxu0 0.0
  %624 = vmatpush1.msra.mxu0 0.0
  %625 = vmatprep.mubr.f32.mxu0 0.0
  %626 = vmatmul.mubr.f32.gmra.mrb[0].mxu0 %v559
  %v627 = vpop.f32.mrb[0].mxu0
  %v628 = vadd.f32 0.0, %v627
  %v629 = vpop.f32.mrb[0].mxu0
  %630 = vdwg.mxu0
  %v631 = vadd.f32 %v558, %v628
  %v632 = vxor.u32 %v631, 2147483648
  %v633 = vmul.f32 %v632, 1.442695
  %v634 = vpow.pop %v633
  %v635 = vadd.f32 %v634, 1.0
  %v636 = vrcp.pop %v635
  %v637 = vmul.f32 1.0, %v636
  %v638 = vtanh.pop %v631
  %v639 = vmul.f32 %v637, %v544
  %641 = vrot.lane.b32.xlu0 %v638, 64
  %v642 = vpop.permute.xlu0 %641
  %v644 = vmul.f32 %v637, %v642
  %646 = vrot.lane.b32.xlu0 %v644, 32
  %v647 = vpop.permute.xlu0 %646
  %v649 = vadd.f32 %v639, %v647
  %v650 = vtanh.pop %v649
  %652 = vrot.lane.b32.xlu0 %v650, 64
  %v653 = vpop.permute.xlu0 %652
  %v655 = vmul.f32 %v637, %v653
  %657 = vrot.lane.b32.xlu0 %v655, 32
  %v658 = vpop.permute.xlu0 %657
  %s660 = scalar_lea.vmem %s2, 20
  %661 = vst.msk [vmem:[%s660] sm:$0xf] %vm135, %v658
  %s662 = scalar_lea.vmem %s0, 24
  %v663 = vld [vmem:[%s662] sm:$0xf]
  %v664 = vsel %vm28, %v658, 0
  %666 = vmatprep.subr.mxu0 0.0
  %667 = vmatpush1.msra.mxu0 %v21
  %668 = vmatprep.subr.mxu0 0.0
  %669 = vmatpush1.msra.mxu0 %v22
  %670 = vmatprep.subr.mxu0 0.0
  %671 = vmatpush1.msra.mxu0 %v23
  %672 = vmatprep.subr.mxu0 0.0
  %673 = vmatpush1.msra.mxu0 %v24
  %674 = vmatprep.subr.mxu0 0.0
  %675 = vmatpush1.msra.mxu0 0.0
  %676 = vmatprep.subr.mxu0 0.0
  %677 = vmatpush1.msra.mxu0 0.0
  %678 = vmatprep.subr.mxu0 0.0
  %679 = vmatpush1.msra.mxu0 0.0
  %680 = vmatprep.subr.mxu0 0.0
  %681 = vmatpush1.msra.mxu0 0.0
  %682 = vmatprep.subr.mxu0 0.0
  %683 = vmatpush1.msra.mxu0 0.0
  %684 = vmatprep.subr.mxu0 0.0
  %685 = vmatpush1.msra.mxu0 0.0
  %686 = vmatprep.subr.mxu0 0.0
  %687 = vmatpush1.msra.mxu0 0.0
  %688 = vmatprep.subr.mxu0 0.0
  %689 = vmatpush1.msra.mxu0 0.0
  %690 = vmatprep.subr.mxu0 0.0
  %691 = vmatpush1.msra.mxu0 0.0
  %692 = vmatprep.subr.mxu0 0.0
  %693 = vmatpush1.msra.mxu0 0.0
  %694 = vmatprep.subr.mxu0 0.0
  %695 = vmatpush1.msra.mxu0 0.0
  %696 = vmatprep.subr.mxu0 0.0
  %697 = vmatpush1.msra.mxu0 0.0
  %698 = vmatprep.subr.mxu0 0.0
  %699 = vmatpush1.msra.mxu0 0.0
  %700 = vmatprep.subr.mxu0 0.0
  %701 = vmatpush1.msra.mxu0 0.0
  %702 = vmatprep.subr.mxu0 0.0
  %703 = vmatpush1.msra.mxu0 0.0
  %704 = vmatprep.subr.mxu0 0.0
  %705 = vmatpush1.msra.mxu0 0.0
  %706 = vmatprep.subr.mxu0 0.0
  %707 = vmatpush1.msra.mxu0 0.0
  %708 = vmatprep.subr.mxu0 0.0
  %709 = vmatpush1.msra.mxu0 0.0
  %710 = vmatprep.subr.mxu0 0.0
  %711 = vmatpush1.msra.mxu0 0.0
  %712 = vmatprep.subr.mxu0 0.0
  %713 = vmatpush1.msra.mxu0 0.0
  %714 = vmatprep.subr.mxu0 0.0
  %715 = vmatpush1.msra.mxu0 0.0
  %716 = vmatprep.subr.mxu0 0.0
  %717 = vmatpush1.msra.mxu0 0.0
  %718 = vmatprep.subr.mxu0 0.0
  %719 = vmatpush1.msra.mxu0 0.0
  %720 = vmatprep.subr.mxu0 0.0
  %721 = vmatpush1.msra.mxu0 0.0
  %722 = vmatprep.subr.mxu0 0.0
  %723 = vmatpush1.msra.mxu0 0.0
  %724 = vmatprep.subr.mxu0 0.0
  %725 = vmatpush1.msra.mxu0 0.0
  %726 = vmatprep.subr.mxu0 0.0
  %727 = vmatpush1.msra.mxu0 0.0
  %728 = vmatprep.subr.mxu0 0.0
  %729 = vmatpush1.msra.mxu0 0.0
  %730 = vmatprep.mubr.f32.mxu0 0.0
  %731 = vmatmul.mubr.f32.gmra.mrb[0].mxu0 %v664
  %v732 = vpop.f32.mrb[0].mxu0
  %v733 = vadd.f32 0.0, %v732
  %v734 = vpop.f32.mrb[0].mxu0
  %735 = vdwg.mxu0
  %v736 = vadd.f32 %v663, %v733
  %v737 = vxor.u32 %v736, 2147483648
  %v738 = vmul.f32 %v737, 1.442695
  %v739 = vpow.pop %v738
  %v740 = vadd.f32 %v739, 1.0
  %v741 = vrcp.pop %v740
  %v742 = vmul.f32 1.0, %v741
  %v743 = vtanh.pop %v736
  %v744 = vmul.f32 %v742, %v649
  %746 = vrot.lane.b32.xlu0 %v743, 64
  %v747 = vpop.permute.xlu0 %746
  %v749 = vmul.f32 %v742, %v747
  %751 = vrot.lane.b32.xlu0 %v749, 32
  %v752 = vpop.permute.xlu0 %751
  %v754 = vadd.f32 %v744, %v752
  %v755 = vtanh.pop %v754
  %757 = vrot.lane.b32.xlu0 %v755, 64
  %v758 = vpop.permute.xlu0 %757
  %v760 = vmul.f32 %v742, %v758
  %762 = vrot.lane.b32.xlu0 %v760, 32
  %v763 = vpop.permute.xlu0 %762
  %s765 = scalar_lea.vmem %s2, 24
  %766 = vst.msk [vmem:[%s765] sm:$0xf] %vm135, %v763
  %s767 = scalar_lea.vmem %s0, 28
  %v768 = vld [vmem:[%s767] sm:$0xf]
  %v769 = vsel %vm28, %v763, 0
  %771 = vmatprep.subr.mxu0 0.0
  %772 = vmatpush1.msra.mxu0 %v21
  %773 = vmatprep.subr.mxu0 0.0
  %774 = vmatpush1.msra.mxu0 %v22
  %775 = vmatprep.subr.mxu0 0.0
  %776 = vmatpush1.msra.mxu0 %v23
  %777 = vmatprep.subr.mxu0 0.0
  %778 = vmatpush1.msra.mxu0 %v24
  %779 = vmatprep.subr.mxu0 0.0
  %780 = vmatpush1.msra.mxu0 0.0
  %781 = vmatprep.subr.mxu0 0.0
  %782 = vmatpush1.msra.mxu0 0.0
  %783 = vmatprep.subr.mxu0 0.0
  %784 = vmatpush1.msra.mxu0 0.0
  %785 = vmatprep.subr.mxu0 0.0
  %786 = vmatpush1.msra.mxu0 0.0
  %787 = vmatprep.subr.mxu0 0.0
  %788 = vmatpush1.msra.mxu0 0.0
  %789 = vmatprep.subr.mxu0 0.0
  %790 = vmatpush1.msra.mxu0 0.0
  %791 = vmatprep.subr.mxu0 0.0
  %792 = vmatpush1.msra.mxu0 0.0
  %793 = vmatprep.subr.mxu0 0.0
  %794 = vmatpush1.msra.mxu0 0.0
  %795 = vmatprep.subr.mxu0 0.0
  %796 = vmatpush1.msra.mxu0 0.0
  %797 = vmatprep.subr.mxu0 0.0
  %798 = vmatpush1.msra.mxu0 0.0
  %799 = vmatprep.subr.mxu0 0.0
  %800 = vmatpush1.msra.mxu0 0.0
  %801 = vmatprep.subr.mxu0 0.0
  %802 = vmatpush1.msra.mxu0 0.0
  %803 = vmatprep.subr.mxu0 0.0
  %804 = vmatpush1.msra.mxu0 0.0
  %805 = vmatprep.subr.mxu0 0.0
  %806 = vmatpush1.msra.mxu0 0.0
  %807 = vmatprep.subr.mxu0 0.0
  %808 = vmatpush1.msra.mxu0 0.0
  %809 = vmatprep.subr.mxu0 0.0
  %810 = vmatpush1.msra.mxu0 0.0
  %811 = vmatprep.subr.mxu0 0.0
  %812 = vmatpush1.msra.mxu0 0.0
  %813 = vmatprep.subr.mxu0 0.0
  %814 = vmatpush1.msra.mxu0 0.0
  %815 = vmatprep.subr.mxu0 0.0
  %816 = vmatpush1.msra.mxu0 0.0
  %817 = vmatprep.subr.mxu0 0.0
  %818 = vmatpush1.msra.mxu0 0.0
  %819 = vmatprep.subr.mxu0 0.0
  %820 = vmatpush1.msra.mxu0 0.0
  %821 = vmatprep.subr.mxu0 0.0
  %822 = vmatpush1.msra.mxu0 0.0
  %823 = vmatprep.subr.mxu0 0.0
  %824 = vmatpush1.msra.mxu0 0.0
  %825 = vmatprep.subr.mxu0 0.0
  %826 = vmatpush1.msra.mxu0 0.0
  %827 = vmatprep.subr.mxu0 0.0
  %828 = vmatpush1.msra.mxu0 0.0
  %829 = vmatprep.subr.mxu0 0.0
  %830 = vmatpush1.msra.mxu0 0.0
  %831 = vmatprep.subr.mxu0 0.0
  %832 = vmatpush1.msra.mxu0 0.0
  %833 = vmatprep.subr.mxu0 0.0
  %834 = vmatpush1.msra.mxu0 0.0
  %835 = vmatprep.mubr.f32.mxu0 0.0
  %836 = vmatmul.mubr.f32.gmra.mrb[0].mxu0 %v769
  %v837 = vpop.f32.mrb[0].mxu0
  %v838 = vadd.f32 0.0, %v837
  %v839 = vpop.f32.mrb[0].mxu0
  %840 = vdwg.mxu0
  %v841 = vadd.f32 %v768, %v838
  %v842 = vxor.u32 %v841, 2147483648
  %v843 = vmul.f32 %v842, 1.442695
  %v844 = vpow.pop %v843
  %v845 = vadd.f32 %v844, 1.0
  %v846 = vrcp.pop %v845
  %v847 = vmul.f32 1.0, %v846
  %v848 = vtanh.pop %v841
  %v849 = vmul.f32 %v847, %v754
  %851 = vrot.lane.b32.xlu0 %v848, 64
  %v852 = vpop.permute.xlu0 %851
  %v854 = vmul.f32 %v847, %v852
  %856 = vrot.lane.b32.xlu0 %v854, 32
  %v857 = vpop.permute.xlu0 %856
  %v859 = vadd.f32 %v849, %v857
  %v860 = vtanh.pop %v859
  %862 = vrot.lane.b32.xlu0 %v860, 64
  %v863 = vpop.permute.xlu0 %862
  %v865 = vmul.f32 %v847, %v863
  %867 = vrot.lane.b32.xlu0 %v865, 32
  %v868 = vpop.permute.xlu0 %867
  %s870 = scalar_lea.vmem %s2, 28
  %871 = vst.msk [vmem:[%s870] sm:$0xf] %vm135, %v868
  %872 = vst.msk [vmem:[%s3] sm:$0xf] %vm135, %v868
  %874 = vrot.lane.b32.xlu0 %v859, 96
  %v875 = vpop.permute.xlu0 %874
  %877 = vst.msk [vmem:[%s4] sm:$0xf] %vm135, %v875
  // Predicated region
  $region14: #{visual_goal_generator_forward.3} parent=0 // pred_check
    _
  $region15: #{visual_goal_generator_forward.3} parent=0 // pred_check_branch
    %879 = sbr.rel (0) target = $region17
  $region16: #{visual_goal_generator_forward.3} parent=0 // pred_region
    _
  $region17: #{visual_goal_generator_forward.3} parent=0 // pred_fallthru
    _
  // Predicated region
  $region18: #{visual_goal_generator_forward.3} parent=0 // pred_check
    _
  $region19: #{visual_goal_generator_forward.3} parent=0 // pred_check_branch
    %881 = sbr.rel (0) target = $region21
  $region20: #{visual_goal_generator_forward.3} parent=0 // pred_region
    _
  $region21: #{visual_goal_generator_forward.3} parent=0 // pred_fallthru
    _
  // Predicated region
  $region22: #{visual_goal_generator_forward.3} parent=0 // pred_check
    _
  $region23: #{visual_goal_generator_forward.3} parent=0 // pred_check_branch
    %883 = sbr.rel (0) target = $region25
  $region24: #{visual_goal_generator_forward.3} parent=0 // pred_region
    _
  $region25: #{visual_goal_generator_forward.3} parent=0 // pred_fallthru
    _
  // Predicated region
  $region26: #{visual_goal_generator_forward.3} parent=0 // pred_check
    _
  $region27: #{visual_goal_generator_forward.3} parent=0 // pred_check_branch
    %885 = sbr.rel (0) target = $region29
  $region28: #{visual_goal_generator_forward.3} parent=0 // pred_region
    _
  $region29: #{visual_goal_generator_forward.3} parent=0 // pred_fallthru
    _
  // Predicated region
  $region30: #{visual_goal_generator_forward.3} parent=0 // pred_check
    _
  $region31: #{visual_goal_generator_forward.3} parent=0 // pred_check_branch
    %887 = sbr.rel (0) target = $region33
  $region32: #{visual_goal_generator_forward.3} parent=0 // pred_region
    _
  $region33: #{visual_goal_generator_forward.3} parent=0 // pred_fallthru
    _
  // Predicated region
  $region34: #{visual_goal_generator_forward.3} parent=0 // pred_check
    _
  $region35: #{visual_goal_generator_forward.3} parent=0 // pred_check_branch
    %889 = sbr.rel (0) target = $region37
  $region36: #{visual_goal_generator_forward.3} parent=0 // pred_region
    _
  $region37: #{visual_goal_generator_forward.3} parent=0 // pred_fallthru
    _

// kernel: visual_goal_generator_forward.2
$region0: #{visual_goal_generator_forward.2}
  #allocation0 [shape = 'u32[]', space=smem, size = 0x4, offset = 0x4, fixed_abs, tag = 'smem constant byte address 0x4 - core index']
  #allocation1 [shape = 'u32[144,128]{1,0:T(1,128)}', space=vmem, size = 0x12000, scoped, tag = 'internal scratch']
  %s0 = inlined_call_operand.vmem [shape: f32[32,16], index: 0, kind: input, shape index: {}]
  %s1 = inlined_call_operand.vmem [shape: f32[16,32], index: 1, kind: input, shape index: {}]
  %s2 = inlined_call_operand.vmem [shape: f32[1,32], index: 2, kind: input, shape index: {}]
  %s3 = inlined_call_operand.vmem [shape: f32[4,32,128], index: 3, kind: input, shape index: {}]
  %s4 = inlined_call_operand.vmem [shape: f32[32,128], index: 4, kind: input, shape index: {}]
  %s5 = inlined_call_operand.vmem [shape: f32[4,128,128], index: 5, kind: input, shape index: {}]
  %s6 = inlined_call_operand.vmem [shape: f32[1,128], index: 6, kind: input, shape index: {}]
  %s7 = inlined_call_operand.vmem [shape: f32[128,128], index: 7, kind: input, shape index: {}]
  %s8 = inlined_call_operand.vmem [shape: f32[1,128], index: 8, kind: input, shape index: {}]
  %s9 = inlined_call_operand.vmem [shape: f32[32,128], index: 9, kind: output, shape index: {0}]
  %s10 = inlined_call_operand.vmem [shape: f32[32,128], index: 10, kind: output, shape index: {1}]
  %11 = xla_tuple %s9, %s10
  %s12 = sld [smem:[#allocation0]]
  $region77: #{visual_goal_generator_forward.2} parent=0
    _
  %s14 = ssub.s32 1, %s12
  %s15 = scalar_select 0, %s14, %s12
  loop: start=0, step=1, limit=4
  $region2: #{visual_goal_generator_forward.2} parent=0 // loop_pre_header
    _
  $region3: #{visual_goal_generator_forward.2} parent=0 // loop_header
    %s17 = sphi 0, %s21
    %p18 = scmp.ge.s32.totalorder %s17, 4
    %s27 = sphi 0, %s29
    %s30 = sphi 0, %s27
    %s31 = sphi 0, %s30
    %s47 = sphi 0, %s31
    %s51 = sphi 0, %s51
    %s53 = sphi 0, %s51
    %s54 = sphi 0, %s53
    %s68 = sphi 0, %s54
    %s72 = sphi 0, %s72
    %s74 = sphi 0, %s72
    %s75 = sphi 0, %s74
    %s89 = sphi 0, %s75
    %s93 = sphi 0, %s93
    %s95 = sphi 0, %s93
    %s96 = sphi 0, %s95
    %s110 = sphi 0, %s96
    %s116 = sphi 0, %s118
    %s119 = sphi 0, %s116
    %s120 = sphi 0, %s119
    %s136 = sphi 0, %s120
    %s140 = sphi 0, %s140
    %s142 = sphi 0, %s140
    %s143 = sphi 0, %s142
    %s157 = sphi 0, %s143
    %s161 = sphi 0, %s161
    %s163 = sphi 0, %s161
    %s164 = sphi 0, %s163
    %s178 = sphi 0, %s164
    %s182 = sphi 0, %s182
    %s184 = sphi 0, %s182
    %s185 = sphi 0, %s184
    %s199 = sphi 0, %s185
    %s203 = sphi 0, %s203
    %s205 = sphi 0, %s203
    %s206 = sphi 0, %s205
    %s220 = sphi 0, %s206
    %s226 = sphi 0, %s228
    %s229 = sphi 0, %s226
    %s230 = sphi 0, %s229
    %s246 = sphi 0, %s230
    %s252 = sphi 0, %s254
    %s255 = sphi 0, %s252
    %s256 = sphi 0, %s255
    %s272 = sphi 0, %s256
  $region4: #{visual_goal_generator_forward.2} parent=0 // loop_header_branch
    %20 = sbr.rel (%p18) target = $region8
  $region5: #{visual_goal_generator_forward.2} parent=0 // loop_body
    %s22 = ssub.s32 %s17, 1
    %s23 = ssub.s32 %s17, 2
    %s24 = sadd.s32 %s17, 1
    %s25 = ssub.s32 %s17, %s24
    %p26 = scmp.eq.s32.totalorder %s25, 0
    %s28 = sadd.s32 %s27, 1
    %s29 = scalar_select %p26, %s27, %s28
    %p32 = pneg %p26
    %p33 = scmp.eq.s32.totalorder %s17, 1
    %p34 = por %p32, %p33
    %p35 = scmp.ne.s32.totalorder %s27, %s30
    %p36 = scmp.eq.s32.totalorder %s17, 0
    %p37 = por %p35, %p36
    %p38 = scmp.ne.s32.totalorder %s27, %s30
    %p39 = scmp.eq.s32.totalorder %s22, 1
    %p40 = por %p38, %p39
    %p41 = scmp.ne.s32.totalorder %s30, %s31
    %p42 = scmp.eq.s32.totalorder %s22, 0
    %p43 = por %p41, %p42
    %p44 = scmp.ne.s32.totalorder %s30, %s31
    %p45 = scmp.eq.s32.totalorder %s23, 1
    %p46 = por %p44, %p45
    %p48 = scmp.ne.s32.totalorder %s31, %s47
    %p49 = scmp.eq.s32.totalorder %s23, 0
    %p50 = por %p48, %p49
    %s52 = sadd.s32 %s51, 1
    %p55 = scmp.eq.s32.totalorder %s17, 1
    %p56 = scmp.ne.s32.totalorder %s51, %s53
    %p57 = scmp.eq.s32.totalorder %s17, 0
    %p58 = por %p56, %p57
    %p59 = scmp.ne.s32.totalorder %s51, %s53
    %p60 = scmp.eq.s32.totalorder %s22, 1
    %p61 = por %p59, %p60
    %p62 = scmp.ne.s32.totalorder %s53, %s54
    %p63 = scmp.eq.s32.totalorder %s22, 0
    %p64 = por %p62, %p63
    %p65 = scmp.ne.s32.totalorder %s53, %s54
    %p66 = scmp.eq.s32.totalorder %s23, 1
    %p67 = por %p65, %p66
    %p69 = scmp.ne.s32.totalorder %s54, %s68
    %p70 = scmp.eq.s32.totalorder %s23, 0
    %p71 = por %p69, %p70
    %s73 = sadd.s32 %s72, 1
    %p76 = scmp.eq.s32.totalorder %s17, 1
    %p77 = scmp.ne.s32.totalorder %s72, %s74
    %p78 = scmp.eq.s32.totalorder %s17, 0
    %p79 = por %p77, %p78
    %p80 = scmp.ne.s32.totalorder %s72, %s74
    %p81 = scmp.eq.s32.totalorder %s22, 1
    %p82 = por %p80, %p81
    %p83 = scmp.ne.s32.totalorder %s74, %s75
    %p84 = scmp.eq.s32.totalorder %s22, 0
    %p85 = por %p83, %p84
    %p86 = scmp.ne.s32.totalorder %s74, %s75
    %p87 = scmp.eq.s32.totalorder %s23, 1
    %p88 = por %p86, %p87
    %p90 = scmp.ne.s32.totalorder %s75, %s89
    %p91 = scmp.eq.s32.totalorder %s23, 0
    %p92 = por %p90, %p91
    %s94 = sadd.s32 %s93, 1
    %p97 = scmp.eq.s32.totalorder %s17, 1
    %p98 = scmp.ne.s32.totalorder %s93, %s95
    %p99 = scmp.eq.s32.totalorder %s17, 0
    %p100 = por %p98, %p99
    %p101 = scmp.ne.s32.totalorder %s93, %s95
    %p102 = scmp.eq.s32.totalorder %s22, 1
    %p103 = por %p101, %p102
    %p104 = scmp.ne.s32.totalorder %s95, %s96
    %p105 = scmp.eq.s32.totalorder %s22, 0
    %p106 = por %p104, %p105
    %p107 = scmp.ne.s32.totalorder %s95, %s96
    %p108 = scmp.eq.s32.totalorder %s23, 1
    %p109 = por %p107, %p108
    %p111 = scmp.ne.s32.totalorder %s96, %s110
    %p112 = scmp.eq.s32.totalorder %s23, 0
    %p113 = por %p111, %p112
    %s114 = ssub.s32 %s17, %s24
    %p115 = scmp.eq.s32.totalorder %s114, 0
    %s117 = sadd.s32 %s116, 1
    %s118 = scalar_select %p115, %s116, %s117
    %p121 = pneg %p115
    %p122 = scmp.eq.s32.totalorder %s17, 1
    %p123 = por %p121, %p122
    %p124 = scmp.ne.s32.totalorder %s116, %s119
    %p125 = scmp.eq.s32.totalorder %s17, 0
    %p126 = por %p124, %p125
    %p127 = scmp.ne.s32.totalorder %s116, %s119
    %p128 = scmp.eq.s32.totalorder %s22, 1
    %p129 = por %p127, %p128
    %p130 = scmp.ne.s32.totalorder %s119, %s120
    %p131 = scmp.eq.s32.totalorder %s22, 0
    %p132 = por %p130, %p131
    %p133 = scmp.ne.s32.totalorder %s119, %s120
    %p134 = scmp.eq.s32.totalorder %s23, 1
    %p135 = por %p133, %p134
    %p137 = scmp.ne.s32.totalorder %s120, %s136
    %p138 = scmp.eq.s32.totalorder %s23, 0
    %p139 = por %p137, %p138
    %s141 = sadd.s32 %s140, 1
    %p144 = scmp.eq.s32.totalorder %s17, 1
    %p145 = scmp.ne.s32.totalorder %s140, %s142
    %p146 = scmp.eq.s32.totalorder %s17, 0
    %p147 = por %p145, %p146
    %p148 = scmp.ne.s32.totalorder %s140, %s142
    %p149 = scmp.eq.s32.totalorder %s22, 1
    %p150 = por %p148, %p149
    %p151 = scmp.ne.s32.totalorder %s142, %s143
    %p152 = scmp.eq.s32.totalorder %s22, 0
    %p153 = por %p151, %p152
    %p154 = scmp.ne.s32.totalorder %s142, %s143
    %p155 = scmp.eq.s32.totalorder %s23, 1
    %p156 = por %p154, %p155
    %p158 = scmp.ne.s32.totalorder %s143, %s157
    %p159 = scmp.eq.s32.totalorder %s23, 0
    %p160 = por %p158, %p159
    %s162 = sadd.s32 %s161, 1
    %p165 = scmp.eq.s32.totalorder %s17, 1
    %p166 = scmp.ne.s32.totalorder %s161, %s163
    %p167 = scmp.eq.s32.totalorder %s17, 0
    %p168 = por %p166, %p167
    %p169 = scmp.ne.s32.totalorder %s161, %s163
    %p170 = scmp.eq.s32.totalorder %s22, 1
    %p171 = por %p169, %p170
    %p172 = scmp.ne.s32.totalorder %s163, %s164
    %p173 = scmp.eq.s32.totalorder %s22, 0
    %p174 = por %p172, %p173
    %p175 = scmp.ne.s32.totalorder %s163, %s164
    %p176 = scmp.eq.s32.totalorder %s23, 1
    %p177 = por %p175, %p176
    %p179 = scmp.ne.s32.totalorder %s164, %s178
    %p180 = scmp.eq.s32.totalorder %s23, 0
    %p181 = por %p179, %p180
    %s183 = sadd.s32 %s182, 1
    %p186 = scmp.eq.s32.totalorder %s17, 1
    %p187 = scmp.ne.s32.totalorder %s182, %s184
    %p188 = scmp.eq.s32.totalorder %s17, 0
    %p189 = por %p187, %p188
    %p190 = scmp.ne.s32.totalorder %s182, %s184
    %p191 = scmp.eq.s32.totalorder %s22, 1
    %p192 = por %p190, %p191
    %p193 = scmp.ne.s32.totalorder %s184, %s185
    %p194 = scmp.eq.s32.totalorder %s22, 0
    %p195 = por %p193, %p194
    %p196 = scmp.ne.s32.totalorder %s184, %s185
    %p197 = scmp.eq.s32.totalorder %s23, 1
    %p198 = por %p196, %p197
    %p200 = scmp.ne.s32.totalorder %s185, %s199
    %p201 = scmp.eq.s32.totalorder %s23, 0
    %p202 = por %p200, %p201
    %s204 = sadd.s32 %s203, 1
    %p207 = scmp.eq.s32.totalorder %s17, 1
    %p208 = scmp.ne.s32.totalorder %s203, %s205
    %p209 = scmp.eq.s32.totalorder %s17, 0
    %p210 = por %p208, %p209
    %p211 = scmp.ne.s32.totalorder %s203, %s205
    %p212 = scmp.eq.s32.totalorder %s22, 1
    %p213 = por %p211, %p212
    %p214 = scmp.ne.s32.totalorder %s205, %s206
    %p215 = scmp.eq.s32.totalorder %s22, 0
    %p216 = por %p214, %p215
    %p217 = scmp.ne.s32.totalorder %s205, %s206
    %p218 = scmp.eq.s32.totalorder %s23, 1
    %p219 = por %p217, %p218
    %p221 = scmp.ne.s32.totalorder %s206, %s220
    %p222 = scmp.eq.s32.totalorder %s23, 0
    %p223 = por %p221, %p222
    %s224 = ssub.s32 %s17, %s24
    %p225 = scmp.eq.s32.totalorder %s224, 0
    %s227 = sadd.s32 %s226, 1
    %s228 = scalar_select %p225, %s226, %s227
    %p231 = pneg %p225
    %p232 = scmp.eq.s32.totalorder %s17, 1
    %p233 = por %p231, %p232
    %p234 = scmp.ne.s32.totalorder %s226, %s229
    %p235 = scmp.eq.s32.totalorder %s17, 0
    %p236 = por %p234, %p235
    %p237 = scmp.ne.s32.totalorder %s226, %s229
    %p238 = scmp.eq.s32.totalorder %s22, 1
    %p239 = por %p237, %p238
    %p240 = scmp.ne.s32.totalorder %s229, %s230
    %p241 = scmp.eq.s32.totalorder %s22, 0
    %p242 = por %p240, %p241
    %p243 = scmp.ne.s32.totalorder %s229, %s230
    %p244 = scmp.eq.s32.totalorder %s23, 1
    %p245 = por %p243, %p244
    %p247 = scmp.ne.s32.totalorder %s230, %s246
    %p248 = scmp.eq.s32.totalorder %s23, 0
    %p249 = por %p247, %p248
    %s250 = ssub.s32 %s17, %s24
    %p251 = scmp.eq.s32.totalorder %s250, 0
    %s253 = sadd.s32 %s252, 1
    %s254 = scalar_select %p251, %s252, %s253
    %p257 = pneg %p251
    %p258 = scmp.eq.s32.totalorder %s17, 1
    %p259 = por %p257, %p258
    %p260 = scmp.ne.s32.totalorder %s252, %s255
    %p261 = scmp.eq.s32.totalorder %s17, 0
    %p262 = por %p260, %p261
    %p263 = scmp.ne.s32.totalorder %s252, %s255
    %p264 = scmp.eq.s32.totalorder %s22, 1
    %p265 = por %p263, %p264
    %p266 = scmp.ne.s32.totalorder %s255, %s256
    %p267 = scmp.eq.s32.totalorder %s22, 0
    %p268 = por %p266, %p267
    %p269 = scmp.ne.s32.totalorder %s255, %s256
    %p270 = scmp.eq.s32.totalorder %s23, 1
    %p271 = por %p269, %p270
    %p273 = scmp.ne.s32.totalorder %s256, %s272
    %p274 = scmp.eq.s32.totalorder %s23, 0
    %p275 = por %p273, %p274
    %p276 = scmp.le.s32.totalorder 1, %s17
    %p277 = scmp.lt.s32.totalorder %s17, 3
    %p278 = pnand %p276, %p277
    %p279 = pneg %p278
    // Predicated region
    $region9: #{visual_goal_generator_forward.2} parent=5 // pred_check
      _
    $region10: #{visual_goal_generator_forward.2} parent=5 // pred_check_branch
      %281 = sbr.rel (%p278) target = $region12
    $region11: #{visual_goal_generator_forward.2} parent=5 // pred_region
      %s282 = ssub.s32 %s17, 1
      // Predicated region
      $region13: #{visual_goal_generator_forward.2} parent=11 // pred_check
        %p283 = pneg %p64
      $region14: #{visual_goal_generator_forward.2} parent=11 // pred_check_branch
        %285 = sbr.rel (%p283) target = $region16
      $region15: #{visual_goal_generator_forward.2} parent=11 // pred_region
        _
      $region16: #{visual_goal_generator_forward.2} parent=11 // pred_fallthru
        _
      // Predicated region
      $region17: #{visual_goal_generator_forward.2} parent=11 // pred_check
        %p286 = pneg %p85
      $region18: #{visual_goal_generator_forward.2} parent=11 // pred_check_branch
        %288 = sbr.rel (%p286) target = $region20
      $region19: #{visual_goal_generator_forward.2} parent=11 // pred_region
        _
      $region20: #{visual_goal_generator_forward.2} parent=11 // pred_fallthru
        _
      // Predicated region
      $region21: #{visual_goal_generator_forward.2} parent=11 // pred_check
        %p289 = pneg %p106
      $region22: #{visual_goal_generator_forward.2} parent=11 // pred_check_branch
        %291 = sbr.rel (%p289) target = $region24
      $region23: #{visual_goal_generator_forward.2} parent=11 // pred_region
        _
      $region24: #{visual_goal_generator_forward.2} parent=11 // pred_fallthru
        _
      // Predicated region
      $region25: #{visual_goal_generator_forward.2} parent=11 // pred_check
        %p292 = pneg %p153
      $region26: #{visual_goal_generator_forward.2} parent=11 // pred_check_branch
        %294 = sbr.rel (%p292) target = $region28
      $region27: #{visual_goal_generator_forward.2} parent=11 // pred_region
        _
      $region28: #{visual_goal_generator_forward.2} parent=11 // pred_fallthru
        _
      // Predicated region
      $region29: #{visual_goal_generator_forward.2} parent=11 // pred_check
        %p295 = pneg %p174
      $region30: #{visual_goal_generator_forward.2} parent=11 // pred_check_branch
        %297 = sbr.rel (%p295) target = $region32
      $region31: #{visual_goal_generator_forward.2} parent=11 // pred_region
        _
      $region32: #{visual_goal_generator_forward.2} parent=11 // pred_fallthru
        _
      // Predicated region
      $region33: #{visual_goal_generator_forward.2} parent=11 // pred_check
        %p298 = pneg %p195
      $region34: #{visual_goal_generator_forward.2} parent=11 // pred_check_branch
        %300 = sbr.rel (%p298) target = $region36
      $region35: #{visual_goal_generator_forward.2} parent=11 // pred_region
        _
      $region36: #{visual_goal_generator_forward.2} parent=11 // pred_fallthru
        _
      // Predicated region
      $region37: #{visual_goal_generator_forward.2} parent=11 // pred_check
        %p301 = pneg %p216
      $region38: #{visual_goal_generator_forward.2} parent=11 // pred_check_branch
        %303 = sbr.rel (%p301) target = $region40
      $region39: #{visual_goal_generator_forward.2} parent=11 // pred_region
        _
      $region40: #{visual_goal_generator_forward.2} parent=11 // pred_fallthru
        _
    $region12: #{visual_goal_generator_forward.2} parent=5 // pred_fallthru
      _
    %p304 = scmp.lt.s32.totalorder %s17, 2
    // Predicated region
    $region41: #{visual_goal_generator_forward.2} parent=5 // pred_check
      %p305 = pneg %p304
    $region42: #{visual_goal_generator_forward.2} parent=5 // pred_check_branch
      %307 = sbr.rel (%p305) target = $region44
    $region43: #{visual_goal_generator_forward.2} parent=5 // pred_region
      // Predicated region
      $region45: #{visual_goal_generator_forward.2} parent=43 // pred_check
        %p308 = pneg %p37
      $region46: #{visual_goal_generator_forward.2} parent=43 // pred_check_branch
        %310 = sbr.rel (%p308) target = $region48
      $region47: #{visual_goal_generator_forward.2} parent=43 // pred_region
        %s311 = smul.u32 2, %s17
        %p312 = scmp.lt.s32.totalorder %s311, 3
        %s313 = scalar_select %p312, %s311, 3
        %s314 = smul.addr %s313, 8
        %s315 = scalar_lea.vmem %s0, %s314
        %s316 = smul.u32 2, %s17
      $region48: #{visual_goal_generator_forward.2} parent=43 // pred_fallthru
        _
      // Predicated region
      $region49: #{visual_goal_generator_forward.2} parent=43 // pred_check
        %p317 = pneg %p126
      $region50: #{visual_goal_generator_forward.2} parent=43 // pred_check_branch
        %319 = sbr.rel (%p317) target = $region52
      $region51: #{visual_goal_generator_forward.2} parent=43 // pred_region
        %s320 = smul.u32 2, %s17
        %p321 = scmp.lt.s32.totalorder %s320, 3
        %s322 = scalar_select %p321, %s320, 3
        %s323 = smul.addr %s322, 8
        %s324 = scalar_lea.vmem %s4, %s323
        %s325 = smul.u32 2, %s17
      $region52: #{visual_goal_generator_forward.2} parent=43 // pred_fallthru
        _
    $region44: #{visual_goal_generator_forward.2} parent=5 // pred_fallthru
      _
    %p326 = scmp.le.s32.totalorder 1, %s17
    %p327 = scmp.lt.s32.totalorder %s17, 3
    %p328 = pnand %p326, %p327
    %p329 = pneg %p328
    // Predicated region
    $region53: #{visual_goal_generator_forward.2} parent=5 // pred_check
      _
    $region54: #{visual_goal_generator_forward.2} parent=5 // pred_check_branch
      %331 = sbr.rel (%p328) target = $region56
    $region55: #{visual_goal_generator_forward.2} parent=5 // pred_region
      %s332 = ssub.s32 %s17, 1
      %s333 = smul.u32 2, %s22
      %p334 = scmp.lt.s32.totalorder %s333, 3
      %s335 = scalar_select %p334, %s333, 3
      %s336 = smul.addr %s335, 8
      %s337 = scalar_lea.vmem %s0, %s336
      %p338 = pneg %p43
      %p339 = pneg %p40
      %p340 = pneg %p64
      %p341 = pneg %p61
      %p342 = pneg %p85
      %p343 = pneg %p82
      %p344 = pneg %p106
      %p345 = pneg %p103
      %s346 = smul.u32 2, %s22
      %p347 = scmp.lt.s32.totalorder %s346, 3
      %s348 = scalar_select %p347, %s346, 3
      %s349 = smul.addr %s348, 8
      %s350 = scalar_lea.vmem %s4, %s349
      %p351 = pneg %p132
      %p352 = pneg %p129
      %p353 = pneg %p153
      %p354 = pneg %p150
      %p355 = pneg %p174
      %p356 = pneg %p171
      %p357 = pneg %p195
      %p358 = pneg %p192
      %p359 = pneg %p216
      %p360 = pneg %p213
      %p361 = pneg %p242
      %p362 = pneg %p239
      %s363 = smul.u32 2, %s22
      %p364 = scmp.lt.s32.totalorder %s363, 3
      %s365 = scalar_select %p364, %s363, 3
      %s366 = smul.addr %s365, 8
      %s367 = scalar_lea.vmem %s9, %s366
      %p368 = pneg %p268
      %p369 = pneg %p265
      %s370 = smul.u32 2, %s22
      %p371 = scmp.lt.s32.totalorder %s370, 3
      %s372 = scalar_select %p371, %s370, 3
      %s373 = smul.addr %s372, 8
      %s374 = scalar_lea.vmem %s10, %s373
      %s375 = smul.u32 2, %s22
      %p376 = scmp.lt.s32.totalorder %s375, 3
      %s377 = scalar_select %p376, %s375, 3
      %s378 = smul.addr %s377, 8
      %s379 = scalar_lea.vmem %s0, %s378
      %s380 = smul.u32 2, %s22
      %s381 = smul.u32 2, %s22
      %p382 = scmp.lt.s32.totalorder %s381, 3
      %s383 = scalar_select %p382, %s381, 3
      %s384 = smul.addr %s383, 8
      %s385 = scalar_lea.vmem %s4, %s384
      %s386 = smul.u32 2, %s22
      %s387 = smul.u32 2, %s22
      %p388 = scmp.lt.s32.totalorder %s387, 3
      %s389 = scalar_select %p388, %s387, 3
      %s390 = smul.addr %s389, 8
      %s391 = scalar_lea.vmem %s9, %s390
      %s392 = smul.u32 2, %s22
      %s393 = smul.u32 2, %s22
      %p394 = scmp.lt.s32.totalorder %s393, 3
      %s395 = scalar_select %p394, %s393, 3
      %s396 = smul.addr %s395, 8
      %s397 = scalar_lea.vmem %s10, %s396
      %s398 = smul.u32 2, %s22
      %v399 = vld [vmem:[%s379] sm:$0xff]
      %v400 = vld [vmem:[%s379 + $0x8] sm:$0xff]
      %v401 = vld [vmem:[%s1] sm:$0xff]
      %v402 = vld [vmem:[%s1 + $0x8] sm:$0xff]
      %v403 = vld [vmem:[%s2] sm:$0x1]
      %v405 = vlaneseq
      %v406 = vshrl.u32 %v405, 7
      %v407 = vsub.s32 0, %v406
      %v408 = vrot.slane %v403, %v407
      %vm410 = vcmask 130048
      %v412 = vsel %vm410, %v399, 0
      %v415 = vsel %vm410, %v400, 0
      %417 = vmatprep.subr.mxu0 0.0
      %418 = vmatpush1.msra.mxu0 %v401
      %419 = vmatprep.subr.mxu0 0.0
      %420 = vmatpush1.msra.mxu0 %v402
      %421 = vmatprep.subr.mxu0 0.0
      %422 = vmatpush1.msra.mxu0 0.0
      %423 = vmatprep.subr.mxu0 0.0
      %424 = vmatpush1.msra.mxu0 0.0
      %425 = vmatprep.subr.mxu0 0.0
      %426 = vmatpush1.msra.mxu0 0.0
      %427 = vmatprep.subr.mxu0 0.0
      %428 = vmatpush1.msra.mxu0 0.0
      %429 = vmatprep.subr.mxu0 0.0
      %430 = vmatpush1.msra.mxu0 0.0
      %431 = vmatprep.subr.mxu0 0.0
      %432 = vmatpush1.msra.mxu0 0.0
      %433 = vmatprep.subr.mxu0 0.0
      %434 = vmatpush1.msra.mxu0 0.0
      %435 = vmatprep.subr.mxu0 0.0
      %436 = vmatpush1.msra.mxu0 0.0
      %437 = vmatprep.subr.mxu0 0.0
      %438 = vmatpush1.msra.mxu0 0.0
      %439 = vmatprep.subr.mxu0 0.0
      %440 = vmatpush1.msra.mxu0 0.0
      %441 = vmatprep.subr.mxu0 0.0
      %442 = vmatpush1.msra.mxu0 0.0
      %443 = vmatprep.subr.mxu0 0.0
      %444 = vmatpush1.msra.mxu0 0.0
      %445 = vmatprep.subr.mxu0 0.0
      %446 = vmatpush1.msra.mxu0 0.0
      %447 = vmatprep.subr.mxu0 0.0
      %448 = vmatpush1.msra.mxu0 0.0
      %449 = vmatprep.subr.mxu0 0.0
      %450 = vmatpush1.msra.mxu0 0.0
      %451 = vmatprep.subr.mxu0 0.0
      %452 = vmatpush1.msra.mxu0 0.0
      %453 = vmatprep.subr.mxu0 0.0
      %454 = vmatpush1.msra.mxu0 0.0
      %455 = vmatprep.subr.mxu0 0.0
      %456 = vmatpush1.msra.mxu0 0.0
      %457 = vmatprep.subr.mxu0 0.0
      %458 = vmatpush1.msra.mxu0 0.0
      %459 = vmatprep.subr.mxu0 0.0
      %460 = vmatpush1.msra.mxu0 0.0
      %461 = vmatprep.subr.mxu0 0.0
      %462 = vmatpush1.msra.mxu0 0.0
      %463 = vmatprep.subr.mxu0 0.0
      %464 = vmatpush1.msra.mxu0 0.0
      %465 = vmatprep.subr.mxu0 0.0
      %466 = vmatpush1.msra.mxu0 0.0
      %467 = vmatprep.subr.mxu0 0.0
      %468 = vmatpush1.msra.mxu0 0.0
      %469 = vmatprep.subr.mxu0 0.0
      %470 = vmatpush1.msra.mxu0 0.0
      %471 = vmatprep.subr.mxu0 0.0
      %472 = vmatpush1.msra.mxu0 0.0
      %473 = vmatprep.subr.mxu0 0.0
      %474 = vmatpush1.msra.mxu0 0.0
      %475 = vmatprep.subr.mxu0 0.0
      %476 = vmatpush1.msra.mxu0 0.0
      %477 = vmatprep.subr.mxu0 0.0
      %478 = vmatpush1.msra.mxu0 0.0
      %479 = vmatprep.subr.mxu0 0.0
      %480 = vmatpush1.msra.mxu0 0.0
      %481 = vmatprep.mubr.f32.mxu0 0.0
      %482 = vmatmul.mubr.f32.gmra.mrb[0].mxu0 %v412
      %v483 = vpop.f32.mrb[0].mxu0
      %v484 = vadd.f32 %v408, %v483
      %v485 = vpop.f32.mrb[0].mxu0
      %486 = vmatprep.mubr.f32.mxu0 0.0
      %487 = vmatmul.mubr.f32.gmra.mrb[0].mxu0 %v415
      %v488 = vpop.f32.mrb[0].mxu0
      %v489 = vadd.f32 %v408, %v488
      %v490 = vpop.f32.mrb[0].mxu0
      %491 = vdwg.mxu0
      %v492 = vxor.u32 %v484, 2147483648
      %v493 = vxor.u32 %v489, 2147483648
      %v494 = vmul.f32 %v492, 1.442695
      %v495 = vpow.pop %v494
      %v496 = vmul.f32 %v493, 1.442695
      %v497 = vpow.pop %v496
      %v498 = vadd.f32 %v495, 1.0
      %v499 = vadd.f32 %v497, 1.0
      %v500 = vrcp.pop %v498
      %v501 = vmul.f32 1.0, %v500
      %v502 = vrcp.pop %v499
      %v503 = vmul.f32 1.0, %v502
      %v504 = vld [vmem:[%s385] sm:$0xff]
      %v505 = vld [vmem:[%s385 + $0x8] sm:$0xff]
      %v506 = vld [vmem:[%s3] sm:$0xff]
      %v507 = vld [vmem:[%s3 + $0x8] sm:$0xff]
      %v508 = vld [vmem:[%s3 + $0x10] sm:$0xff]
      %v509 = vld [vmem:[%s3 + $0x18] sm:$0xff]
      %vm510 = vcmask 261120
      %v512 = vsel %vm510, %v501, 0
      %v515 = vsel %vm510, %v503, 0
      %517 = vmatprep.subr.mxu0 0.0
      %518 = vmatpush1.msra.mxu0 %v506
      %519 = vmatprep.subr.mxu0 0.0
      %520 = vmatpush1.msra.mxu0 %v507
      %521 = vmatprep.subr.mxu0 0.0
      %522 = vmatpush1.msra.mxu0 %v508
      %523 = vmatprep.subr.mxu0 0.0
      %524 = vmatpush1.msra.mxu0 %v509
      %525 = vmatprep.subr.mxu0 0.0
      %526 = vmatpush1.msra.mxu0 0.0
      %527 = vmatprep.subr.mxu0 0.0
      %528 = vmatpush1.msra.mxu0 0.0
      %529 = vmatprep.subr.mxu0 0.0
      %530 = vmatpush1.msra.mxu0 0.0
      %531 = vmatprep.subr.mxu0 0.0
      %532 = vmatpush1.msra.mxu0 0.0
      %533 = vmatprep.subr.mxu0 0.0
      %534 = vmatpush1.msra.mxu0 0.0
      %535 = vmatprep.subr.mxu0 0.0
      %536 = vmatpush1.msra.mxu0 0.0
      %537 = vmatprep.subr.mxu0 0.0
      %538 = vmatpush1.msra.mxu0 0.0
      %539 = vmatprep.subr.mxu0 0.0
      %540 = vmatpush1.msra.mxu0 0.0
      %541 = vmatprep.subr.mxu0 0.0
      %542 = vmatpush1.msra.mxu0 0.0
      %543 = vmatprep.subr.mxu0 0.0
      %544 = vmatpush1.msra.mxu0 0.0
      %545 = vmatprep.subr.mxu0 0.0
      %546 = vmatpush1.msra.mxu0 0.0
      %547 = vmatprep.subr.mxu0 0.0
      %548 = vmatpush1.msra.mxu0 0.0
      %549 = vmatprep.subr.mxu0 0.0
      %550 = vmatpush1.msra.mxu0 0.0
      %551 = vmatprep.subr.mxu0 0.0
      %552 = vmatpush1.msra.mxu0 0.0
      %553 = vmatprep.subr.mxu0 0.0
      %554 = vmatpush1.msra.mxu0 0.0
      %555 = vmatprep.subr.mxu0 0.0
      %556 = vmatpush1.msra.mxu0 0.0
      %557 = vmatprep.subr.mxu0 0.0
      %558 = vmatpush1.msra.mxu0 0.0
      %559 = vmatprep.subr.mxu0 0.0
      %560 = vmatpush1.msra.mxu0 0.0
      %561 = vmatprep.subr.mxu0 0.0
      %562 = vmatpush1.msra.mxu0 0.0
      %563 = vmatprep.subr.mxu0 0.0
      %564 = vmatpush1.msra.mxu0 0.0
      %565 = vmatprep.subr.mxu0 0.0
      %566 = vmatpush1.msra.mxu0 0.0
      %567 = vmatprep.subr.mxu0 0.0
      %568 = vmatpush1.msra.mxu0 0.0
      %569 = vmatprep.subr.mxu0 0.0
      %570 = vmatpush1.msra.mxu0 0.0
      %571 = vmatprep.subr.mxu0 0.0
      %572 = vmatpush1.msra.mxu0 0.0
      %573 = vmatprep.subr.mxu0 0.0
      %574 = vmatpush1.msra.mxu0 0.0
      %575 = vmatprep.subr.mxu0 0.0
      %576 = vmatpush1.msra.mxu0 0.0
      %577 = vmatprep.subr.mxu0 0.0
      %578 = vmatpush1.msra.mxu0 0.0
      %579 = vmatprep.subr.mxu0 0.0
      %580 = vmatpush1.msra.mxu0 0.0
      %581 = vmatprep.mubr.f32.mxu0 0.0
      %582 = vmatmul.mubr.f32.gmra.mrb[0].mxu0 %v512
      %v583 = vpop.f32.mrb[0].mxu0
      %v584 = vadd.f32 0.0, %v583
      %v585 = vpop.f32.mrb[0].mxu0
      %586 = vmatprep.mubr.f32.mxu0 0.0
      %587 = vmatmul.mubr.f32.gmra.mrb[0].mxu0 %v515
      %v588 = vpop.f32.mrb[0].mxu0
      %v589 = vadd.f32 0.0, %v588
      %v590 = vpop.f32.mrb[0].mxu0
      %591 = vdwg.mxu0
      %v592 = vmul.f32 %v504, %v584
      %v593 = vmul.f32 %v505, %v589
      %v594 = vld [vmem:[%s5] sm:$0xff]
      %v595 = vld [vmem:[%s5 + $0x8] sm:$0xff]
      %v596 = vld [vmem:[%s5 + $0x10] sm:$0xff]
      %v597 = vld [vmem:[%s5 + $0x18] sm:$0xff]
      %v598 = vld [vmem:[%s5 + $0x20] sm:$0xff]
      %v599 = vld [vmem:[%s5 + $0x28] sm:$0xff]
      %v600 = vld [vmem:[%s5 + $0x30] sm:$0xff]
      %v601 = vld [vmem:[%s5 + $0x38] sm:$0xff]
      %v602 = vld [vmem:[%s5 + $0x40] sm:$0xff]
      %v603 = vld [vmem:[%s5 + $0x48] sm:$0xff]
      %v604 = vld [vmem:[%s5 + $0x50] sm:$0xff]
      %v605 = vld [vmem:[%s5 + $0x58] sm:$0xff]
      %v606 = vld [vmem:[%s5 + $0x60] sm:$0xff]
      %v607 = vld [vmem:[%s5 + $0x68] sm:$0xff]
      %v608 = vld [vmem:[%s5 + $0x70] sm:$0xff]
      %v609 = vld [vmem:[%s5 + $0x78] sm:$0xff]
      %s610 = scalar_lea.vmem %s3, 32
      %v611 = vld [vmem:[%s610] sm:$0xff]
      %v612 = vld [vmem:[%s610 + $0x8] sm:$0xff]
      %v613 = vld [vmem:[%s610 + $0x10] sm:$0xff]
      %v614 = vld [vmem:[%s610 + $0x18] sm:$0xff]
      %615 = vmatprep.subr.mxu0 0.0
      %616 = vmatpush1.msra.mxu0 %v611
      %617 = vmatprep.subr.mxu0 0.0
      %618 = vmatpush1.msra.mxu0 %v612
      %619 = vmatprep.subr.mxu0 0.0
      %620 = vmatpush1.msra.mxu0 %v613
      %621 = vmatprep.subr.mxu0 0.0
      %622 = vmatpush1.msra.mxu0 %v614
      %623 = vmatprep.subr.mxu0 0.0
      %624 = vmatpush1.msra.mxu0 0.0
      %625 = vmatprep.subr.mxu0 0.0
      %626 = vmatpush1.msra.mxu0 0.0
      %627 = vmatprep.subr.mxu0 0.0
      %628 = vmatpush1.msra.mxu0 0.0
      %629 = vmatprep.subr.mxu0 0.0
      %630 = vmatpush1.msra.mxu0 0.0
      %631 = vmatprep.subr.mxu0 0.0
      %632 = vmatpush1.msra.mxu0 0.0
      %633 = vmatprep.subr.mxu0 0.0
      %634 = vmatpush1.msra.mxu0 0.0
      %635 = vmatprep.subr.mxu0 0.0
      %636 = vmatpush1.msra.mxu0 0.0
      %637 = vmatprep.subr.mxu0 0.0
      %638 = vmatpush1.msra.mxu0 0.0
      %639 = vmatprep.subr.mxu0 0.0
      %640 = vmatpush1.msra.mxu0 0.0
      %641 = vmatprep.subr.mxu0 0.0
      %642 = vmatpush1.msra.mxu0 0.0
      %643 = vmatprep.subr.mxu0 0.0
      %644 = vmatpush1.msra.mxu0 0.0
      %645 = vmatprep.subr.mxu0 0.0
      %646 = vmatpush1.msra.mxu0 0.0
      %647 = vmatprep.subr.mxu0 0.0
      %648 = vmatpush1.msra.mxu0 0.0
      %649 = vmatprep.subr.mxu0 0.0
      %650 = vmatpush1.msra.mxu0 0.0
      %651 = vmatprep.subr.mxu0 0.0
      %652 = vmatpush1.msra.mxu0 0.0
      %653 = vmatprep.subr.mxu0 0.0
      %654 = vmatpush1.msra.mxu0 0.0
      %655 = vmatprep.subr.mxu0 0.0
      %656 = vmatpush1.msra.mxu0 0.0
      %657 = vmatprep.subr.mxu0 0.0
      %658 = vmatpush1.msra.mxu0 0.0
      %659 = vmatprep.subr.mxu0 0.0
      %660 = vmatpush1.msra.mxu0 0.0
      %661 = vmatprep.subr.mxu0 0.0
      %662 = vmatpush1.msra.mxu0 0.0
      %663 = vmatprep.subr.mxu0 0.0
      %664 = vmatpush1.msra.mxu0 0.0
      %665 = vmatprep.subr.mxu0 0.0
      %666 = vmatpush1.msra.mxu0 0.0
      %667 = vmatprep.subr.mxu0 0.0
      %668 = vmatpush1.msra.mxu0 0.0
      %669 = vmatprep.subr.mxu0 0.0
      %670 = vmatpush1.msra.mxu0 0.0
      %671 = vmatprep.subr.mxu0 0.0
      %672 = vmatpush1.msra.mxu0 0.0
      %673 = vmatprep.subr.mxu0 0.0
      %674 = vmatpush1.msra.mxu0 0.0
      %675 = vmatprep.subr.mxu0 0.0
      %676 = vmatpush1.msra.mxu0 0.0
      %677 = vmatprep.subr.mxu0 0.0
      %678 = vmatpush1.msra.mxu0 0.0
      %679 = vmatprep.mubr.f32.mxu0 0.0
      %680 = vmatmul.mubr.f32.gmra.mrb[0].mxu0 %v512
      %v681 = vpop.f32.mrb[0].mxu0
      %v682 = vadd.f32 0.0, %v681
      %v683 = vpop.f32.mrb[0].mxu0
      %684 = vmatprep.mubr.f32.mxu0 0.0
      %685 = vmatmul.mubr.f32.gmra.mrb[0].mxu0 %v515
      %v686 = vpop.f32.mrb[0].mxu0
      %v687 = vadd.f32 0.0, %v686
      %v688 = vpop.f32.mrb[0].mxu0
      %689 = vdwg.mxu0
      %v690 = vmul.f32 %v504, %v682
      %v691 = vmul.f32 %v505, %v687
      %s692 = scalar_lea.vmem %s5, 128
      %v693 = vld [vmem:[%s692] sm:$0xff]
      %v694 = vld [vmem:[%s692 + $0x8] sm:$0xff]
      %v695 = vld [vmem:[%s692 + $0x10] sm:$0xff]
      %v696 = vld [vmem:[%s692 + $0x18] sm:$0xff]
      %v697 = vld [vmem:[%s692 + $0x20] sm:$0xff]
      %v698 = vld [vmem:[%s692 + $0x28] sm:$0xff]
      %v699 = vld [vmem:[%s692 + $0x30] sm:$0xff]
      %v700 = vld [vmem:[%s692 + $0x38] sm:$0xff]
      %v701 = vld [vmem:[%s692 + $0x40] sm:$0xff]
      %v702 = vld [vmem:[%s692 + $0x48] sm:$0xff]
      %v703 = vld [vmem:[%s692 + $0x50] sm:$0xff]
      %v704 = vld [vmem:[%s692 + $0x58] sm:$0xff]
      %v705 = vld [vmem:[%s692 + $0x60] sm:$0xff]
      %v706 = vld [vmem:[%s692 + $0x68] sm:$0xff]
      %v707 = vld [vmem:[%s692 + $0x70] sm:$0xff]
      %v708 = vld [vmem:[%s692 + $0x78] sm:$0xff]
      %709 = vmatprep.subr.mxu0 0.0
      %710 = vmatpush1.msra.mxu0 %v693
      %711 = vmatprep.subr.mxu0 0.0
      %712 = vmatpush1.msra.mxu0 %v694
      %713 = vmatprep.subr.mxu0 0.0
      %714 = vmatpush1.msra.mxu0 %v695
      %715 = vmatprep.subr.mxu0 0.0
      %716 = vmatpush1.msra.mxu0 %v696
      %717 = vmatprep.subr.mxu0 0.0
      %718 = vmatpush1.msra.mxu0 %v697
      %719 = vmatprep.subr.mxu0 0.0
      %720 = vmatpush1.msra.mxu0 %v698
      %721 = vmatprep.subr.mxu0 0.0
      %722 = vmatpush1.msra.mxu0 %v699
      %723 = vmatprep.subr.mxu0 0.0
      %724 = vmatpush1.msra.mxu0 %v700
      %725 = vmatprep.subr.mxu0 0.0
      %726 = vmatpush1.msra.mxu0 %v701
      %727 = vmatprep.subr.mxu0 0.0
      %728 = vmatpush1.msra.mxu0 %v702
      %729 = vmatprep.subr.mxu0 0.0
      %730 = vmatpush1.msra.mxu0 %v703
      %731 = vmatprep.subr.mxu0 0.0
      %732 = vmatpush1.msra.mxu0 %v704
      %733 = vmatprep.subr.mxu0 0.0
      %734 = vmatpush1.msra.mxu0 %v705
      %735 = vmatprep.subr.mxu0 0.0
      %736 = vmatpush1.msra.mxu0 %v706
      %737 = vmatprep.subr.mxu0 0.0
      %738 = vmatpush1.msra.mxu0 %v707
      %739 = vmatprep.subr.mxu0 0.0
      %740 = vmatpush1.msra.mxu0 %v708
      %741 = vmatprep.subr.mxu0 0.0
      %742 = vmatpush1.msra.mxu0 0.0
      %743 = vmatprep.subr.mxu0 0.0
      %744 = vmatpush1.msra.mxu0 0.0
      %745 = vmatprep.subr.mxu0 0.0
      %746 = vmatpush1.msra.mxu0 0.0
      %747 = vmatprep.subr.mxu0 0.0
      %748 = vmatpush1.msra.mxu0 0.0
      %749 = vmatprep.subr.mxu0 0.0
      %750 = vmatpush1.msra.mxu0 0.0
      %751 = vmatprep.subr.mxu0 0.0
      %752 = vmatpush1.msra.mxu0 0.0
      %753 = vmatprep.subr.mxu0 0.0
      %754 = vmatpush1.msra.mxu0 0.0
      %755 = vmatprep.subr.mxu0 0.0
      %756 = vmatpush1.msra.mxu0 0.0
      %757 = vmatprep.subr.mxu0 0.0
      %758 = vmatpush1.msra.mxu0 0.0
      %759 = vmatprep.subr.mxu0 0.0
      %760 = vmatpush1.msra.mxu0 0.0
      %761 = vmatprep.subr.mxu0 0.0
      %762 = vmatpush1.msra.mxu0 0.0
      %763 = vmatprep.subr.mxu0 0.0
      %764 = vmatpush1.msra.mxu0 0.0
      %765 = vmatprep.subr.mxu0 0.0
      %766 = vmatpush1.msra.mxu0 0.0
      %767 = vmatprep.subr.mxu0 0.0
      %768 = vmatpush1.msra.mxu0 0.0
      %769 = vmatprep.subr.mxu0 0.0
      %770 = vmatpush1.msra.mxu0 0.0
      %771 = vmatprep.subr.mxu0 0.0
      %772 = vmatpush1.msra.mxu0 0.0
      %773 = vmatprep.mubr.f32.mxu0 0.0
      %774 = vmatmul.mubr.f32.gmra.mrb[0].mxu0 %v690
      %v775 = vpop.f32.mrb[0].mxu0
      %v776 = vadd.f32 0.0, %v775
      %v777 = vpop.f32.mrb[0].mxu0
      %778 = vmatprep.mubr.f32.mxu0 0.0
      %779 = vmatmul.mubr.f32.gmra.mrb[0].mxu0 %v691
      %v780 = vpop.f32.mrb[0].mxu0
      %v781 = vadd.f32 0.0, %v780
      %v782 = vpop.f32.mrb[0].mxu0
      %783 = vdwg.mxu0
      %784 = vmatprep.subr.mxu0 0.0
      %785 = vmatpush1.msra.mxu0 %v594
      %786 = vmatprep.subr.mxu0 0.0
      %787 = vmatpush1.msra.mxu0 %v595
      %788 = vmatprep.subr.mxu0 0.0
      %789 = vmatpush1.msra.mxu0 %v596
      %790 = vmatprep.subr.mxu0 0.0
      %791 = vmatpush1.msra.mxu0 %v597
      %792 = vmatprep.subr.mxu0 0.0
      %793 = vmatpush1.msra.mxu0 %v598
      %794 = vmatprep.subr.mxu0 0.0
      %795 = vmatpush1.msra.mxu0 %v599
      %796 = vmatprep.subr.mxu0 0.0
      %797 = vmatpush1.msra.mxu0 %v600
      %798 = vmatprep.subr.mxu0 0.0
      %799 = vmatpush1.msra.mxu0 %v601
      %800 = vmatprep.subr.mxu0 0.0
      %801 = vmatpush1.msra.mxu0 %v602
      %802 = vmatprep.subr.mxu0 0.0
      %803 = vmatpush1.msra.mxu0 %v603
      %804 = vmatprep.subr.mxu0 0.0
      %805 = vmatpush1.msra.mxu0 %v604
      %806 = vmatprep.subr.mxu0 0.0
      %807 = vmatpush1.msra.mxu0 %v605
      %808 = vmatprep.subr.mxu0 0.0
      %809 = vmatpush1.msra.mxu0 %v606
      %810 = vmatprep.subr.mxu0 0.0
      %811 = vmatpush1.msra.mxu0 %v607
      %812 = vmatprep.subr.mxu0 0.0
      %813 = vmatpush1.msra.mxu0 %v608
      %814 = vmatprep.subr.mxu0 0.0
      %815 = vmatpush1.msra.mxu0 %v609
      %816 = vmatprep.subr.mxu0 0.0
      %817 = vmatpush1.msra.mxu0 0.0
      %818 = vmatprep.subr.mxu0 0.0
      %819 = vmatpush1.msra.mxu0 0.0
      %820 = vmatprep.subr.mxu0 0.0
      %821 = vmatpush1.msra.mxu0 0.0
      %822 = vmatprep.subr.mxu0 0.0
      %823 = vmatpush1.msra.mxu0 0.0
      %824 = vmatprep.subr.mxu0 0.0
      %825 = vmatpush1.msra.mxu0 0.0
      %826 = vmatprep.subr.mxu0 0.0
      %827 = vmatpush1.msra.mxu0 0.0
      %828 = vmatprep.subr.mxu0 0.0
      %829 = vmatpush1.msra.mxu0 0.0
      %830 = vmatprep.subr.mxu0 0.0
      %831 = vmatpush1.msra.mxu0 0.0
      %832 = vmatprep.subr.mxu0 0.0
      %833 = vmatpush1.msra.mxu0 0.0
      %834 = vmatprep.subr.mxu0 0.0
      %835 = vmatpush1.msra.mxu0 0.0
      %836 = vmatprep.subr.mxu0 0.0
      %837 = vmatpush1.msra.mxu0 0.0
      %838 = vmatprep.subr.mxu0 0.0
      %839 = vmatpush1.msra.mxu0 0.0
      %840 = vmatprep.subr.mxu0 0.0
      %841 = vmatpush1.msra.mxu0 0.0
      %842 = vmatprep.subr.mxu0 0.0
      %843 = vmatpush1.msra.mxu0 0.0
      %844 = vmatprep.subr.mxu0 0.0
      %845 = vmatpush1.msra.mxu0 0.0
      %846 = vmatprep.subr.mxu0 0.0
      %847 = vmatpush1.msra.mxu0 0.0
      %848 = vmatprep.mubr.f32.mxu0 0.0
      %849 = vmatmul.mubr.f32.gmra.mrb[0].mxu0 %v592
      %v850 = vpop.f32.mrb[0].mxu0
      %v851 = vadd.f32 %v776, %v850
      %v852 = vpop.f32.mrb[0].mxu0
      %853 = vmatprep.mubr.f32.mxu0 0.0
      %854 = vmatmul.mubr.f32.gmra.mrb[0].mxu0 %v593
      %v855 = vpop.f32.mrb[0].mxu0
      %v856 = vadd.f32 %v781, %v855
      %v857 = vpop.f32.mrb[0].mxu0
      %858 = vdwg.mxu0
      %s859 = scalar_lea.vmem %s3, 64
      %v860 = vld [vmem:[%s859] sm:$0xff]
      %v861 = vld [vmem:[%s859 + $0x8] sm:$0xff]
      %v862 = vld [vmem:[%s859 + $0x10] sm:$0xff]
      %v863 = vld [vmem:[%s859 + $0x18] sm:$0xff]
      %864 = vmatprep.subr.mxu0 0.0
      %865 = vmatpush1.msra.mxu0 %v860
      %866 = vmatprep.subr.mxu0 0.0
      %867 = vmatpush1.msra.mxu0 %v861
      %868 = vmatprep.subr.mxu0 0.0
      %869 = vmatpush1.msra.mxu0 %v862
      %870 = vmatprep.subr.mxu0 0.0
      %871 = vmatpush1.msra.mxu0 %v863
      %872 = vmatprep.subr.mxu0 0.0
      %873 = vmatpush1.msra.mxu0 0.0
      %874 = vmatprep.subr.mxu0 0.0
      %875 = vmatpush1.msra.mxu0 0.0
      %876 = vmatprep.subr.mxu0 0.0
      %877 = vmatpush1.msra.mxu0 0.0
      %878 = vmatprep.subr.mxu0 0.0
      %879 = vmatpush1.msra.mxu0 0.0
      %880 = vmatprep.subr.mxu0 0.0
      %881 = vmatpush1.msra.mxu0 0.0
      %882 = vmatprep.subr.mxu0 0.0
      %883 = vmatpush1.msra.mxu0 0.0
      %884 = vmatprep.subr.mxu0 0.0
      %885 = vmatpush1.msra.mxu0 0.0
      %886 = vmatprep.subr.mxu0 0.0
      %887 = vmatpush1.msra.mxu0 0.0
      %888 = vmatprep.subr.mxu0 0.0
      %889 = vmatpush1.msra.mxu0 0.0
      %890 = vmatprep.subr.mxu0 0.0
      %891 = vmatpush1.msra.mxu0 0.0
      %892 = vmatprep.subr.mxu0 0.0
      %893 = vmatpush1.msra.mxu0 0.0
      %894 = vmatprep.subr.mxu0 0.0
      %895 = vmatpush1.msra.mxu0 0.0
      %896 = vmatprep.subr.mxu0 0.0
      %897 = vmatpush1.msra.mxu0 0.0
      %898 = vmatprep.subr.mxu0 0.0
      %899 = vmatpush1.msra.mxu0 0.0
      %900 = vmatprep.subr.mxu0 0.0
      %901 = vmatpush1.msra.mxu0 0.0
      %902 = vmatprep.subr.mxu0 0.0
      %903 = vmatpush1.msra.mxu0 0.0
      %904 = vmatprep.subr.mxu0 0.0
      %905 = vmatpush1.msra.mxu0 0.0
      %906 = vmatprep.subr.mxu0 0.0
      %907 = vmatpush1.msra.mxu0 0.0
      %908 = vmatprep.subr.mxu0 0.0
      %909 = vmatpush1.msra.mxu0 0.0
      %910 = vmatprep.subr.mxu0 0.0
      %911 = vmatpush1.msra.mxu0 0.0
      %912 = vmatprep.subr.mxu0 0.0
      %913 = vmatpush1.msra.mxu0 0.0
      %914 = vmatprep.subr.mxu0 0.0
      %915 = vmatpush1.msra.mxu0 0.0
      %916 = vmatprep.subr.mxu0 0.0
      %917 = vmatpush1.msra.mxu0 0.0
      %918 = vmatprep.subr.mxu0 0.0
      %919 = vmatpush1.msra.mxu0 0.0
      %920 = vmatprep.subr.mxu0 0.0
      %921 = vmatpush1.msra.mxu0 0.0
      %922 = vmatprep.subr.mxu0 0.0
      %923 = vmatpush1.msra.mxu0 0.0
      %924 = vmatprep.subr.mxu0 0.0
      %925 = vmatpush1.msra.mxu0 0.0
      %926 = vmatprep.subr.mxu0 0.0
      %927 = vmatpush1.msra.mxu0 0.0
      %928 = vmatprep.mubr.f32.mxu0 0.0
      %929 = vmatmul.mubr.f32.gmra.mrb[0].mxu0 %v512
      %v930 = vpop.f32.mrb[0].mxu0
      %v931 = vadd.f32 0.0, %v930
      %v932 = vpop.f32.mrb[0].mxu0
      %933 = vmatprep.mubr.f32.mxu0 0.0
      %934 = vmatmul.mubr.f32.gmra.mrb[0].mxu0 %v515
      %v935 = vpop.f32.mrb[0].mxu0
      %v936 = vadd.f32 0.0, %v935
      %v937 = vpop.f32.mrb[0].mxu0
      %938 = vdwg.mxu0
      %v939 = vmul.f32 %v504, %v931
      %v940 = vmul.f32 %v505, %v936
      %s941 = scalar_lea.vmem %s5, 256
      %v942 = vld [vmem:[%s941] sm:$0xff]
      %v943 = vld [vmem:[%s941 + $0x8] sm:$0xff]
      %v944 = vld [vmem:[%s941 + $0x10] sm:$0xff]
      %v945 = vld [vmem:[%s941 + $0x18] sm:$0xff]
      %v946 = vld [vmem:[%s941 + $0x20] sm:$0xff]
      %v947 = vld [vmem:[%s941 + $0x28] sm:$0xff]
      %v948 = vld [vmem:[%s941 + $0x30] sm:$0xff]
      %v949 = vld [vmem:[%s941 + $0x38] sm:$0xff]
      %v950 = vld [vmem:[%s941 + $0x40] sm:$0xff]
      %v951 = vld [vmem:[%s941 + $0x48] sm:$0xff]
      %v952 = vld [vmem:[%s941 + $0x50] sm:$0xff]
      %v953 = vld [vmem:[%s941 + $0x58] sm:$0xff]
      %v954 = vld [vmem:[%s941 + $0x60] sm:$0xff]
      %v955 = vld [vmem:[%s941 + $0x68] sm:$0xff]
      %v956 = vld [vmem:[%s941 + $0x70] sm:$0xff]
      %v957 = vld [vmem:[%s941 + $0x78] sm:$0xff]
      %958 = vmatprep.subr.mxu0 0.0
      %959 = vmatpush1.msra.mxu0 %v942
      %960 = vmatprep.subr.mxu0 0.0
      %961 = vmatpush1.msra.mxu0 %v943
      %962 = vmatprep.subr.mxu0 0.0
      %963 = vmatpush1.msra.mxu0 %v944
      %964 = vmatprep.subr.mxu0 0.0
      %965 = vmatpush1.msra.mxu0 %v945
      %966 = vmatprep.subr.mxu0 0.0
      %967 = vmatpush1.msra.mxu0 %v946
      %968 = vmatprep.subr.mxu0 0.0
      %969 = vmatpush1.msra.mxu0 %v947
      %970 = vmatprep.subr.mxu0 0.0
      %971 = vmatpush1.msra.mxu0 %v948
      %972 = vmatprep.subr.mxu0 0.0
      %973 = vmatpush1.msra.mxu0 %v949
      %974 = vmatprep.subr.mxu0 0.0
      %975 = vmatpush1.msra.mxu0 %v950
      %976 = vmatprep.subr.mxu0 0.0
      %977 = vmatpush1.msra.mxu0 %v951
      %978 = vmatprep.subr.mxu0 0.0
      %979 = vmatpush1.msra.mxu0 %v952
      %980 = vmatprep.subr.mxu0 0.0
      %981 = vmatpush1.msra.mxu0 %v953
      %982 = vmatprep.subr.mxu0 0.0
      %983 = vmatpush1.msra.mxu0 %v954
      %984 = vmatprep.subr.mxu0 0.0
      %985 = vmatpush1.msra.mxu0 %v955
      %986 = vmatprep.subr.mxu0 0.0
      %987 = vmatpush1.msra.mxu0 %v956
      %988 = vmatprep.subr.mxu0 0.0
      %989 = vmatpush1.msra.mxu0 %v957
      %990 = vmatprep.subr.mxu0 0.0
      %991 = vmatpush1.msra.mxu0 0.0
      %992 = vmatprep.subr.mxu0 0.0
      %993 = vmatpush1.msra.mxu0 0.0
      %994 = vmatprep.subr.mxu0 0.0
      %995 = vmatpush1.msra.mxu0 0.0
      %996 = vmatprep.subr.mxu0 0.0
      %997 = vmatpush1.msra.mxu0 0.0
      %998 = vmatprep.subr.mxu0 0.0
      %999 = vmatpush1.msra.mxu0 0.0
      %1000 = vmatprep.subr.mxu0 0.0
      %1001 = vmatpush1.msra.mxu0 0.0
      %1002 = vmatprep.subr.mxu0 0.0
      %1003 = vmatpush1.msra.mxu0 0.0
      %1004 = vmatprep.subr.mxu0 0.0
      %1005 = vmatpush1.msra.mxu0 0.0
      %1006 = vmatprep.subr.mxu0 0.0
      %1007 = vmatpush1.msra.mxu0 0.0
      %1008 = vmatprep.subr.mxu0 0.0
      %1009 = vmatpush1.msra.mxu0 0.0
      %1010 = vmatprep.subr.mxu0 0.0
      %1011 = vmatpush1.msra.mxu0 0.0
      %1012 = vmatprep.subr.mxu0 0.0
      %1013 = vmatpush1.msra.mxu0 0.0
      %1014 = vmatprep.subr.mxu0 0.0
      %1015 = vmatpush1.msra.mxu0 0.0
      %1016 = vmatprep.subr.mxu0 0.0
      %1017 = vmatpush1.msra.mxu0 0.0
      %1018 = vmatprep.subr.mxu0 0.0
      %1019 = vmatpush1.msra.mxu0 0.0
      %1020 = vmatprep.subr.mxu0 0.0
      %1021 = vmatpush1.msra.mxu0 0.0
      %1022 = vmatprep.mubr.f32.mxu0 0.0
      %1023 = vmatmul.mubr.f32.gmra.mrb[0].mxu0 %v939
      %v1024 = vpop.f32.mrb[0].mxu0
      %v1025 = vadd.f32 0.0, %v1024
      %v1026 = vpop.f32.mrb[0].mxu0
      %1027 = vmatprep.mubr.f32.mxu0 0.0
      %1028 = vmatmul.mubr.f32.gmra.mrb[0].mxu0 %v940
      %v1029 = vpop.f32.mrb[0].mxu0
      %v1030 = vadd.f32 0.0, %v1029
      %v1031 = vpop.f32.mrb[0].mxu0
      %1032 = vdwg.mxu0
      %v1033 = vadd.f32 %v851, %v1025
      %v1034 = vadd.f32 %v856, %v1030
      %s1035 = scalar_lea.vmem %s3, 96
      %v1036 = vld [vmem:[%s1035] sm:$0xff]
      %v1037 = vld [vmem:[%s1035 + $0x8] sm:$0xff]
      %v1038 = vld [vmem:[%s1035 + $0x10] sm:$0xff]
      %v1039 = vld [vmem:[%s1035 + $0x18] sm:$0xff]
      %1040 = vmatprep.subr.mxu0 0.0
      %1041 = vmatpush1.msra.mxu0 %v1036
      %1042 = vmatprep.subr.mxu0 0.0
      %1043 = vmatpush1.msra.mxu0 %v1037
      %1044 = vmatprep.subr.mxu0 0.0
      %1045 = vmatpush1.msra.mxu0 %v1038
      %1046 = vmatprep.subr.mxu0 0.0
      %1047 = vmatpush1.msra.mxu0 %v1039
      %1048 = vmatprep.subr.mxu0 0.0
      %1049 = vmatpush1.msra.mxu0 0.0
      %1050 = vmatprep.subr.mxu0 0.0
      %1051 = vmatpush1.msra.mxu0 0.0
      %1052 = vmatprep.subr.mxu0 0.0
      %1053 = vmatpush1.msra.mxu0 0.0
      %1054 = vmatprep.subr.mxu0 0.0
      %1055 = vmatpush1.msra.mxu0 0.0
      %1056 = vmatprep.subr.mxu0 0.0
      %1057 = vmatpush1.msra.mxu0 0.0
      %1058 = vmatprep.subr.mxu0 0.0
      %1059 = vmatpush1.msra.mxu0 0.0
      %1060 = vmatprep.subr.mxu0 0.0
      %1061 = vmatpush1.msra.mxu0 0.0
      %1062 = vmatprep.subr.mxu0 0.0
      %1063 = vmatpush1.msra.mxu0 0.0
      %1064 = vmatprep.subr.mxu0 0.0
      %1065 = vmatpush1.msra.mxu0 0.0
      %1066 = vmatprep.subr.mxu0 0.0
      %1067 = vmatpush1.msra.mxu0 0.0
      %1068 = vmatprep.subr.mxu0 0.0
      %1069 = vmatpush1.msra.mxu0 0.0
      %1070 = vmatprep.subr.mxu0 0.0
      %1071 = vmatpush1.msra.mxu0 0.0
      %1072 = vmatprep.subr.mxu0 0.0
      %1073 = vmatpush1.msra.mxu0 0.0
      %1074 = vmatprep.subr.mxu0 0.0
      %1075 = vmatpush1.msra.mxu0 0.0
      %1076 = vmatprep.subr.mxu0 0.0
      %1077 = vmatpush1.msra.mxu0 0.0
      %1078 = vmatprep.subr.mxu0 0.0
      %1079 = vmatpush1.msra.mxu0 0.0
      %1080 = vmatprep.subr.mxu0 0.0
      %1081 = vmatpush1.msra.mxu0 0.0
      %1082 = vmatprep.subr.mxu0 0.0
      %1083 = vmatpush1.msra.mxu0 0.0
      %1084 = vmatprep.subr.mxu0 0.0
      %1085 = vmatpush1.msra.mxu0 0.0
      %1086 = vmatprep.subr.mxu0 0.0
      %1087 = vmatpush1.msra.mxu0 0.0
      %1088 = vmatprep.subr.mxu0 0.0
      %1089 = vmatpush1.msra.mxu0 0.0
      %1090 = vmatprep.subr.mxu0 0.0
      %1091 = vmatpush1.msra.mxu0 0.0
      %1092 = vmatprep.subr.mxu0 0.0
      %1093 = vmatpush1.msra.mxu0 0.0
      %1094 = vmatprep.subr.mxu0 0.0
      %1095 = vmatpush1.msra.mxu0 0.0
      %1096 = vmatprep.subr.mxu0 0.0
      %1097 = vmatpush1.msra.mxu0 0.0
      %1098 = vmatprep.subr.mxu0 0.0
      %1099 = vmatpush1.msra.mxu0 0.0
      %1100 = vmatprep.subr.mxu0 0.0
      %1101 = vmatpush1.msra.mxu0 0.0
      %1102 = vmatprep.subr.mxu0 0.0
      %1103 = vmatpush1.msra.mxu0 0.0
      %1104 = vmatprep.mubr.f32.mxu0 0.0
      %1105 = vmatmul.mubr.f32.gmra.mrb[0].mxu0 %v512
      %v1106 = vpop.f32.mrb[0].mxu0
      %v1107 = vadd.f32 0.0, %v1106
      %v1108 = vpop.f32.mrb[0].mxu0
      %1109 = vmatprep.mubr.f32.mxu0 0.0
      %1110 = vmatmul.mubr.f32.gmra.mrb[0].mxu0 %v515
      %v1111 = vpop.f32.mrb[0].mxu0
      %v1112 = vadd.f32 0.0, %v1111
      %v1113 = vpop.f32.mrb[0].mxu0
      %1114 = vdwg.mxu0
      %v1115 = vmul.f32 %v504, %v1107
      %v1116 = vmul.f32 %v505, %v1112
      %s1117 = scalar_lea.vmem %s5, 384
      %v1118 = vld [vmem:[%s1117] sm:$0xff]
      %v1119 = vld [vmem:[%s1117 + $0x8] sm:$0xff]
      %v1120 = vld [vmem:[%s1117 + $0x10] sm:$0xff]
      %v1121 = vld [vmem:[%s1117 + $0x18] sm:$0xff]
      %v1122 = vld [vmem:[%s1117 + $0x20] sm:$0xff]
      %v1123 = vld [vmem:[%s1117 + $0x28] sm:$0xff]
      %v1124 = vld [vmem:[%s1117 + $0x30] sm:$0xff]
      %v1125 = vld [vmem:[%s1117 + $0x38] sm:$0xff]
      %v1126 = vld [vmem:[%s1117 + $0x40] sm:$0xff]
      %v1127 = vld [vmem:[%s1117 + $0x48] sm:$0xff]
      %v1128 = vld [vmem:[%s1117 + $0x50] sm:$0xff]
      %v1129 = vld [vmem:[%s1117 + $0x58] sm:$0xff]
      %v1130 = vld [vmem:[%s1117 + $0x60] sm:$0xff]
      %v1131 = vld [vmem:[%s1117 + $0x68] sm:$0xff]
      %v1132 = vld [vmem:[%s1117 + $0x70] sm:$0xff]
      %v1133 = vld [vmem:[%s1117 + $0x78] sm:$0xff]
      %1134 = vmatprep.subr.mxu0 0.0
      %1135 = vmatpush1.msra.mxu0 %v1118
      %1136 = vmatprep.subr.mxu0 0.0
      %1137 = vmatpush1.msra.mxu0 %v1119
      %1138 = vmatprep.subr.mxu0 0.0
      %1139 = vmatpush1.msra.mxu0 %v1120
      %1140 = vmatprep.subr.mxu0 0.0
      %1141 = vmatpush1.msra.mxu0 %v1121
      %1142 = vmatprep.subr.mxu0 0.0
      %1143 = vmatpush1.msra.mxu0 %v1122
      %1144 = vmatprep.subr.mxu0 0.0
      %1145 = vmatpush1.msra.mxu0 %v1123
      %1146 = vmatprep.subr.mxu0 0.0
      %1147 = vmatpush1.msra.mxu0 %v1124
      %1148 = vmatprep.subr.mxu0 0.0
      %1149 = vmatpush1.msra.mxu0 %v1125
      %1150 = vmatprep.subr.mxu0 0.0
      %1151 = vmatpush1.msra.mxu0 %v1126
      %1152 = vmatprep.subr.mxu0 0.0
      %1153 = vmatpush1.msra.mxu0 %v1127
      %1154 = vmatprep.subr.mxu0 0.0
      %1155 = vmatpush1.msra.mxu0 %v1128
      %1156 = vmatprep.subr.mxu0 0.0
      %1157 = vmatpush1.msra.mxu0 %v1129
      %1158 = vmatprep.subr.mxu0 0.0
      %1159 = vmatpush1.msra.mxu0 %v1130
      %1160 = vmatprep.subr.mxu0 0.0
      %1161 = vmatpush1.msra.mxu0 %v1131
      %1162 = vmatprep.subr.mxu0 0.0
      %1163 = vmatpush1.msra.mxu0 %v1132
      %1164 = vmatprep.subr.mxu0 0.0
      %1165 = vmatpush1.msra.mxu0 %v1133
      %1166 = vmatprep.subr.mxu0 0.0
      %1167 = vmatpush1.msra.mxu0 0.0
      %1168 = vmatprep.subr.mxu0 0.0
      %1169 = vmatpush1.msra.mxu0 0.0
      %1170 = vmatprep.subr.mxu0 0.0
      %1171 = vmatpush1.msra.mxu0 0.0
      %1172 = vmatprep.subr.mxu0 0.0
      %1173 = vmatpush1.msra.mxu0 0.0
      %1174 = vmatprep.subr.mxu0 0.0
      %1175 = vmatpush1.msra.mxu0 0.0
      %1176 = vmatprep.subr.mxu0 0.0
      %1177 = vmatpush1.msra.mxu0 0.0
      %1178 = vmatprep.subr.mxu0 0.0
      %1179 = vmatpush1.msra.mxu0 0.0
      %1180 = vmatprep.subr.mxu0 0.0
      %1181 = vmatpush1.msra.mxu0 0.0
      %1182 = vmatprep.subr.mxu0 0.0
      %1183 = vmatpush1.msra.mxu0 0.0
      %1184 = vmatprep.subr.mxu0 0.0
      %1185 = vmatpush1.msra.mxu0 0.0
      %1186 = vmatprep.subr.mxu0 0.0
      %1187 = vmatpush1.msra.mxu0 0.0
      %1188 = vmatprep.subr.mxu0 0.0
      %1189 = vmatpush1.msra.mxu0 0.0
      %1190 = vmatprep.subr.mxu0 0.0
      %1191 = vmatpush1.msra.mxu0 0.0
      %1192 = vmatprep.subr.mxu0 0.0
      %1193 = vmatpush1.msra.mxu0 0.0
      %1194 = vmatprep.subr.mxu0 0.0
      %1195 = vmatpush1.msra.mxu0 0.0
      %1196 = vmatprep.subr.mxu0 0.0
      %1197 = vmatpush1.msra.mxu0 0.0
      %1198 = vmatprep.mubr.f32.mxu0 0.0
      %1199 = vmatmul.mubr.f32.gmra.mrb[0].mxu0 %v1115
      %v1200 = vpop.f32.mrb[0].mxu0
      %v1201 = vadd.f32 0.0, %v1200
      %v1202 = vpop.f32.mrb[0].mxu0
      %1203 = vmatprep.mubr.f32.mxu0 0.0
      %1204 = vmatmul.mubr.f32.gmra.mrb[0].mxu0 %v1116
      %v1205 = vpop.f32.mrb[0].mxu0
      %v1206 = vadd.f32 0.0, %v1205
      %v1207 = vpop.f32.mrb[0].mxu0
      %1208 = vdwg.mxu0
      %v1209 = vadd.f32 %v1033, %v1201
      %v1210 = vadd.f32 %v1034, %v1206
      %v1211 = vld [vmem:[%s6] sm:$0x1]
      %v1213 = vlaneseq
      %v1214 = vshrl.u32 %v1213, 7
      %v1215 = vsub.s32 0, %v1214
      %v1216 = vrot.slane %v1211, %v1215
      %v1218 = vadd.f32 %v1209, %v1216
      %v1219 = vadd.f32 %v1210, %v1216
      %1220 = vst [vmem:[%s391] sm:$0xff] %v1218
      %1221 = vst [vmem:[%s391 + $0x8] sm:$0xff] %v1219
      %v1222 = vld [vmem:[%s7] sm:$0xff]
      %v1223 = vld [vmem:[%s7 + $0x8] sm:$0xff]
      %v1224 = vld [vmem:[%s7 + $0x10] sm:$0xff]
      %v1225 = vld [vmem:[%s7 + $0x18] sm:$0xff]
      %v1226 = vld [vmem:[%s7 + $0x20] sm:$0xff]
      %v1227 = vld [vmem:[%s7 + $0x28] sm:$0xff]
      %v1228 = vld [vmem:[%s7 + $0x30] sm:$0xff]
      %v1229 = vld [vmem:[%s7 + $0x38] sm:$0xff]
      %v1230 = vld [vmem:[%s7 + $0x40] sm:$0xff]
      %v1231 = vld [vmem:[%s7 + $0x48] sm:$0xff]
      %v1232 = vld [vmem:[%s7 + $0x50] sm:$0xff]
      %v1233 = vld [vmem:[%s7 + $0x58] sm:$0xff]
      %v1234 = vld [vmem:[%s7 + $0x60] sm:$0xff]
      %v1235 = vld [vmem:[%s7 + $0x68] sm:$0xff]
      %v1236 = vld [vmem:[%s7 + $0x70] sm:$0xff]
      %v1237 = vld [vmem:[%s7 + $0x78] sm:$0xff]
      %v1238 = vld [vmem:[%s8] sm:$0x1]
      %v1240 = vlaneseq
      %v1241 = vshrl.u32 %v1240, 7
      %v1242 = vsub.s32 0, %v1241
      %v1243 = vrot.slane %v1238, %v1242
      %1245 = vmatprep.subr.mxu0 0.0
      %1246 = vmatpush1.msra.mxu0 %v1222
      %1247 = vmatprep.subr.mxu0 0.0
      %1248 = vmatpush1.msra.mxu0 %v1223
      %1249 = vmatprep.subr.mxu0 0.0
      %1250 = vmatpush1.msra.mxu0 %v1224
      %1251 = vmatprep.subr.mxu0 0.0
      %1252 = vmatpush1.msra.mxu0 %v1225
      %1253 = vmatprep.subr.mxu0 0.0
      %1254 = vmatpush1.msra.mxu0 %v1226
      %1255 = vmatprep.subr.mxu0 0.0
      %1256 = vmatpush1.msra.mxu0 %v1227
      %1257 = vmatprep.subr.mxu0 0.0
      %1258 = vmatpush1.msra.mxu0 %v1228
      %1259 = vmatprep.subr.mxu0 0.0
      %1260 = vmatpush1.msra.mxu0 %v1229
      %1261 = vmatprep.subr.mxu0 0.0
      %1262 = vmatpush1.msra.mxu0 %v1230
      %1263 = vmatprep.subr.mxu0 0.0
      %1264 = vmatpush1.msra.mxu0 %v1231
      %1265 = vmatprep.subr.mxu0 0.0
      %1266 = vmatpush1.msra.mxu0 %v1232
      %1267 = vmatprep.subr.mxu0 0.0
      %1268 = vmatpush1.msra.mxu0 %v1233
      %1269 = vmatprep.subr.mxu0 0.0
      %1270 = vmatpush1.msra.mxu0 %v1234
      %1271 = vmatprep.subr.mxu0 0.0
      %1272 = vmatpush1.msra.mxu0 %v1235
      %1273 = vmatprep.subr.mxu0 0.0
      %1274 = vmatpush1.msra.mxu0 %v1236
      %1275 = vmatprep.subr.mxu0 0.0
      %1276 = vmatpush1.msra.mxu0 %v1237
      %1277 = vmatprep.subr.mxu0 0.0
      %1278 = vmatpush1.msra.mxu0 0.0
      %1279 = vmatprep.subr.mxu0 0.0
      %1280 = vmatpush1.msra.mxu0 0.0
      %1281 = vmatprep.subr.mxu0 0.0
      %1282 = vmatpush1.msra.mxu0 0.0
      %1283 = vmatprep.subr.mxu0 0.0
      %1284 = vmatpush1.msra.mxu0 0.0
      %1285 = vmatprep.subr.mxu0 0.0
      %1286 = vmatpush1.msra.mxu0 0.0
      %1287 = vmatprep.subr.mxu0 0.0
      %1288 = vmatpush1.msra.mxu0 0.0
      %1289 = vmatprep.subr.mxu0 0.0
      %1290 = vmatpush1.msra.mxu0 0.0
      %1291 = vmatprep.subr.mxu0 0.0
      %1292 = vmatpush1.msra.mxu0 0.0
      %1293 = vmatprep.subr.mxu0 0.0
      %1294 = vmatpush1.msra.mxu0 0.0
      %1295 = vmatprep.subr.mxu0 0.0
      %1296 = vmatpush1.msra.mxu0 0.0
      %1297 = vmatprep.subr.mxu0 0.0
      %1298 = vmatpush1.msra.mxu0 0.0
      %1299 = vmatprep.subr.mxu0 0.0
      %1300 = vmatpush1.msra.mxu0 0.0
      %1301 = vmatprep.subr.mxu0 0.0
      %1302 = vmatpush1.msra.mxu0 0.0
      %1303 = vmatprep.subr.mxu0 0.0
      %1304 = vmatpush1.msra.mxu0 0.0
      %1305 = vmatprep.subr.mxu0 0.0
      %1306 = vmatpush1.msra.mxu0 0.0
      %1307 = vmatprep.subr.mxu0 0.0
      %1308 = vmatpush1.msra.mxu0 0.0
      %1309 = vmatprep.mubr.f32.mxu0 0.0
      %1310 = vmatmul.mubr.f32.gmra.mrb[0].mxu0 %v1218
      %v1311 = vpop.f32.mrb[0].mxu0
      %v1312 = vadd.f32 %v1243, %v1311
      %v1313 = vpop.f32.mrb[0].mxu0
      %1314 = vmatprep.mubr.f32.mxu0 0.0
      %1315 = vmatmul.mubr.f32.gmra.mrb[0].mxu0 %v1219
      %v1316 = vpop.f32.mrb[0].mxu0
      %v1317 = vadd.f32 %v1243, %v1316
      %v1318 = vpop.f32.mrb[0].mxu0
      %1319 = vdwg.mxu0
      %1320 = vst [vmem:[%s397] sm:$0xff] %v1312
      %1321 = vst [vmem:[%s397 + $0x8] sm:$0xff] %v1317
      %s1322 = smul.u32 2, %s22
      %p1323 = scmp.lt.s32.totalorder %s1322, 3
      %s1324 = scalar_select %p1323, %s1322, 3
      %s1325 = smul.addr %s1324, 8
      %s1326 = scalar_lea.vmem %s9, %s1325
      %s1327 = smul.u32 2, %s22
      %p1328 = scmp.lt.s32.totalorder %s1327, 3
      %s1329 = scalar_select %p1328, %s1327, 3
      %s1330 = smul.addr %s1329, 8
      %s1331 = scalar_lea.vmem %s10, %s1330
      // Predicated region
      $region57: #{visual_goal_generator_forward.2} parent=55 // pred_check
        %p1332 = pneg %p239
      $region58: #{visual_goal_generator_forward.2} parent=55 // pred_check_branch
        %1334 = sbr.rel (%p1332) target = $region60
      $region59: #{visual_goal_generator_forward.2} parent=55 // pred_region
        %s1335 = smul.u32 2, %s22
      $region60: #{visual_goal_generator_forward.2} parent=55 // pred_fallthru
        _
      // Predicated region
      $region61: #{visual_goal_generator_forward.2} parent=55 // pred_check
        %p1336 = pneg %p265
      $region62: #{visual_goal_generator_forward.2} parent=55 // pred_check_branch
        %1338 = sbr.rel (%p1336) target = $region64
      $region63: #{visual_goal_generator_forward.2} parent=55 // pred_region
        %s1339 = smul.u32 2, %s22
      $region64: #{visual_goal_generator_forward.2} parent=55 // pred_fallthru
        _
    $region56: #{visual_goal_generator_forward.2} parent=5 // pred_fallthru
      _
    %p1340 = scmp.le.s32.totalorder 2, %s17
    // Predicated region
    $region65: #{visual_goal_generator_forward.2} parent=5 // pred_check
      %p1341 = pneg %p1340
    $region66: #{visual_goal_generator_forward.2} parent=5 // pred_check_branch
      %1343 = sbr.rel (%p1341) target = $region68
    $region67: #{visual_goal_generator_forward.2} parent=5 // pred_region
      %s1344 = ssub.s32 %s17, 2
      // Predicated region
      $region69: #{visual_goal_generator_forward.2} parent=67 // pred_check
        %p1345 = pneg %p245
      $region70: #{visual_goal_generator_forward.2} parent=67 // pred_check_branch
        %1347 = sbr.rel (%p1345) target = $region72
      $region71: #{visual_goal_generator_forward.2} parent=67 // pred_region
        %s1348 = smul.u32 2, %s23
        %p1349 = scmp.lt.s32.totalorder %s1348, 3
        %s1350 = scalar_select %p1349, %s1348, 3
        %s1351 = smul.addr %s1350, 8
        %s1352 = scalar_lea.vmem %s9, %s1351
      $region72: #{visual_goal_generator_forward.2} parent=67 // pred_fallthru
        _
      // Predicated region
      $region73: #{visual_goal_generator_forward.2} parent=67 // pred_check
        %p1353 = pneg %p271
      $region74: #{visual_goal_generator_forward.2} parent=67 // pred_check_branch
        %1355 = sbr.rel (%p1353) target = $region76
      $region75: #{visual_goal_generator_forward.2} parent=67 // pred_region
        %s1356 = smul.u32 2, %s23
        %p1357 = scmp.lt.s32.totalorder %s1356, 3
        %s1358 = scalar_select %p1357, %s1356, 3
        %s1359 = smul.addr %s1358, 8
        %s1360 = scalar_lea.vmem %s10, %s1359
      $region76: #{visual_goal_generator_forward.2} parent=67 // pred_fallthru
        _
    $region68: #{visual_goal_generator_forward.2} parent=5 // pred_fallthru
      _
  $region6: #{visual_goal_generator_forward.2} parent=0 // loop_footer
    %s21 = sadd.s32 1, %s17
  $region7: #{visual_goal_generator_forward.2} parent=0 // loop_footer_branch
    %16 = sbr.rel target = $region3
  $region8: #{visual_goal_generator_forward.2} parent=0 // loop_exit
    _

</llo_original>
